<compile_context>
chip_gen: v5e
topology: v5e:2x2
jax: 0.10.0
libtpu: 0.0.40
codegen_flags: <defaults>
</compile_context>

<pallas_src>
import functools

import jax
import jax.numpy as jnp
from jax.experimental import pallas as pl
from jax.experimental.pallas import tpu as pltpu


def _round_up(n, m):
    return (n + m - 1) // m * m


# -----------------------------------------------------------------------------
# Fused kernel: all layers + time recurrence + ReLU/FC head in one pallas_call.
# -----------------------------------------------------------------------------
def _lstm_net_kernel(x_ref, wih_ref, whh_ref, b_ref, h0_ref, c0_ref,
                     wfc_ref, bfc_ref,
                     y_ref, hN_ref, cN_ref,
                     seq_sc, gx_sc):
    T, Bp, P = seq_sc.shape           # padded: Bp % 8 == 0, P % 128 == 0
    L = wih_ref.shape[0]
    G = 4 * P

    for l in range(L):                # static unroll over layers
        # Hoisted input projection + bias: ONE (T*Bp, P) @ (P, 4P) MXU matmul.
        if l == 0:
            inp = x_ref[...].reshape(T * Bp, P)                  # already bf16
        else:
            inp = seq_sc[...].reshape(T * Bp, P).astype(jnp.bfloat16)
        gx = (jnp.dot(inp, wih_ref[l], preferred_element_type=jnp.float32)
              + b_ref[l])                                        # (T*Bp, G) f32
        gx_sc[...] = gx.reshape(T, Bp, G)

        whh_l = whh_ref[l]            # (P, G) bf16, resident for the whole loop

        def step(t, carry):
            h_prev, c_prev = carry    # (Bp, P) f32, live in vregs
            gates = gx_sc[t] + jnp.dot(h_prev.astype(jnp.bfloat16), whh_l,
                                       preferred_element_type=jnp.float32)
            # Lane-aligned gate blocks (each gate owns a full P-wide block).
            i_g = jax.nn.sigmoid(gates[:, 0 * P:1 * P])
            f_g = jax.nn.sigmoid(gates[:, 1 * P:2 * P])
            g_g = jnp.tanh(gates[:, 2 * P:3 * P])
            o_g = jax.nn.sigmoid(gates[:, 3 * P:4 * P])
            c_new = f_g * c_prev + i_g * g_g
            h_new = o_g * jnp.tanh(c_new)
            seq_sc[t] = h_new         # feeds next layer / FC head
            return (h_new, c_new)

        hL, cL = jax.lax.fori_loop(0, T, step,
                                   (h0_ref[l], c0_ref[l]), unroll=True)
        hN_ref[l] = hL
        cN_ref[l] = cL

    # Fused ReLU + Linear head: one (T*Bp, P) @ (P, Op) matmul, lane-dense out.
    act = jnp.maximum(seq_sc[...].reshape(T * Bp, P), 0.0).astype(jnp.bfloat16)
    y = (jnp.dot(act, wfc_ref[...], preferred_element_type=jnp.float32)
         + bfc_ref[...])
    y_ref[...] = y.reshape(T, Bp, -1)


def _run_lstm_net(x_p, wih, whh, bias, h0_p, c0_p, wfc, bfc):
    """x_p: (T, Bp, P) bf16; wih/whh: (L, P, 4P) bf16; bias: (L, 1, 4P) f32;
       h0_p/c0_p: (L, Bp, P) f32; wfc: (P, Op) bf16; bfc: (1, Op) f32."""
    T, Bp, P = x_p.shape
    L = wih.shape[0]
    G = 4 * P
    Op = wfc.shape[-1]
    f32 = jnp.float32

    grid_spec = pltpu.PrefetchScalarGridSpec(
        num_scalar_prefetch=0,
        grid=(1,),
        in_specs=[
            pl.BlockSpec((T, Bp, P), lambda i: (0, 0, 0)),
            pl.BlockSpec((L, P, G), lambda i: (0, 0, 0)),
            pl.BlockSpec((L, P, G), lambda i: (0, 0, 0)),
            pl.BlockSpec((L, 1, G), lambda i: (0, 0, 0)),
            pl.BlockSpec((L, Bp, P), lambda i: (0, 0, 0)),
            pl.BlockSpec((L, Bp, P), lambda i: (0, 0, 0)),
            pl.BlockSpec((P, Op), lambda i: (0, 0)),
            pl.BlockSpec((1, Op), lambda i: (0, 0)),
        ],
        out_specs=[
            pl.BlockSpec((T, Bp, Op), lambda i: (0, 0, 0)),
            pl.BlockSpec((L, Bp, P), lambda i: (0, 0, 0)),
            pl.BlockSpec((L, Bp, P), lambda i: (0, 0, 0)),
        ],
        scratch_shapes=[
            pltpu.VMEM((T, Bp, P), f32),   # inter-layer activation sequence
            pltpu.VMEM((T, Bp, G), f32),   # precomputed input-projection gates
        ],
    )
    return pl.pallas_call(
        _lstm_net_kernel,
        out_shape=(
            jax.ShapeDtypeStruct((T, Bp, Op), f32),   # y (time-major, padded)
            jax.ShapeDtypeStruct((L, Bp, P), f32),    # final h per layer
            jax.ShapeDtypeStruct((L, Bp, P), f32),    # final c per layer
        ),
        grid_spec=grid_spec,
        compiler_params=pltpu.CompilerParams(
            dimension_semantics=("arbitrary",),
            vmem_limit_bytes=64 * 1024 * 1024),
    )(x_p, wih, whh, bias, h0_p, c0_p, wfc, bfc)


# -----------------------------------------------------------------------------
# Parameter packing (done ONCE outside the forward path).
# -----------------------------------------------------------------------------
def prepare_params(params, input_dim, hidden_dim, output_dim, n_layers):
    H = hidden_dim
    P = max(_round_up(input_dim, 128), _round_up(hidden_dim, 128))
    Op = _round_up(output_dim, 128)
    G = 4 * P

    def pad_gate_w(w_t):     # w_t: (in_dim, 4H) -> (P, 4P), gate-block aligned
        in_dim = w_t.shape[0]
        out = jnp.zeros((P, G), jnp.float32)
        for k in range(4):
            out = out.at[:in_dim, k * P:k * P + H].set(w_t[:, k * H:(k + 1) * H])
        return out

    def pad_gate_b(b):       # (4H,) -> (1, 4P), gate-block aligned
        out = jnp.zeros((1, G), jnp.float32)
        for k in range(4):
            out = out.at[0, k * P:k * P + H].set(b[k * H:(k + 1) * H])
        return out

    wih_l, whh_l, b_l = [], [], []
    for l in range(n_layers):
        wih_l.append(pad_gate_w(params[f"weight_ih_l{l}"].T))
        whh_l.append(pad_gate_w(params[f"weight_hh_l{l}"].T))
        b_l.append(pad_gate_b(params[f"bias_ih_l{l}"] + params[f"bias_hh_l{l}"]))

    wfc = jnp.zeros((P, Op), jnp.float32).at[:H, :output_dim].set(
        params["fc_weight"].T)
    bfc = jnp.zeros((1, Op), jnp.float32).at[0, :output_dim].set(
        params["fc_bias"])

    return {
        "wih": jnp.stack(wih_l).astype(jnp.bfloat16),    # (L, P, 4P)
        "whh": jnp.stack(whh_l).astype(jnp.bfloat16),    # (L, P, 4P)
        "bias": jnp.stack(b_l),                          # (L, 1, 4P) f32
        "wfc": wfc.astype(jnp.bfloat16),                 # (P, Op)
        "bfc": bfc,                                      # (1, Op) f32
        "dims": (input_dim, hidden_dim, output_dim, n_layers, P, Op),
    }


# -----------------------------------------------------------------------------
# Forward (glue: pad/strip + transpose only the small O-wide result).
# -----------------------------------------------------------------------------
def lstm_net_forward(packed, x, h):
    """x: (B, T, input_dim) batch_first; h = (h0, c0), each (L, B, hidden_dim).
       Returns (out, (hN, cN)) with out: (B, T, output_dim)."""
    h0_all, c0_all = h
    B, T, D = x.shape
    _, H, O, L, P, Op = packed["dims"]
    Bp = _round_up(B, 8)

    xt = jnp.transpose(x, (1, 0, 2)).astype(jnp.float32)            # (T, B, D)
    x_p = jnp.zeros((T, Bp, P), jnp.float32).at[:, :B, :D].set(xt)
    x_p = x_p.astype(jnp.bfloat16)   # MXU input; kernel used bf16 anyway
    h0_p = jnp.zeros((L, Bp, P), jnp.float32).at[:, :B, :H].set(
        h0_all.astype(jnp.float32))
    c0_p = jnp.zeros((L, Bp, P), jnp.float32).at[:, :B, :H].set(
        c0_all.astype(jnp.float32))

    y_p, hN_p, cN_p = _run_lstm_net(
        x_p, packed["wih"], packed["whh"], packed["bias"],
        h0_p, c0_p, packed["wfc"], packed["bfc"])

    y = jnp.transpose(y_p[:, :B, :O], (1, 0, 2))                    # (B, T, O)
    return y, (hN_p[:, :B, :H], cN_p[:, :B, :H])


# -----------------------------------------------------------------------------
# PyTorch-layout parameter init + pure-JAX reference (for sanity checking).
# -----------------------------------------------------------------------------
def init_params(key, input_dim, hidden_dim, output_dim, n_layers):
    params = {}
    k = 1.0 / jnp.sqrt(hidden_dim)
    for l in range(n_layers):
        in_dim = input_dim if l == 0 else hidden_dim
        key, k1, k2, k3, k4 = jax.random.split(key, 5)
        params[f"weight_ih_l{l}"] = jax.random.uniform(
            k1, (4 * hidden_dim, in_dim), jnp.float32, -k, k)
        params[f"weight_hh_l{l}"] = jax.random.uniform(
            k2, (4 * hidden_dim, hidden_dim), jnp.float32, -k, k)
        params[f"bias_ih_l{l}"] = jax.random.uniform(
            k3, (4 * hidden_dim,), jnp.float32, -k, k)
        params[f"bias_hh_l{l}"] = jax.random.uniform(
            k4, (4 * hidden_dim,), jnp.float32, -k, k)
    key, k1, k2 = jax.random.split(key, 3)
    params["fc_weight"] = jax.random.uniform(
        k1, (output_dim, hidden_dim), jnp.float32, -k, k)
    params["fc_bias"] = jax.random.uniform(
        k2, (output_dim,), jnp.float32, -k, k)
    return params


def _reference_forward(params, x, h, n_layers):
    h0, c0 = h
    B, T, _ = x.shape
    seq = x
    hs, cs = [], []
    for l in range(n_layers):
        wih, whh = params[f"weight_ih_l{l}"], params[f"weight_hh_l{l}"]
        b = params[f"bias_ih_l{l}"] + params[f"bias_hh_l{l}"]
        H = whh.shape[1]
        h_t, c_t = h0[l], c0[l]
        outs = []
        for t in range(T):
            g = seq[:, t] @ wih.T + h_t @ whh.T + b
            i = jax.nn.sigmoid(g[:, :H]); f = jax.nn.sigmoid(g[:, H:2 * H])
            gg = jnp.tanh(g[:, 2 * H:3 * H]); o = jax.nn.sigmoid(g[:, 3 * H:])
            c_t = f * c_t + i * gg
            h_t = o * jnp.tanh(c_t)
            outs.append(h_t)
        seq = jnp.stack(outs, axis=1)
        hs.append(h_t); cs.append(c_t)
    y = jnp.maximum(seq, 0.0) @ params["fc_weight"].T + params["fc_bias"]
    return y, (jnp.stack(hs), jnp.stack(cs))


if __name__ == "__main__":
    input_dim, hidden_dim, output_dim, n_layers = 16, 32, 4, 2
    batch, seq_len = 2, 8

    key = jax.random.PRNGKey(0)
    key, kp, kx = jax.random.split(key, 3)
    params = init_params(kp, input_dim, hidden_dim, output_dim, n_layers)
    packed = prepare_params(params, input_dim, hidden_dim, output_dim, n_layers)

    x = jax.random.normal(kx, (batch, seq_len, input_dim), jnp.float32)
    h0 = jnp.zeros((n_layers, batch, hidden_dim), jnp.float32)
    c0 = jnp.zeros((n_layers, batch, hidden_dim), jnp.float32)

    fwd = jax.jit(functools.partial(lstm_net_forward, packed))
    out, (hN, cN) = fwd(x, (h0, c0))
    jax.block_until_ready((out, hN, cN))

    assert out.shape == (batch, seq_len, output_dim)
    assert hN.shape == (n_layers, batch, hidden_dim)
    assert cN.shape == (n_layers, batch, hidden_dim)

    # Sanity check against a pure-JAX f32 reference (bf16 MXU tolerance).
    ref_y, (ref_h, ref_c) = _reference_forward(params, x, (h0, c0), n_layers)
    assert jnp.allclose(out, ref_y, atol=5e-2, rtol=5e-2)
    assert jnp.allclose(hN, ref_h, atol=5e-2, rtol=5e-2)
    assert jnp.allclose(cN, ref_c, atol=5e-2, rtol=5e-2)

    print("KERNEL_OK")
</pallas_src>

<mosaic_0001>
module attributes {stable_mosaic.version = 11 : i64} {
  func.func @_lstm_net_kernel(%arg0: i32, %arg1: memref<8x8x128xbf16, #tpu.memory_space<vmem>>, %arg2: memref<2x128x512xbf16, #tpu.memory_space<vmem>>, %arg3: memref<2x128x512xbf16, #tpu.memory_space<vmem>>, %arg4: memref<2x1x512xf32, #tpu.memory_space<vmem>>, %arg5: memref<2x8x128xf32, #tpu.memory_space<vmem>>, %arg6: memref<2x8x128xf32, #tpu.memory_space<vmem>>, %arg7: memref<128x128xbf16, #tpu.memory_space<vmem>>, %arg8: memref<1x128xf32, #tpu.memory_space<vmem>>, %arg9: memref<8x8x128xf32, #tpu.memory_space<vmem>>, %arg10: memref<2x8x128xf32, #tpu.memory_space<vmem>>, %arg11: memref<2x8x128xf32, #tpu.memory_space<vmem>>, %arg12: memref<8x8x128xf32, #tpu.memory_space<vmem>>, %arg13: memref<8x8x512xf32, #tpu.memory_space<vmem>>) attributes {dimension_semantics = [#tpu.dimension_semantics<arbitrary>], iteration_bounds = array<i64: 1>, scalar_prefetch = 0 : i64, scratch_operands = 2 : i64, tpu.core_type = #tpu.core_type<tc>, window_params = [{pipeline_mode = #tpu.pipeline_mode<synchronous>, transform_indices = @transform_0, window_bounds = array<i64: 8, 8, 128>}, {pipeline_mode = #tpu.pipeline_mode<synchronous>, transform_indices = @transform_1, window_bounds = array<i64: 2, 128, 512>}, {pipeline_mode = #tpu.pipeline_mode<synchronous>, transform_indices = @transform_2, window_bounds = array<i64: 2, 128, 512>}, {pipeline_mode = #tpu.pipeline_mode<synchronous>, transform_indices = @transform_3, window_bounds = array<i64: 2, 1, 512>}, {pipeline_mode = #tpu.pipeline_mode<synchronous>, transform_indices = @transform_4, window_bounds = array<i64: 2, 8, 128>}, {pipeline_mode = #tpu.pipeline_mode<synchronous>, transform_indices = @transform_5, window_bounds = array<i64: 2, 8, 128>}, {pipeline_mode = #tpu.pipeline_mode<synchronous>, transform_indices = @transform_6, window_bounds = array<i64: 128, 128>}, {pipeline_mode = #tpu.pipeline_mode<synchronous>, transform_indices = @transform_7, window_bounds = array<i64: 1, 128>}, {pipeline_mode = #tpu.pipeline_mode<synchronous>, transform_indices = @transform_8, window_bounds = array<i64: 8, 8, 128>}, {pipeline_mode = #tpu.pipeline_mode<synchronous>, transform_indices = @transform_9, window_bounds = array<i64: 2, 8, 128>}, {pipeline_mode = #tpu.pipeline_mode<synchronous>, transform_indices = @transform_10, window_bounds = array<i64: 2, 8, 128>}]} {
    %c0 = arith.constant 0 : index
    %c0_0 = arith.constant 0 : index
    %c0_1 = arith.constant 0 : index
    %0 = vector.load %arg1[%c0, %c0_0, %c0_1] : memref<8x8x128xbf16, #tpu.memory_space<vmem>>, vector<8x8x128xbf16>
    %1 = vector.shape_cast %0 : vector<8x8x128xbf16> to vector<64x128xbf16>
    %c0_2 = arith.constant 0 : index
    %c0_3 = arith.constant 0 : index
    %c0_4 = arith.constant 0 : index
    %2 = vector.load %arg2[%c0_2, %c0_3, %c0_4] : memref<2x128x512xbf16, #tpu.memory_space<vmem>>, vector<1x128x512xbf16>
    %3 = vector.shape_cast %2 : vector<1x128x512xbf16> to vector<128x512xbf16>
    %cst = arith.constant dense<0.000000e+00> : vector<64x512xf32>
    %4 = tpu.matmul %1, %3, %cst {dimension_numbers = #tpu.dot_dimension_numbers<[1], [0], [0], [1], [0, 0, 1, 1], [], []>} : vector<64x128xbf16>, vector<128x512xbf16>, vector<64x512xf32> -> vector<64x512xf32>
    %c0_5 = arith.constant 0 : index
    %c0_6 = arith.constant 0 : index
    %c0_7 = arith.constant 0 : index
    %5 = vector.load %arg4[%c0_5, %c0_6, %c0_7] : memref<2x1x512xf32, #tpu.memory_space<vmem>>, vector<1x1x512xf32>
    %6 = vector.shape_cast %5 : vector<1x1x512xf32> to vector<1x512xf32>
    %7 = vector.broadcast %6 : vector<1x512xf32> to vector<64x512xf32>
    %8 = arith.addf %4, %7 : vector<64x512xf32>
    %9 = vector.shape_cast %8 : vector<64x512xf32> to vector<8x8x512xf32>
    %c0_8 = arith.constant 0 : index
    %c0_9 = arith.constant 0 : index
    %c0_10 = arith.constant 0 : index
    %10 = vector.load %arg13[%c0_8, %c0_9, %c0_10] : memref<8x8x512xf32, #tpu.memory_space<vmem>>, vector<8x8x512xf32>
    tpu.vector_store %arg13[%c0_8, %c0_9, %c0_10], %9 {strides = array<i32>} : memref<8x8x512xf32, #tpu.memory_space<vmem>>, vector<8x8x512xf32>,
    %c0_11 = arith.constant 0 : index
    %c0_12 = arith.constant 0 : index
    %c0_13 = arith.constant 0 : index
    %11 = vector.load %arg3[%c0_11, %c0_12, %c0_13] : memref<2x128x512xbf16, #tpu.memory_space<vmem>>, vector<1x128x512xbf16>
    %12 = vector.shape_cast %11 : vector<1x128x512xbf16> to vector<128x512xbf16>
    %c0_14 = arith.constant 0 : index
    %c0_15 = arith.constant 0 : index
    %c0_16 = arith.constant 0 : index
    %13 = vector.load %arg5[%c0_14, %c0_15, %c0_16] : memref<2x8x128xf32, #tpu.memory_space<vmem>>, vector<1x8x128xf32>
    %14 = vector.shape_cast %13 : vector<1x8x128xf32> to vector<8x128xf32>
    %c0_17 = arith.constant 0 : index
    %c0_18 = arith.constant 0 : index
    %c0_19 = arith.constant 0 : index
    %15 = vector.load %arg6[%c0_17, %c0_18, %c0_19] : memref<2x8x128xf32, #tpu.memory_space<vmem>>, vector<1x8x128xf32>
    %16 = vector.shape_cast %15 : vector<1x8x128xf32> to vector<8x128xf32>
    %c0_i32 = arith.constant 0 : i32
    %17 = arith.index_cast %c0_i32 : i32 to index
    %c0_20 = arith.constant 0 : index
    %c0_21 = arith.constant 0 : index
    %18 = vector.load %arg13[%17, %c0_20, %c0_21] : memref<8x8x512xf32, #tpu.memory_space<vmem>>, vector<1x8x512xf32>
    %19 = vector.shape_cast %18 : vector<1x8x512xf32> to vector<8x512xf32>
    %20 = arith.truncf %14 : vector<8x128xf32> to vector<8x128xbf16>
    %cst_22 = arith.constant dense<0.000000e+00> : vector<8x512xf32>
    %21 = tpu.matmul %20, %12, %cst_22 {dimension_numbers = #tpu.dot_dimension_numbers<[1], [0], [0], [1], [0, 0, 1, 1], [], []>} : vector<8x128xbf16>, vector<128x512xbf16>, vector<8x512xf32> -> vector<8x512xf32>
    %22 = arith.addf %19, %21 : vector<8x512xf32>
    %23 = vector.extract_strided_slice %22 {offsets = [0, 0], sizes = [8, 128], strides = [1, 1]} : vector<8x512xf32> to vector<8x128xf32>
    %24 = arith.negf %23 : vector<8x128xf32>
    %25 = math.exp %24 : vector<8x128xf32>
    %cst_23 = arith.constant 1.000000e+00 : f32
    %26 = vector.broadcast %cst_23 : f32 to vector<8x128xf32>
    %27 = arith.addf %26, %25 : vector<8x128xf32>
    %28 = arith.divf %26, %27 : vector<8x128xf32>
    %29 = vector.extract_strided_slice %22 {offsets = [0, 128], sizes = [8, 128], strides = [1, 1]} : vector<8x512xf32> to vector<8x128xf32>
    %30 = arith.negf %29 : vector<8x128xf32>
    %31 = math.exp %30 : vector<8x128xf32>
    %cst_24 = arith.constant 1.000000e+00 : f32
    %32 = vector.broadcast %cst_24 : f32 to vector<8x128xf32>
    %33 = arith.addf %32, %31 : vector<8x128xf32>
    %34 = arith.divf %32, %33 : vector<8x128xf32>
    %35 = vector.extract_strided_slice %22 {offsets = [0, 256], sizes = [8, 128], strides = [1, 1]} : vector<8x512xf32> to vector<8x128xf32>
    %36 = math.tanh %35 : vector<8x128xf32>
    %37 = vector.extract_strided_slice %22 {offsets = [0, 384], sizes = [8, 128], strides = [1, 1]} : vector<8x512xf32> to vector<8x128xf32>
    %38 = arith.negf %37 : vector<8x128xf32>
    %39 = math.exp %38 : vector<8x128xf32>
    %cst_25 = arith.constant 1.000000e+00 : f32
    %40 = vector.broadcast %cst_25 : f32 to vector<8x128xf32>
    %41 = arith.addf %40, %39 : vector<8x128xf32>
    %42 = arith.divf %40, %41 : vector<8x128xf32>
    %43 = arith.mulf %34, %16 : vector<8x128xf32>
    %44 = arith.mulf %28, %36 : vector<8x128xf32>
    %45 = arith.addf %43, %44 : vector<8x128xf32>
    %46 = math.tanh %45 : vector<8x128xf32>
    %47 = arith.mulf %42, %46 : vector<8x128xf32>
    %48 = arith.index_cast %c0_i32 : i32 to index
    %c0_26 = arith.constant 0 : index
    %c0_27 = arith.constant 0 : index
    %49 = vector.load %arg12[%48, %c0_26, %c0_27] : memref<8x8x128xf32, #tpu.memory_space<vmem>>, vector<1x8x128xf32>
    %50 = vector.shape_cast %49 : vector<1x8x128xf32> to vector<8x128xf32>
    %51 = vector.shape_cast %47 : vector<8x128xf32> to vector<1x8x128xf32>
    tpu.vector_store %arg12[%48, %c0_26, %c0_27], %51 {strides = array<i32>} : memref<8x8x128xf32, #tpu.memory_space<vmem>>, vector<1x8x128xf32>,
    %c1_i32 = arith.constant 1 : i32
    %52 = arith.index_cast %c1_i32 : i32 to index
    %c0_28 = arith.constant 0 : index
    %c0_29 = arith.constant 0 : index
    %53 = vector.load %arg13[%52, %c0_28, %c0_29] : memref<8x8x512xf32, #tpu.memory_space<vmem>>, vector<1x8x512xf32>
    %54 = vector.shape_cast %53 : vector<1x8x512xf32> to vector<8x512xf32>
    %55 = arith.truncf %47 : vector<8x128xf32> to vector<8x128xbf16>
    %cst_30 = arith.constant dense<0.000000e+00> : vector<8x512xf32>
    %56 = tpu.matmul %55, %12, %cst_30 {dimension_numbers = #tpu.dot_dimension_numbers<[1], [0], [0], [1], [0, 0, 1, 1], [], []>} : vector<8x128xbf16>, vector<128x512xbf16>, vector<8x512xf32> -> vector<8x512xf32>
    %57 = arith.addf %54, %56 : vector<8x512xf32>
    %58 = vector.extract_strided_slice %57 {offsets = [0, 0], sizes = [8, 128], strides = [1, 1]} : vector<8x512xf32> to vector<8x128xf32>
    %59 = arith.negf %58 : vector<8x128xf32>
    %60 = math.exp %59 : vector<8x128xf32>
    %cst_31 = arith.constant 1.000000e+00 : f32
    %61 = vector.broadcast %cst_31 : f32 to vector<8x128xf32>
    %62 = arith.addf %61, %60 : vector<8x128xf32>
    %63 = arith.divf %61, %62 : vector<8x128xf32>
    %64 = vector.extract_strided_slice %57 {offsets = [0, 128], sizes = [8, 128], strides = [1, 1]} : vector<8x512xf32> to vector<8x128xf32>
    %65 = arith.negf %64 : vector<8x128xf32>
    %66 = math.exp %65 : vector<8x128xf32>
    %cst_32 = arith.constant 1.000000e+00 : f32
    %67 = vector.broadcast %cst_32 : f32 to vector<8x128xf32>
    %68 = arith.addf %67, %66 : vector<8x128xf32>
    %69 = arith.divf %67, %68 : vector<8x128xf32>
    %70 = vector.extract_strided_slice %57 {offsets = [0, 256], sizes = [8, 128], strides = [1, 1]} : vector<8x512xf32> to vector<8x128xf32>
    %71 = math.tanh %70 : vector<8x128xf32>
    %72 = vector.extract_strided_slice %57 {offsets = [0, 384], sizes = [8, 128], strides = [1, 1]} : vector<8x512xf32> to vector<8x128xf32>
    %73 = arith.negf %72 : vector<8x128xf32>
    %74 = math.exp %73 : vector<8x128xf32>
    %cst_33 = arith.constant 1.000000e+00 : f32
    %75 = vector.broadcast %cst_33 : f32 to vector<8x128xf32>
    %76 = arith.addf %75, %74 : vector<8x128xf32>
    %77 = arith.divf %75, %76 : vector<8x128xf32>
    %78 = arith.mulf %69, %45 : vector<8x128xf32>
    %79 = arith.mulf %63, %71 : vector<8x128xf32>
    %80 = arith.addf %78, %79 : vector<8x128xf32>
    %81 = math.tanh %80 : vector<8x128xf32>
    %82 = arith.mulf %77, %81 : vector<8x128xf32>
    %83 = arith.index_cast %c1_i32 : i32 to index
    %c0_34 = arith.constant 0 : index
    %c0_35 = arith.constant 0 : index
    %84 = vector.load %arg12[%83, %c0_34, %c0_35] : memref<8x8x128xf32, #tpu.memory_space<vmem>>, vector<1x8x128xf32>
    %85 = vector.shape_cast %84 : vector<1x8x128xf32> to vector<8x128xf32>
    %86 = vector.shape_cast %82 : vector<8x128xf32> to vector<1x8x128xf32>
    tpu.vector_store %arg12[%83, %c0_34, %c0_35], %86 {strides = array<i32>} : memref<8x8x128xf32, #tpu.memory_space<vmem>>, vector<1x8x128xf32>,
    %c2_i32 = arith.constant 2 : i32
    %87 = arith.index_cast %c2_i32 : i32 to index
    %c0_36 = arith.constant 0 : index
    %c0_37 = arith.constant 0 : index
    %88 = vector.load %arg13[%87, %c0_36, %c0_37] : memref<8x8x512xf32, #tpu.memory_space<vmem>>, vector<1x8x512xf32>
    %89 = vector.shape_cast %88 : vector<1x8x512xf32> to vector<8x512xf32>
    %90 = arith.truncf %82 : vector<8x128xf32> to vector<8x128xbf16>
    %cst_38 = arith.constant dense<0.000000e+00> : vector<8x512xf32>
    %91 = tpu.matmul %90, %12, %cst_38 {dimension_numbers = #tpu.dot_dimension_numbers<[1], [0], [0], [1], [0, 0, 1, 1], [], []>} : vector<8x128xbf16>, vector<128x512xbf16>, vector<8x512xf32> -> vector<8x512xf32>
    %92 = arith.addf %89, %91 : vector<8x512xf32>
    %93 = vector.extract_strided_slice %92 {offsets = [0, 0], sizes = [8, 128], strides = [1, 1]} : vector<8x512xf32> to vector<8x128xf32>
    %94 = arith.negf %93 : vector<8x128xf32>
    %95 = math.exp %94 : vector<8x128xf32>
    %cst_39 = arith.constant 1.000000e+00 : f32
    %96 = vector.broadcast %cst_39 : f32 to vector<8x128xf32>
    %97 = arith.addf %96, %95 : vector<8x128xf32>
    %98 = arith.divf %96, %97 : vector<8x128xf32>
    %99 = vector.extract_strided_slice %92 {offsets = [0, 128], sizes = [8, 128], strides = [1, 1]} : vector<8x512xf32> to vector<8x128xf32>
    %100 = arith.negf %99 : vector<8x128xf32>
    %101 = math.exp %100 : vector<8x128xf32>
    %cst_40 = arith.constant 1.000000e+00 : f32
    %102 = vector.broadcast %cst_40 : f32 to vector<8x128xf32>
    %103 = arith.addf %102, %101 : vector<8x128xf32>
    %104 = arith.divf %102, %103 : vector<8x128xf32>
    %105 = vector.extract_strided_slice %92 {offsets = [0, 256], sizes = [8, 128], strides = [1, 1]} : vector<8x512xf32> to vector<8x128xf32>
    %106 = math.tanh %105 : vector<8x128xf32>
    %107 = vector.extract_strided_slice %92 {offsets = [0, 384], sizes = [8, 128], strides = [1, 1]} : vector<8x512xf32> to vector<8x128xf32>
    %108 = arith.negf %107 : vector<8x128xf32>
    %109 = math.exp %108 : vector<8x128xf32>
    %cst_41 = arith.constant 1.000000e+00 : f32
    %110 = vector.broadcast %cst_41 : f32 to vector<8x128xf32>
    %111 = arith.addf %110, %109 : vector<8x128xf32>
    %112 = arith.divf %110, %111 : vector<8x128xf32>
    %113 = arith.mulf %104, %80 : vector<8x128xf32>
    %114 = arith.mulf %98, %106 : vector<8x128xf32>
    %115 = arith.addf %113, %114 : vector<8x128xf32>
    %116 = math.tanh %115 : vector<8x128xf32>
    %117 = arith.mulf %112, %116 : vector<8x128xf32>
    %118 = arith.index_cast %c2_i32 : i32 to index
    %c0_42 = arith.constant 0 : index
    %c0_43 = arith.constant 0 : index
    %119 = vector.load %arg12[%118, %c0_42, %c0_43] : memref<8x8x128xf32, #tpu.memory_space<vmem>>, vector<1x8x128xf32>
    %120 = vector.shape_cast %119 : vector<1x8x128xf32> to vector<8x128xf32>
    %121 = vector.shape_cast %117 : vector<8x128xf32> to vector<1x8x128xf32>
    tpu.vector_store %arg12[%118, %c0_42, %c0_43], %121 {strides = array<i32>} : memref<8x8x128xf32, #tpu.memory_space<vmem>>, vector<1x8x128xf32>,
    %c3_i32 = arith.constant 3 : i32
    %122 = arith.index_cast %c3_i32 : i32 to index
    %c0_44 = arith.constant 0 : index
    %c0_45 = arith.constant 0 : index
    %123 = vector.load %arg13[%122, %c0_44, %c0_45] : memref<8x8x512xf32, #tpu.memory_space<vmem>>, vector<1x8x512xf32>
    %124 = vector.shape_cast %123 : vector<1x8x512xf32> to vector<8x512xf32>
    %125 = arith.truncf %117 : vector<8x128xf32> to vector<8x128xbf16>
    %cst_46 = arith.constant dense<0.000000e+00> : vector<8x512xf32>
    %126 = tpu.matmul %125, %12, %cst_46 {dimension_numbers = #tpu.dot_dimension_numbers<[1], [0], [0], [1], [0, 0, 1, 1], [], []>} : vector<8x128xbf16>, vector<128x512xbf16>, vector<8x512xf32> -> vector<8x512xf32>
    %127 = arith.addf %124, %126 : vector<8x512xf32>
    %128 = vector.extract_strided_slice %127 {offsets = [0, 0], sizes = [8, 128], strides = [1, 1]} : vector<8x512xf32> to vector<8x128xf32>
    %129 = arith.negf %128 : vector<8x128xf32>
    %130 = math.exp %129 : vector<8x128xf32>
    %cst_47 = arith.constant 1.000000e+00 : f32
    %131 = vector.broadcast %cst_47 : f32 to vector<8x128xf32>
    %132 = arith.addf %131, %130 : vector<8x128xf32>
    %133 = arith.divf %131, %132 : vector<8x128xf32>
    %134 = vector.extract_strided_slice %127 {offsets = [0, 128], sizes = [8, 128], strides = [1, 1]} : vector<8x512xf32> to vector<8x128xf32>
    %135 = arith.negf %134 : vector<8x128xf32>
    %136 = math.exp %135 : vector<8x128xf32>
    %cst_48 = arith.constant 1.000000e+00 : f32
    %137 = vector.broadcast %cst_48 : f32 to vector<8x128xf32>
    %138 = arith.addf %137, %136 : vector<8x128xf32>
    %139 = arith.divf %137, %138 : vector<8x128xf32>
    %140 = vector.extract_strided_slice %127 {offsets = [0, 256], sizes = [8, 128], strides = [1, 1]} : vector<8x512xf32> to vector<8x128xf32>
    %141 = math.tanh %140 : vector<8x128xf32>
    %142 = vector.extract_strided_slice %127 {offsets = [0, 384], sizes = [8, 128], strides = [1, 1]} : vector<8x512xf32> to vector<8x128xf32>
    %143 = arith.negf %142 : vector<8x128xf32>
    %144 = math.exp %143 : vector<8x128xf32>
    %cst_49 = arith.constant 1.000000e+00 : f32
    %145 = vector.broadcast %cst_49 : f32 to vector<8x128xf32>
    %146 = arith.addf %145, %144 : vector<8x128xf32>
    %147 = arith.divf %145, %146 : vector<8x128xf32>
    %148 = arith.mulf %139, %115 : vector<8x128xf32>
    %149 = arith.mulf %133, %141 : vector<8x128xf32>
    %150 = arith.addf %148, %149 : vector<8x128xf32>
    %151 = math.tanh %150 : vector<8x128xf32>
    %152 = arith.mulf %147, %151 : vector<8x128xf32>
    %153 = arith.index_cast %c3_i32 : i32 to index
    %c0_50 = arith.constant 0 : index
    %c0_51 = arith.constant 0 : index
    %154 = vector.load %arg12[%153, %c0_50, %c0_51] : memref<8x8x128xf32, #tpu.memory_space<vmem>>, vector<1x8x128xf32>
    %155 = vector.shape_cast %154 : vector<1x8x128xf32> to vector<8x128xf32>
    %156 = vector.shape_cast %152 : vector<8x128xf32> to vector<1x8x128xf32>
    tpu.vector_store %arg12[%153, %c0_50, %c0_51], %156 {strides = array<i32>} : memref<8x8x128xf32, #tpu.memory_space<vmem>>, vector<1x8x128xf32>,
    %c4_i32 = arith.constant 4 : i32
    %157 = arith.index_cast %c4_i32 : i32 to index
    %c0_52 = arith.constant 0 : index
    %c0_53 = arith.constant 0 : index
    %158 = vector.load %arg13[%157, %c0_52, %c0_53] : memref<8x8x512xf32, #tpu.memory_space<vmem>>, vector<1x8x512xf32>
    %159 = vector.shape_cast %158 : vector<1x8x512xf32> to vector<8x512xf32>
    %160 = arith.truncf %152 : vector<8x128xf32> to vector<8x128xbf16>
    %cst_54 = arith.constant dense<0.000000e+00> : vector<8x512xf32>
    %161 = tpu.matmul %160, %12, %cst_54 {dimension_numbers = #tpu.dot_dimension_numbers<[1], [0], [0], [1], [0, 0, 1, 1], [], []>} : vector<8x128xbf16>, vector<128x512xbf16>, vector<8x512xf32> -> vector<8x512xf32>
    %162 = arith.addf %159, %161 : vector<8x512xf32>
    %163 = vector.extract_strided_slice %162 {offsets = [0, 0], sizes = [8, 128], strides = [1, 1]} : vector<8x512xf32> to vector<8x128xf32>
    %164 = arith.negf %163 : vector<8x128xf32>
    %165 = math.exp %164 : vector<8x128xf32>
    %cst_55 = arith.constant 1.000000e+00 : f32
    %166 = vector.broadcast %cst_55 : f32 to vector<8x128xf32>
    %167 = arith.addf %166, %165 : vector<8x128xf32>
    %168 = arith.divf %166, %167 : vector<8x128xf32>
    %169 = vector.extract_strided_slice %162 {offsets = [0, 128], sizes = [8, 128], strides = [1, 1]} : vector<8x512xf32> to vector<8x128xf32>
    %170 = arith.negf %169 : vector<8x128xf32>
    %171 = math.exp %170 : vector<8x128xf32>
    %cst_56 = arith.constant 1.000000e+00 : f32
    %172 = vector.broadcast %cst_56 : f32 to vector<8x128xf32>
    %173 = arith.addf %172, %171 : vector<8x128xf32>
    %174 = arith.divf %172, %173 : vector<8x128xf32>
    %175 = vector.extract_strided_slice %162 {offsets = [0, 256], sizes = [8, 128], strides = [1, 1]} : vector<8x512xf32> to vector<8x128xf32>
    %176 = math.tanh %175 : vector<8x128xf32>
    %177 = vector.extract_strided_slice %162 {offsets = [0, 384], sizes = [8, 128], strides = [1, 1]} : vector<8x512xf32> to vector<8x128xf32>
    %178 = arith.negf %177 : vector<8x128xf32>
    %179 = math.exp %178 : vector<8x128xf32>
    %cst_57 = arith.constant 1.000000e+00 : f32
    %180 = vector.broadcast %cst_57 : f32 to vector<8x128xf32>
    %181 = arith.addf %180, %179 : vector<8x128xf32>
    %182 = arith.divf %180, %181 : vector<8x128xf32>
    %183 = arith.mulf %174, %150 : vector<8x128xf32>
    %184 = arith.mulf %168, %176 : vector<8x128xf32>
    %185 = arith.addf %183, %184 : vector<8x128xf32>
    %186 = math.tanh %185 : vector<8x128xf32>
    %187 = arith.mulf %182, %186 : vector<8x128xf32>
    %188 = arith.index_cast %c4_i32 : i32 to index
    %c0_58 = arith.constant 0 : index
    %c0_59 = arith.constant 0 : index
    %189 = vector.load %arg12[%188, %c0_58, %c0_59] : memref<8x8x128xf32, #tpu.memory_space<vmem>>, vector<1x8x128xf32>
    %190 = vector.shape_cast %189 : vector<1x8x128xf32> to vector<8x128xf32>
    %191 = vector.shape_cast %187 : vector<8x128xf32> to vector<1x8x128xf32>
    tpu.vector_store %arg12[%188, %c0_58, %c0_59], %191 {strides = array<i32>} : memref<8x8x128xf32, #tpu.memory_space<vmem>>, vector<1x8x128xf32>,
    %c5_i32 = arith.constant 5 : i32
    %192 = arith.index_cast %c5_i32 : i32 to index
    %c0_60 = arith.constant 0 : index
    %c0_61 = arith.constant 0 : index
    %193 = vector.load %arg13[%192, %c0_60, %c0_61] : memref<8x8x512xf32, #tpu.memory_space<vmem>>, vector<1x8x512xf32>
    %194 = vector.shape_cast %193 : vector<1x8x512xf32> to vector<8x512xf32>
    %195 = arith.truncf %187 : vector<8x128xf32> to vector<8x128xbf16>
    %cst_62 = arith.constant dense<0.000000e+00> : vector<8x512xf32>
    %196 = tpu.matmul %195, %12, %cst_62 {dimension_numbers = #tpu.dot_dimension_numbers<[1], [0], [0], [1], [0, 0, 1, 1], [], []>} : vector<8x128xbf16>, vector<128x512xbf16>, vector<8x512xf32> -> vector<8x512xf32>
    %197 = arith.addf %194, %196 : vector<8x512xf32>
    %198 = vector.extract_strided_slice %197 {offsets = [0, 0], sizes = [8, 128], strides = [1, 1]} : vector<8x512xf32> to vector<8x128xf32>
    %199 = arith.negf %198 : vector<8x128xf32>
    %200 = math.exp %199 : vector<8x128xf32>
    %cst_63 = arith.constant 1.000000e+00 : f32
    %201 = vector.broadcast %cst_63 : f32 to vector<8x128xf32>
    %202 = arith.addf %201, %200 : vector<8x128xf32>
    %203 = arith.divf %201, %202 : vector<8x128xf32>
    %204 = vector.extract_strided_slice %197 {offsets = [0, 128], sizes = [8, 128], strides = [1, 1]} : vector<8x512xf32> to vector<8x128xf32>
    %205 = arith.negf %204 : vector<8x128xf32>
    %206 = math.exp %205 : vector<8x128xf32>
    %cst_64 = arith.constant 1.000000e+00 : f32
    %207 = vector.broadcast %cst_64 : f32 to vector<8x128xf32>
    %208 = arith.addf %207, %206 : vector<8x128xf32>
    %209 = arith.divf %207, %208 : vector<8x128xf32>
    %210 = vector.extract_strided_slice %197 {offsets = [0, 256], sizes = [8, 128], strides = [1, 1]} : vector<8x512xf32> to vector<8x128xf32>
    %211 = math.tanh %210 : vector<8x128xf32>
    %212 = vector.extract_strided_slice %197 {offsets = [0, 384], sizes = [8, 128], strides = [1, 1]} : vector<8x512xf32> to vector<8x128xf32>
    %213 = arith.negf %212 : vector<8x128xf32>
    %214 = math.exp %213 : vector<8x128xf32>
    %cst_65 = arith.constant 1.000000e+00 : f32
    %215 = vector.broadcast %cst_65 : f32 to vector<8x128xf32>
    %216 = arith.addf %215, %214 : vector<8x128xf32>
    %217 = arith.divf %215, %216 : vector<8x128xf32>
    %218 = arith.mulf %209, %185 : vector<8x128xf32>
    %219 = arith.mulf %203, %211 : vector<8x128xf32>
    %220 = arith.addf %218, %219 : vector<8x128xf32>
    %221 = math.tanh %220 : vector<8x128xf32>
    %222 = arith.mulf %217, %221 : vector<8x128xf32>
    %223 = arith.index_cast %c5_i32 : i32 to index
    %c0_66 = arith.constant 0 : index
    %c0_67 = arith.constant 0 : index
    %224 = vector.load %arg12[%223, %c0_66, %c0_67] : memref<8x8x128xf32, #tpu.memory_space<vmem>>, vector<1x8x128xf32>
    %225 = vector.shape_cast %224 : vector<1x8x128xf32> to vector<8x128xf32>
    %226 = vector.shape_cast %222 : vector<8x128xf32> to vector<1x8x128xf32>
    tpu.vector_store %arg12[%223, %c0_66, %c0_67], %226 {strides = array<i32>} : memref<8x8x128xf32, #tpu.memory_space<vmem>>, vector<1x8x128xf32>,
    %c6_i32 = arith.constant 6 : i32
    %227 = arith.index_cast %c6_i32 : i32 to index
    %c0_68 = arith.constant 0 : index
    %c0_69 = arith.constant 0 : index
    %228 = vector.load %arg13[%227, %c0_68, %c0_69] : memref<8x8x512xf32, #tpu.memory_space<vmem>>, vector<1x8x512xf32>
    %229 = vector.shape_cast %228 : vector<1x8x512xf32> to vector<8x512xf32>
    %230 = arith.truncf %222 : vector<8x128xf32> to vector<8x128xbf16>
    %cst_70 = arith.constant dense<0.000000e+00> : vector<8x512xf32>
    %231 = tpu.matmul %230, %12, %cst_70 {dimension_numbers = #tpu.dot_dimension_numbers<[1], [0], [0], [1], [0, 0, 1, 1], [], []>} : vector<8x128xbf16>, vector<128x512xbf16>, vector<8x512xf32> -> vector<8x512xf32>
    %232 = arith.addf %229, %231 : vector<8x512xf32>
    %233 = vector.extract_strided_slice %232 {offsets = [0, 0], sizes = [8, 128], strides = [1, 1]} : vector<8x512xf32> to vector<8x128xf32>
    %234 = arith.negf %233 : vector<8x128xf32>
    %235 = math.exp %234 : vector<8x128xf32>
    %cst_71 = arith.constant 1.000000e+00 : f32
    %236 = vector.broadcast %cst_71 : f32 to vector<8x128xf32>
    %237 = arith.addf %236, %235 : vector<8x128xf32>
    %238 = arith.divf %236, %237 : vector<8x128xf32>
    %239 = vector.extract_strided_slice %232 {offsets = [0, 128], sizes = [8, 128], strides = [1, 1]} : vector<8x512xf32> to vector<8x128xf32>
    %240 = arith.negf %239 : vector<8x128xf32>
    %241 = math.exp %240 : vector<8x128xf32>
    %cst_72 = arith.constant 1.000000e+00 : f32
    %242 = vector.broadcast %cst_72 : f32 to vector<8x128xf32>
    %243 = arith.addf %242, %241 : vector<8x128xf32>
    %244 = arith.divf %242, %243 : vector<8x128xf32>
    %245 = vector.extract_strided_slice %232 {offsets = [0, 256], sizes = [8, 128], strides = [1, 1]} : vector<8x512xf32> to vector<8x128xf32>
    %246 = math.tanh %245 : vector<8x128xf32>
    %247 = vector.extract_strided_slice %232 {offsets = [0, 384], sizes = [8, 128], strides = [1, 1]} : vector<8x512xf32> to vector<8x128xf32>
    %248 = arith.negf %247 : vector<8x128xf32>
    %249 = math.exp %248 : vector<8x128xf32>
    %cst_73 = arith.constant 1.000000e+00 : f32
    %250 = vector.broadcast %cst_73 : f32 to vector<8x128xf32>
    %251 = arith.addf %250, %249 : vector<8x128xf32>
    %252 = arith.divf %250, %251 : vector<8x128xf32>
    %253 = arith.mulf %244, %220 : vector<8x128xf32>
    %254 = arith.mulf %238, %246 : vector<8x128xf32>
    %255 = arith.addf %253, %254 : vector<8x128xf32>
    %256 = math.tanh %255 : vector<8x128xf32>
    %257 = arith.mulf %252, %256 : vector<8x128xf32>
    %258 = arith.index_cast %c6_i32 : i32 to index
    %c0_74 = arith.constant 0 : index
    %c0_75 = arith.constant 0 : index
    %259 = vector.load %arg12[%258, %c0_74, %c0_75] : memref<8x8x128xf32, #tpu.memory_space<vmem>>, vector<1x8x128xf32>
    %260 = vector.shape_cast %259 : vector<1x8x128xf32> to vector<8x128xf32>
    %261 = vector.shape_cast %257 : vector<8x128xf32> to vector<1x8x128xf32>
    tpu.vector_store %arg12[%258, %c0_74, %c0_75], %261 {strides = array<i32>} : memref<8x8x128xf32, #tpu.memory_space<vmem>>, vector<1x8x128xf32>,
    %c7_i32 = arith.constant 7 : i32
    %262 = arith.index_cast %c7_i32 : i32 to index
    %c0_76 = arith.constant 0 : index
    %c0_77 = arith.constant 0 : index
    %263 = vector.load %arg13[%262, %c0_76, %c0_77] : memref<8x8x512xf32, #tpu.memory_space<vmem>>, vector<1x8x512xf32>
    %264 = vector.shape_cast %263 : vector<1x8x512xf32> to vector<8x512xf32>
    %265 = arith.truncf %257 : vector<8x128xf32> to vector<8x128xbf16>
    %cst_78 = arith.constant dense<0.000000e+00> : vector<8x512xf32>
    %266 = tpu.matmul %265, %12, %cst_78 {dimension_numbers = #tpu.dot_dimension_numbers<[1], [0], [0], [1], [0, 0, 1, 1], [], []>} : vector<8x128xbf16>, vector<128x512xbf16>, vector<8x512xf32> -> vector<8x512xf32>
    %267 = arith.addf %264, %266 : vector<8x512xf32>
    %268 = vector.extract_strided_slice %267 {offsets = [0, 0], sizes = [8, 128], strides = [1, 1]} : vector<8x512xf32> to vector<8x128xf32>
    %269 = arith.negf %268 : vector<8x128xf32>
    %270 = math.exp %269 : vector<8x128xf32>
    %cst_79 = arith.constant 1.000000e+00 : f32
    %271 = vector.broadcast %cst_79 : f32 to vector<8x128xf32>
    %272 = arith.addf %271, %270 : vector<8x128xf32>
    %273 = arith.divf %271, %272 : vector<8x128xf32>
    %274 = vector.extract_strided_slice %267 {offsets = [0, 128], sizes = [8, 128], strides = [1, 1]} : vector<8x512xf32> to vector<8x128xf32>
    %275 = arith.negf %274 : vector<8x128xf32>
    %276 = math.exp %275 : vector<8x128xf32>
    %cst_80 = arith.constant 1.000000e+00 : f32
    %277 = vector.broadcast %cst_80 : f32 to vector<8x128xf32>
    %278 = arith.addf %277, %276 : vector<8x128xf32>
    %279 = arith.divf %277, %278 : vector<8x128xf32>
    %280 = vector.extract_strided_slice %267 {offsets = [0, 256], sizes = [8, 128], strides = [1, 1]} : vector<8x512xf32> to vector<8x128xf32>
    %281 = math.tanh %280 : vector<8x128xf32>
    %282 = vector.extract_strided_slice %267 {offsets = [0, 384], sizes = [8, 128], strides = [1, 1]} : vector<8x512xf32> to vector<8x128xf32>
    %283 = arith.negf %282 : vector<8x128xf32>
    %284 = math.exp %283 : vector<8x128xf32>
    %cst_81 = arith.constant 1.000000e+00 : f32
    %285 = vector.broadcast %cst_81 : f32 to vector<8x128xf32>
    %286 = arith.addf %285, %284 : vector<8x128xf32>
    %287 = arith.divf %285, %286 : vector<8x128xf32>
    %288 = arith.mulf %279, %255 : vector<8x128xf32>
    %289 = arith.mulf %273, %281 : vector<8x128xf32>
    %290 = arith.addf %288, %289 : vector<8x128xf32>
    %291 = math.tanh %290 : vector<8x128xf32>
    %292 = arith.mulf %287, %291 : vector<8x128xf32>
    %293 = arith.index_cast %c7_i32 : i32 to index
    %c0_82 = arith.constant 0 : index
    %c0_83 = arith.constant 0 : index
    %294 = vector.load %arg12[%293, %c0_82, %c0_83] : memref<8x8x128xf32, #tpu.memory_space<vmem>>, vector<1x8x128xf32>
    %295 = vector.shape_cast %294 : vector<1x8x128xf32> to vector<8x128xf32>
    %296 = vector.shape_cast %292 : vector<8x128xf32> to vector<1x8x128xf32>
    tpu.vector_store %arg12[%293, %c0_82, %c0_83], %296 {strides = array<i32>} : memref<8x8x128xf32, #tpu.memory_space<vmem>>, vector<1x8x128xf32>,
    %c8_i32 = arith.constant 8 : i32
    %c0_84 = arith.constant 0 : index
    %c0_85 = arith.constant 0 : index
    %c0_86 = arith.constant 0 : index
    %297 = vector.load %arg10[%c0_84, %c0_85, %c0_86] : memref<2x8x128xf32, #tpu.memory_space<vmem>>, vector<1x8x128xf32>
    %298 = vector.shape_cast %297 : vector<1x8x128xf32> to vector<8x128xf32>
    %299 = vector.shape_cast %292 : vector<8x128xf32> to vector<1x8x128xf32>
    tpu.vector_store %arg10[%c0_84, %c0_85, %c0_86], %299 {strides = array<i32>} : memref<2x8x128xf32, #tpu.memory_space<vmem>>, vector<1x8x128xf32>,
    %c0_87 = arith.constant 0 : index
    %c0_88 = arith.constant 0 : index
    %c0_89 = arith.constant 0 : index
    %300 = vector.load %arg11[%c0_87, %c0_88, %c0_89] : memref<2x8x128xf32, #tpu.memory_space<vmem>>, vector<1x8x128xf32>
    %301 = vector.shape_cast %300 : vector<1x8x128xf32> to vector<8x128xf32>
    %302 = vector.shape_cast %290 : vector<8x128xf32> to vector<1x8x128xf32>
    tpu.vector_store %arg11[%c0_87, %c0_88, %c0_89], %302 {strides = array<i32>} : memref<2x8x128xf32, #tpu.memory_space<vmem>>, vector<1x8x128xf32>,
    %c0_90 = arith.constant 0 : index
    %c0_91 = arith.constant 0 : index
    %c0_92 = arith.constant 0 : index
    %303 = vector.load %arg12[%c0_90, %c0_91, %c0_92] : memref<8x8x128xf32, #tpu.memory_space<vmem>>, vector<8x8x128xf32>
    %304 = vector.shape_cast %303 : vector<8x8x128xf32> to vector<64x128xf32>
    %305 = arith.truncf %304 : vector<64x128xf32> to vector<64x128xbf16>
    %c1 = arith.constant 1 : index
    %c0_93 = arith.constant 0 : index
    %c0_94 = arith.constant 0 : index
    %306 = vector.load %arg2[%c1, %c0_93, %c0_94] : memref<2x128x512xbf16, #tpu.memory_space<vmem>>, vector<1x128x512xbf16>
    %307 = vector.shape_cast %306 : vector<1x128x512xbf16> to vector<128x512xbf16>
    %cst_95 = arith.constant dense<0.000000e+00> : vector<64x512xf32>
    %308 = tpu.matmul %305, %307, %cst_95 {dimension_numbers = #tpu.dot_dimension_numbers<[1], [0], [0], [1], [0, 0, 1, 1], [], []>} : vector<64x128xbf16>, vector<128x512xbf16>, vector<64x512xf32> -> vector<64x512xf32>
    %c1_96 = arith.constant 1 : index
    %c0_97 = arith.constant 0 : index
    %c0_98 = arith.constant 0 : index
    %309 = vector.load %arg4[%c1_96, %c0_97, %c0_98] : memref<2x1x512xf32, #tpu.memory_space<vmem>>, vector<1x1x512xf32>
    %310 = vector.shape_cast %309 : vector<1x1x512xf32> to vector<1x512xf32>
    %311 = vector.broadcast %310 : vector<1x512xf32> to vector<64x512xf32>
    %312 = arith.addf %308, %311 : vector<64x512xf32>
    %313 = vector.shape_cast %312 : vector<64x512xf32> to vector<8x8x512xf32>
    %c0_99 = arith.constant 0 : index
    %c0_100 = arith.constant 0 : index
    %c0_101 = arith.constant 0 : index
    %314 = vector.load %arg13[%c0_99, %c0_100, %c0_101] : memref<8x8x512xf32, #tpu.memory_space<vmem>>, vector<8x8x512xf32>
    tpu.vector_store %arg13[%c0_99, %c0_100, %c0_101], %313 {strides = array<i32>} : memref<8x8x512xf32, #tpu.memory_space<vmem>>, vector<8x8x512xf32>,
    %c1_102 = arith.constant 1 : index
    %c0_103 = arith.constant 0 : index
    %c0_104 = arith.constant 0 : index
    %315 = vector.load %arg3[%c1_102, %c0_103, %c0_104] : memref<2x128x512xbf16, #tpu.memory_space<vmem>>, vector<1x128x512xbf16>
    %316 = vector.shape_cast %315 : vector<1x128x512xbf16> to vector<128x512xbf16>
    %c1_105 = arith.constant 1 : index
    %c0_106 = arith.constant 0 : index
    %c0_107 = arith.constant 0 : index
    %317 = vector.load %arg5[%c1_105, %c0_106, %c0_107] : memref<2x8x128xf32, #tpu.memory_space<vmem>>, vector<1x8x128xf32>
    %318 = vector.shape_cast %317 : vector<1x8x128xf32> to vector<8x128xf32>
    %c1_108 = arith.constant 1 : index
    %c0_109 = arith.constant 0 : index
    %c0_110 = arith.constant 0 : index
    %319 = vector.load %arg6[%c1_108, %c0_109, %c0_110] : memref<2x8x128xf32, #tpu.memory_space<vmem>>, vector<1x8x128xf32>
    %320 = vector.shape_cast %319 : vector<1x8x128xf32> to vector<8x128xf32>
    %c0_i32_111 = arith.constant 0 : i32
    %321 = arith.index_cast %c0_i32_111 : i32 to index
    %c0_112 = arith.constant 0 : index
    %c0_113 = arith.constant 0 : index
    %322 = vector.load %arg13[%321, %c0_112, %c0_113] : memref<8x8x512xf32, #tpu.memory_space<vmem>>, vector<1x8x512xf32>
    %323 = vector.shape_cast %322 : vector<1x8x512xf32> to vector<8x512xf32>
    %324 = arith.truncf %318 : vector<8x128xf32> to vector<8x128xbf16>
    %cst_114 = arith.constant dense<0.000000e+00> : vector<8x512xf32>
    %325 = tpu.matmul %324, %316, %cst_114 {dimension_numbers = #tpu.dot_dimension_numbers<[1], [0], [0], [1], [0, 0, 1, 1], [], []>} : vector<8x128xbf16>, vector<128x512xbf16>, vector<8x512xf32> -> vector<8x512xf32>
    %326 = arith.addf %323, %325 : vector<8x512xf32>
    %327 = vector.extract_strided_slice %326 {offsets = [0, 0], sizes = [8, 128], strides = [1, 1]} : vector<8x512xf32> to vector<8x128xf32>
    %328 = arith.negf %327 : vector<8x128xf32>
    %329 = math.exp %328 : vector<8x128xf32>
    %cst_115 = arith.constant 1.000000e+00 : f32
    %330 = vector.broadcast %cst_115 : f32 to vector<8x128xf32>
    %331 = arith.addf %330, %329 : vector<8x128xf32>
    %332 = arith.divf %330, %331 : vector<8x128xf32>
    %333 = vector.extract_strided_slice %326 {offsets = [0, 128], sizes = [8, 128], strides = [1, 1]} : vector<8x512xf32> to vector<8x128xf32>
    %334 = arith.negf %333 : vector<8x128xf32>
    %335 = math.exp %334 : vector<8x128xf32>
    %cst_116 = arith.constant 1.000000e+00 : f32
    %336 = vector.broadcast %cst_116 : f32 to vector<8x128xf32>
    %337 = arith.addf %336, %335 : vector<8x128xf32>
    %338 = arith.divf %336, %337 : vector<8x128xf32>
    %339 = vector.extract_strided_slice %326 {offsets = [0, 256], sizes = [8, 128], strides = [1, 1]} : vector<8x512xf32> to vector<8x128xf32>
    %340 = math.tanh %339 : vector<8x128xf32>
    %341 = vector.extract_strided_slice %326 {offsets = [0, 384], sizes = [8, 128], strides = [1, 1]} : vector<8x512xf32> to vector<8x128xf32>
    %342 = arith.negf %341 : vector<8x128xf32>
    %343 = math.exp %342 : vector<8x128xf32>
    %cst_117 = arith.constant 1.000000e+00 : f32
    %344 = vector.broadcast %cst_117 : f32 to vector<8x128xf32>
    %345 = arith.addf %344, %343 : vector<8x128xf32>
    %346 = arith.divf %344, %345 : vector<8x128xf32>
    %347 = arith.mulf %338, %320 : vector<8x128xf32>
    %348 = arith.mulf %332, %340 : vector<8x128xf32>
    %349 = arith.addf %347, %348 : vector<8x128xf32>
    %350 = math.tanh %349 : vector<8x128xf32>
    %351 = arith.mulf %346, %350 : vector<8x128xf32>
    %352 = arith.index_cast %c0_i32_111 : i32 to index
    %c0_118 = arith.constant 0 : index
    %c0_119 = arith.constant 0 : index
    %353 = vector.load %arg12[%352, %c0_118, %c0_119] : memref<8x8x128xf32, #tpu.memory_space<vmem>>, vector<1x8x128xf32>
    %354 = vector.shape_cast %353 : vector<1x8x128xf32> to vector<8x128xf32>
    %355 = vector.shape_cast %351 : vector<8x128xf32> to vector<1x8x128xf32>
    tpu.vector_store %arg12[%352, %c0_118, %c0_119], %355 {strides = array<i32>} : memref<8x8x128xf32, #tpu.memory_space<vmem>>, vector<1x8x128xf32>,
    %c1_i32_120 = arith.constant 1 : i32
    %356 = arith.index_cast %c1_i32_120 : i32 to index
    %c0_121 = arith.constant 0 : index
    %c0_122 = arith.constant 0 : index
    %357 = vector.load %arg13[%356, %c0_121, %c0_122] : memref<8x8x512xf32, #tpu.memory_space<vmem>>, vector<1x8x512xf32>
    %358 = vector.shape_cast %357 : vector<1x8x512xf32> to vector<8x512xf32>
    %359 = arith.truncf %351 : vector<8x128xf32> to vector<8x128xbf16>
    %cst_123 = arith.constant dense<0.000000e+00> : vector<8x512xf32>
    %360 = tpu.matmul %359, %316, %cst_123 {dimension_numbers = #tpu.dot_dimension_numbers<[1], [0], [0], [1], [0, 0, 1, 1], [], []>} : vector<8x128xbf16>, vector<128x512xbf16>, vector<8x512xf32> -> vector<8x512xf32>
    %361 = arith.addf %358, %360 : vector<8x512xf32>
    %362 = vector.extract_strided_slice %361 {offsets = [0, 0], sizes = [8, 128], strides = [1, 1]} : vector<8x512xf32> to vector<8x128xf32>
    %363 = arith.negf %362 : vector<8x128xf32>
    %364 = math.exp %363 : vector<8x128xf32>
    %cst_124 = arith.constant 1.000000e+00 : f32
    %365 = vector.broadcast %cst_124 : f32 to vector<8x128xf32>
    %366 = arith.addf %365, %364 : vector<8x128xf32>
    %367 = arith.divf %365, %366 : vector<8x128xf32>
    %368 = vector.extract_strided_slice %361 {offsets = [0, 128], sizes = [8, 128], strides = [1, 1]} : vector<8x512xf32> to vector<8x128xf32>
    %369 = arith.negf %368 : vector<8x128xf32>
    %370 = math.exp %369 : vector<8x128xf32>
    %cst_125 = arith.constant 1.000000e+00 : f32
    %371 = vector.broadcast %cst_125 : f32 to vector<8x128xf32>
    %372 = arith.addf %371, %370 : vector<8x128xf32>
    %373 = arith.divf %371, %372 : vector<8x128xf32>
    %374 = vector.extract_strided_slice %361 {offsets = [0, 256], sizes = [8, 128], strides = [1, 1]} : vector<8x512xf32> to vector<8x128xf32>
    %375 = math.tanh %374 : vector<8x128xf32>
    %376 = vector.extract_strided_slice %361 {offsets = [0, 384], sizes = [8, 128], strides = [1, 1]} : vector<8x512xf32> to vector<8x128xf32>
    %377 = arith.negf %376 : vector<8x128xf32>
    %378 = math.exp %377 : vector<8x128xf32>
    %cst_126 = arith.constant 1.000000e+00 : f32
    %379 = vector.broadcast %cst_126 : f32 to vector<8x128xf32>
    %380 = arith.addf %379, %378 : vector<8x128xf32>
    %381 = arith.divf %379, %380 : vector<8x128xf32>
    %382 = arith.mulf %373, %349 : vector<8x128xf32>
    %383 = arith.mulf %367, %375 : vector<8x128xf32>
    %384 = arith.addf %382, %383 : vector<8x128xf32>
    %385 = math.tanh %384 : vector<8x128xf32>
    %386 = arith.mulf %381, %385 : vector<8x128xf32>
    %387 = arith.index_cast %c1_i32_120 : i32 to index
    %c0_127 = arith.constant 0 : index
    %c0_128 = arith.constant 0 : index
    %388 = vector.load %arg12[%387, %c0_127, %c0_128] : memref<8x8x128xf32, #tpu.memory_space<vmem>>, vector<1x8x128xf32>
    %389 = vector.shape_cast %388 : vector<1x8x128xf32> to vector<8x128xf32>
    %390 = vector.shape_cast %386 : vector<8x128xf32> to vector<1x8x128xf32>
    tpu.vector_store %arg12[%387, %c0_127, %c0_128], %390 {strides = array<i32>} : memref<8x8x128xf32, #tpu.memory_space<vmem>>, vector<1x8x128xf32>,
    %c2_i32_129 = arith.constant 2 : i32
    %391 = arith.index_cast %c2_i32_129 : i32 to index
    %c0_130 = arith.constant 0 : index
    %c0_131 = arith.constant 0 : index
    %392 = vector.load %arg13[%391, %c0_130, %c0_131] : memref<8x8x512xf32, #tpu.memory_space<vmem>>, vector<1x8x512xf32>
    %393 = vector.shape_cast %392 : vector<1x8x512xf32> to vector<8x512xf32>
    %394 = arith.truncf %386 : vector<8x128xf32> to vector<8x128xbf16>
    %cst_132 = arith.constant dense<0.000000e+00> : vector<8x512xf32>
    %395 = tpu.matmul %394, %316, %cst_132 {dimension_numbers = #tpu.dot_dimension_numbers<[1], [0], [0], [1], [0, 0, 1, 1], [], []>} : vector<8x128xbf16>, vector<128x512xbf16>, vector<8x512xf32> -> vector<8x512xf32>
    %396 = arith.addf %393, %395 : vector<8x512xf32>
    %397 = vector.extract_strided_slice %396 {offsets = [0, 0], sizes = [8, 128], strides = [1, 1]} : vector<8x512xf32> to vector<8x128xf32>
    %398 = arith.negf %397 : vector<8x128xf32>
    %399 = math.exp %398 : vector<8x128xf32>
    %cst_133 = arith.constant 1.000000e+00 : f32
    %400 = vector.broadcast %cst_133 : f32 to vector<8x128xf32>
    %401 = arith.addf %400, %399 : vector<8x128xf32>
    %402 = arith.divf %400, %401 : vector<8x128xf32>
    %403 = vector.extract_strided_slice %396 {offsets = [0, 128], sizes = [8, 128], strides = [1, 1]} : vector<8x512xf32> to vector<8x128xf32>
    %404 = arith.negf %403 : vector<8x128xf32>
    %405 = math.exp %404 : vector<8x128xf32>
    %cst_134 = arith.constant 1.000000e+00 : f32
    %406 = vector.broadcast %cst_134 : f32 to vector<8x128xf32>
    %407 = arith.addf %406, %405 : vector<8x128xf32>
    %408 = arith.divf %406, %407 : vector<8x128xf32>
    %409 = vector.extract_strided_slice %396 {offsets = [0, 256], sizes = [8, 128], strides = [1, 1]} : vector<8x512xf32> to vector<8x128xf32>
    %410 = math.tanh %409 : vector<8x128xf32>
    %411 = vector.extract_strided_slice %396 {offsets = [0, 384], sizes = [8, 128], strides = [1, 1]} : vector<8x512xf32> to vector<8x128xf32>
    %412 = arith.negf %411 : vector<8x128xf32>
    %413 = math.exp %412 : vector<8x128xf32>
    %cst_135 = arith.constant 1.000000e+00 : f32
    %414 = vector.broadcast %cst_135 : f32 to vector<8x128xf32>
    %415 = arith.addf %414, %413 : vector<8x128xf32>
    %416 = arith.divf %414, %415 : vector<8x128xf32>
    %417 = arith.mulf %408, %384 : vector<8x128xf32>
    %418 = arith.mulf %402, %410 : vector<8x128xf32>
    %419 = arith.addf %417, %418 : vector<8x128xf32>
    %420 = math.tanh %419 : vector<8x128xf32>
    %421 = arith.mulf %416, %420 : vector<8x128xf32>
    %422 = arith.index_cast %c2_i32_129 : i32 to index
    %c0_136 = arith.constant 0 : index
    %c0_137 = arith.constant 0 : index
    %423 = vector.load %arg12[%422, %c0_136, %c0_137] : memref<8x8x128xf32, #tpu.memory_space<vmem>>, vector<1x8x128xf32>
    %424 = vector.shape_cast %423 : vector<1x8x128xf32> to vector<8x128xf32>
    %425 = vector.shape_cast %421 : vector<8x128xf32> to vector<1x8x128xf32>
    tpu.vector_store %arg12[%422, %c0_136, %c0_137], %425 {strides = array<i32>} : memref<8x8x128xf32, #tpu.memory_space<vmem>>, vector<1x8x128xf32>,
    %c3_i32_138 = arith.constant 3 : i32
    %426 = arith.index_cast %c3_i32_138 : i32 to index
    %c0_139 = arith.constant 0 : index
    %c0_140 = arith.constant 0 : index
    %427 = vector.load %arg13[%426, %c0_139, %c0_140] : memref<8x8x512xf32, #tpu.memory_space<vmem>>, vector<1x8x512xf32>
    %428 = vector.shape_cast %427 : vector<1x8x512xf32> to vector<8x512xf32>
    %429 = arith.truncf %421 : vector<8x128xf32> to vector<8x128xbf16>
    %cst_141 = arith.constant dense<0.000000e+00> : vector<8x512xf32>
    %430 = tpu.matmul %429, %316, %cst_141 {dimension_numbers = #tpu.dot_dimension_numbers<[1], [0], [0], [1], [0, 0, 1, 1], [], []>} : vector<8x128xbf16>, vector<128x512xbf16>, vector<8x512xf32> -> vector<8x512xf32>
    %431 = arith.addf %428, %430 : vector<8x512xf32>
    %432 = vector.extract_strided_slice %431 {offsets = [0, 0], sizes = [8, 128], strides = [1, 1]} : vector<8x512xf32> to vector<8x128xf32>
    %433 = arith.negf %432 : vector<8x128xf32>
    %434 = math.exp %433 : vector<8x128xf32>
    %cst_142 = arith.constant 1.000000e+00 : f32
    %435 = vector.broadcast %cst_142 : f32 to vector<8x128xf32>
    %436 = arith.addf %435, %434 : vector<8x128xf32>
    %437 = arith.divf %435, %436 : vector<8x128xf32>
    %438 = vector.extract_strided_slice %431 {offsets = [0, 128], sizes = [8, 128], strides = [1, 1]} : vector<8x512xf32> to vector<8x128xf32>
    %439 = arith.negf %438 : vector<8x128xf32>
    %440 = math.exp %439 : vector<8x128xf32>
    %cst_143 = arith.constant 1.000000e+00 : f32
    %441 = vector.broadcast %cst_143 : f32 to vector<8x128xf32>
    %442 = arith.addf %441, %440 : vector<8x128xf32>
    %443 = arith.divf %441, %442 : vector<8x128xf32>
    %444 = vector.extract_strided_slice %431 {offsets = [0, 256], sizes = [8, 128], strides = [1, 1]} : vector<8x512xf32> to vector<8x128xf32>
    %445 = math.tanh %444 : vector<8x128xf32>
    %446 = vector.extract_strided_slice %431 {offsets = [0, 384], sizes = [8, 128], strides = [1, 1]} : vector<8x512xf32> to vector<8x128xf32>
    %447 = arith.negf %446 : vector<8x128xf32>
    %448 = math.exp %447 : vector<8x128xf32>
    %cst_144 = arith.constant 1.000000e+00 : f32
    %449 = vector.broadcast %cst_144 : f32 to vector<8x128xf32>
    %450 = arith.addf %449, %448 : vector<8x128xf32>
    %451 = arith.divf %449, %450 : vector<8x128xf32>
    %452 = arith.mulf %443, %419 : vector<8x128xf32>
    %453 = arith.mulf %437, %445 : vector<8x128xf32>
    %454 = arith.addf %452, %453 : vector<8x128xf32>
    %455 = math.tanh %454 : vector<8x128xf32>
    %456 = arith.mulf %451, %455 : vector<8x128xf32>
    %457 = arith.index_cast %c3_i32_138 : i32 to index
    %c0_145 = arith.constant 0 : index
    %c0_146 = arith.constant 0 : index
    %458 = vector.load %arg12[%457, %c0_145, %c0_146] : memref<8x8x128xf32, #tpu.memory_space<vmem>>, vector<1x8x128xf32>
    %459 = vector.shape_cast %458 : vector<1x8x128xf32> to vector<8x128xf32>
    %460 = vector.shape_cast %456 : vector<8x128xf32> to vector<1x8x128xf32>
    tpu.vector_store %arg12[%457, %c0_145, %c0_146], %460 {strides = array<i32>} : memref<8x8x128xf32, #tpu.memory_space<vmem>>, vector<1x8x128xf32>,
    %c4_i32_147 = arith.constant 4 : i32
    %461 = arith.index_cast %c4_i32_147 : i32 to index
    %c0_148 = arith.constant 0 : index
    %c0_149 = arith.constant 0 : index
    %462 = vector.load %arg13[%461, %c0_148, %c0_149] : memref<8x8x512xf32, #tpu.memory_space<vmem>>, vector<1x8x512xf32>
    %463 = vector.shape_cast %462 : vector<1x8x512xf32> to vector<8x512xf32>
    %464 = arith.truncf %456 : vector<8x128xf32> to vector<8x128xbf16>
    %cst_150 = arith.constant dense<0.000000e+00> : vector<8x512xf32>
    %465 = tpu.matmul %464, %316, %cst_150 {dimension_numbers = #tpu.dot_dimension_numbers<[1], [0], [0], [1], [0, 0, 1, 1], [], []>} : vector<8x128xbf16>, vector<128x512xbf16>, vector<8x512xf32> -> vector<8x512xf32>
    %466 = arith.addf %463, %465 : vector<8x512xf32>
    %467 = vector.extract_strided_slice %466 {offsets = [0, 0], sizes = [8, 128], strides = [1, 1]} : vector<8x512xf32> to vector<8x128xf32>
    %468 = arith.negf %467 : vector<8x128xf32>
    %469 = math.exp %468 : vector<8x128xf32>
    %cst_151 = arith.constant 1.000000e+00 : f32
    %470 = vector.broadcast %cst_151 : f32 to vector<8x128xf32>
    %471 = arith.addf %470, %469 : vector<8x128xf32>
    %472 = arith.divf %470, %471 : vector<8x128xf32>
    %473 = vector.extract_strided_slice %466 {offsets = [0, 128], sizes = [8, 128], strides = [1, 1]} : vector<8x512xf32> to vector<8x128xf32>
    %474 = arith.negf %473 : vector<8x128xf32>
    %475 = math.exp %474 : vector<8x128xf32>
    %cst_152 = arith.constant 1.000000e+00 : f32
    %476 = vector.broadcast %cst_152 : f32 to vector<8x128xf32>
    %477 = arith.addf %476, %475 : vector<8x128xf32>
    %478 = arith.divf %476, %477 : vector<8x128xf32>
    %479 = vector.extract_strided_slice %466 {offsets = [0, 256], sizes = [8, 128], strides = [1, 1]} : vector<8x512xf32> to vector<8x128xf32>
    %480 = math.tanh %479 : vector<8x128xf32>
    %481 = vector.extract_strided_slice %466 {offsets = [0, 384], sizes = [8, 128], strides = [1, 1]} : vector<8x512xf32> to vector<8x128xf32>
    %482 = arith.negf %481 : vector<8x128xf32>
    %483 = math.exp %482 : vector<8x128xf32>
    %cst_153 = arith.constant 1.000000e+00 : f32
    %484 = vector.broadcast %cst_153 : f32 to vector<8x128xf32>
    %485 = arith.addf %484, %483 : vector<8x128xf32>
    %486 = arith.divf %484, %485 : vector<8x128xf32>
    %487 = arith.mulf %478, %454 : vector<8x128xf32>
    %488 = arith.mulf %472, %480 : vector<8x128xf32>
    %489 = arith.addf %487, %488 : vector<8x128xf32>
    %490 = math.tanh %489 : vector<8x128xf32>
    %491 = arith.mulf %486, %490 : vector<8x128xf32>
    %492 = arith.index_cast %c4_i32_147 : i32 to index
    %c0_154 = arith.constant 0 : index
    %c0_155 = arith.constant 0 : index
    %493 = vector.load %arg12[%492, %c0_154, %c0_155] : memref<8x8x128xf32, #tpu.memory_space<vmem>>, vector<1x8x128xf32>
    %494 = vector.shape_cast %493 : vector<1x8x128xf32> to vector<8x128xf32>
    %495 = vector.shape_cast %491 : vector<8x128xf32> to vector<1x8x128xf32>
    tpu.vector_store %arg12[%492, %c0_154, %c0_155], %495 {strides = array<i32>} : memref<8x8x128xf32, #tpu.memory_space<vmem>>, vector<1x8x128xf32>,
    %c5_i32_156 = arith.constant 5 : i32
    %496 = arith.index_cast %c5_i32_156 : i32 to index
    %c0_157 = arith.constant 0 : index
    %c0_158 = arith.constant 0 : index
    %497 = vector.load %arg13[%496, %c0_157, %c0_158] : memref<8x8x512xf32, #tpu.memory_space<vmem>>, vector<1x8x512xf32>
    %498 = vector.shape_cast %497 : vector<1x8x512xf32> to vector<8x512xf32>
    %499 = arith.truncf %491 : vector<8x128xf32> to vector<8x128xbf16>
    %cst_159 = arith.constant dense<0.000000e+00> : vector<8x512xf32>
    %500 = tpu.matmul %499, %316, %cst_159 {dimension_numbers = #tpu.dot_dimension_numbers<[1], [0], [0], [1], [0, 0, 1, 1], [], []>} : vector<8x128xbf16>, vector<128x512xbf16>, vector<8x512xf32> -> vector<8x512xf32>
    %501 = arith.addf %498, %500 : vector<8x512xf32>
    %502 = vector.extract_strided_slice %501 {offsets = [0, 0], sizes = [8, 128], strides = [1, 1]} : vector<8x512xf32> to vector<8x128xf32>
    %503 = arith.negf %502 : vector<8x128xf32>
    %504 = math.exp %503 : vector<8x128xf32>
    %cst_160 = arith.constant 1.000000e+00 : f32
    %505 = vector.broadcast %cst_160 : f32 to vector<8x128xf32>
    %506 = arith.addf %505, %504 : vector<8x128xf32>
    %507 = arith.divf %505, %506 : vector<8x128xf32>
    %508 = vector.extract_strided_slice %501 {offsets = [0, 128], sizes = [8, 128], strides = [1, 1]} : vector<8x512xf32> to vector<8x128xf32>
    %509 = arith.negf %508 : vector<8x128xf32>
    %510 = math.exp %509 : vector<8x128xf32>
    %cst_161 = arith.constant 1.000000e+00 : f32
    %511 = vector.broadcast %cst_161 : f32 to vector<8x128xf32>
    %512 = arith.addf %511, %510 : vector<8x128xf32>
    %513 = arith.divf %511, %512 : vector<8x128xf32>
    %514 = vector.extract_strided_slice %501 {offsets = [0, 256], sizes = [8, 128], strides = [1, 1]} : vector<8x512xf32> to vector<8x128xf32>
    %515 = math.tanh %514 : vector<8x128xf32>
    %516 = vector.extract_strided_slice %501 {offsets = [0, 384], sizes = [8, 128], strides = [1, 1]} : vector<8x512xf32> to vector<8x128xf32>
    %517 = arith.negf %516 : vector<8x128xf32>
    %518 = math.exp %517 : vector<8x128xf32>
    %cst_162 = arith.constant 1.000000e+00 : f32
    %519 = vector.broadcast %cst_162 : f32 to vector<8x128xf32>
    %520 = arith.addf %519, %518 : vector<8x128xf32>
    %521 = arith.divf %519, %520 : vector<8x128xf32>
    %522 = arith.mulf %513, %489 : vector<8x128xf32>
    %523 = arith.mulf %507, %515 : vector<8x128xf32>
    %524 = arith.addf %522, %523 : vector<8x128xf32>
    %525 = math.tanh %524 : vector<8x128xf32>
    %526 = arith.mulf %521, %525 : vector<8x128xf32>
    %527 = arith.index_cast %c5_i32_156 : i32 to index
    %c0_163 = arith.constant 0 : index
    %c0_164 = arith.constant 0 : index
    %528 = vector.load %arg12[%527, %c0_163, %c0_164] : memref<8x8x128xf32, #tpu.memory_space<vmem>>, vector<1x8x128xf32>
    %529 = vector.shape_cast %528 : vector<1x8x128xf32> to vector<8x128xf32>
    %530 = vector.shape_cast %526 : vector<8x128xf32> to vector<1x8x128xf32>
    tpu.vector_store %arg12[%527, %c0_163, %c0_164], %530 {strides = array<i32>} : memref<8x8x128xf32, #tpu.memory_space<vmem>>, vector<1x8x128xf32>,
    %c6_i32_165 = arith.constant 6 : i32
    %531 = arith.index_cast %c6_i32_165 : i32 to index
    %c0_166 = arith.constant 0 : index
    %c0_167 = arith.constant 0 : index
    %532 = vector.load %arg13[%531, %c0_166, %c0_167] : memref<8x8x512xf32, #tpu.memory_space<vmem>>, vector<1x8x512xf32>
    %533 = vector.shape_cast %532 : vector<1x8x512xf32> to vector<8x512xf32>
    %534 = arith.truncf %526 : vector<8x128xf32> to vector<8x128xbf16>
    %cst_168 = arith.constant dense<0.000000e+00> : vector<8x512xf32>
    %535 = tpu.matmul %534, %316, %cst_168 {dimension_numbers = #tpu.dot_dimension_numbers<[1], [0], [0], [1], [0, 0, 1, 1], [], []>} : vector<8x128xbf16>, vector<128x512xbf16>, vector<8x512xf32> -> vector<8x512xf32>
    %536 = arith.addf %533, %535 : vector<8x512xf32>
    %537 = vector.extract_strided_slice %536 {offsets = [0, 0], sizes = [8, 128], strides = [1, 1]} : vector<8x512xf32> to vector<8x128xf32>
    %538 = arith.negf %537 : vector<8x128xf32>
    %539 = math.exp %538 : vector<8x128xf32>
    %cst_169 = arith.constant 1.000000e+00 : f32
    %540 = vector.broadcast %cst_169 : f32 to vector<8x128xf32>
    %541 = arith.addf %540, %539 : vector<8x128xf32>
    %542 = arith.divf %540, %541 : vector<8x128xf32>
    %543 = vector.extract_strided_slice %536 {offsets = [0, 128], sizes = [8, 128], strides = [1, 1]} : vector<8x512xf32> to vector<8x128xf32>
    %544 = arith.negf %543 : vector<8x128xf32>
    %545 = math.exp %544 : vector<8x128xf32>
    %cst_170 = arith.constant 1.000000e+00 : f32
    %546 = vector.broadcast %cst_170 : f32 to vector<8x128xf32>
    %547 = arith.addf %546, %545 : vector<8x128xf32>
    %548 = arith.divf %546, %547 : vector<8x128xf32>
    %549 = vector.extract_strided_slice %536 {offsets = [0, 256], sizes = [8, 128], strides = [1, 1]} : vector<8x512xf32> to vector<8x128xf32>
    %550 = math.tanh %549 : vector<8x128xf32>
    %551 = vector.extract_strided_slice %536 {offsets = [0, 384], sizes = [8, 128], strides = [1, 1]} : vector<8x512xf32> to vector<8x128xf32>
    %552 = arith.negf %551 : vector<8x128xf32>
    %553 = math.exp %552 : vector<8x128xf32>
    %cst_171 = arith.constant 1.000000e+00 : f32
    %554 = vector.broadcast %cst_171 : f32 to vector<8x128xf32>
    %555 = arith.addf %554, %553 : vector<8x128xf32>
    %556 = arith.divf %554, %555 : vector<8x128xf32>
    %557 = arith.mulf %548, %524 : vector<8x128xf32>
    %558 = arith.mulf %542, %550 : vector<8x128xf32>
    %559 = arith.addf %557, %558 : vector<8x128xf32>
    %560 = math.tanh %559 : vector<8x128xf32>
    %561 = arith.mulf %556, %560 : vector<8x128xf32>
    %562 = arith.index_cast %c6_i32_165 : i32 to index
    %c0_172 = arith.constant 0 : index
    %c0_173 = arith.constant 0 : index
    %563 = vector.load %arg12[%562, %c0_172, %c0_173] : memref<8x8x128xf32, #tpu.memory_space<vmem>>, vector<1x8x128xf32>
    %564 = vector.shape_cast %563 : vector<1x8x128xf32> to vector<8x128xf32>
    %565 = vector.shape_cast %561 : vector<8x128xf32> to vector<1x8x128xf32>
    tpu.vector_store %arg12[%562, %c0_172, %c0_173], %565 {strides = array<i32>} : memref<8x8x128xf32, #tpu.memory_space<vmem>>, vector<1x8x128xf32>,
    %c7_i32_174 = arith.constant 7 : i32
    %566 = arith.index_cast %c7_i32_174 : i32 to index
    %c0_175 = arith.constant 0 : index
    %c0_176 = arith.constant 0 : index
    %567 = vector.load %arg13[%566, %c0_175, %c0_176] : memref<8x8x512xf32, #tpu.memory_space<vmem>>, vector<1x8x512xf32>
    %568 = vector.shape_cast %567 : vector<1x8x512xf32> to vector<8x512xf32>
    %569 = arith.truncf %561 : vector<8x128xf32> to vector<8x128xbf16>
    %cst_177 = arith.constant dense<0.000000e+00> : vector<8x512xf32>
    %570 = tpu.matmul %569, %316, %cst_177 {dimension_numbers = #tpu.dot_dimension_numbers<[1], [0], [0], [1], [0, 0, 1, 1], [], []>} : vector<8x128xbf16>, vector<128x512xbf16>, vector<8x512xf32> -> vector<8x512xf32>
    %571 = arith.addf %568, %570 : vector<8x512xf32>
    %572 = vector.extract_strided_slice %571 {offsets = [0, 0], sizes = [8, 128], strides = [1, 1]} : vector<8x512xf32> to vector<8x128xf32>
    %573 = arith.negf %572 : vector<8x128xf32>
    %574 = math.exp %573 : vector<8x128xf32>
    %cst_178 = arith.constant 1.000000e+00 : f32
    %575 = vector.broadcast %cst_178 : f32 to vector<8x128xf32>
    %576 = arith.addf %575, %574 : vector<8x128xf32>
    %577 = arith.divf %575, %576 : vector<8x128xf32>
    %578 = vector.extract_strided_slice %571 {offsets = [0, 128], sizes = [8, 128], strides = [1, 1]} : vector<8x512xf32> to vector<8x128xf32>
    %579 = arith.negf %578 : vector<8x128xf32>
    %580 = math.exp %579 : vector<8x128xf32>
    %cst_179 = arith.constant 1.000000e+00 : f32
    %581 = vector.broadcast %cst_179 : f32 to vector<8x128xf32>
    %582 = arith.addf %581, %580 : vector<8x128xf32>
    %583 = arith.divf %581, %582 : vector<8x128xf32>
    %584 = vector.extract_strided_slice %571 {offsets = [0, 256], sizes = [8, 128], strides = [1, 1]} : vector<8x512xf32> to vector<8x128xf32>
    %585 = math.tanh %584 : vector<8x128xf32>
    %586 = vector.extract_strided_slice %571 {offsets = [0, 384], sizes = [8, 128], strides = [1, 1]} : vector<8x512xf32> to vector<8x128xf32>
    %587 = arith.negf %586 : vector<8x128xf32>
    %588 = math.exp %587 : vector<8x128xf32>
    %cst_180 = arith.constant 1.000000e+00 : f32
    %589 = vector.broadcast %cst_180 : f32 to vector<8x128xf32>
    %590 = arith.addf %589, %588 : vector<8x128xf32>
    %591 = arith.divf %589, %590 : vector<8x128xf32>
    %592 = arith.mulf %583, %559 : vector<8x128xf32>
    %593 = arith.mulf %577, %585 : vector<8x128xf32>
    %594 = arith.addf %592, %593 : vector<8x128xf32>
    %595 = math.tanh %594 : vector<8x128xf32>
    %596 = arith.mulf %591, %595 : vector<8x128xf32>
    %597 = arith.index_cast %c7_i32_174 : i32 to index
    %c0_181 = arith.constant 0 : index
    %c0_182 = arith.constant 0 : index
    %598 = vector.load %arg12[%597, %c0_181, %c0_182] : memref<8x8x128xf32, #tpu.memory_space<vmem>>, vector<1x8x128xf32>
    %599 = vector.shape_cast %598 : vector<1x8x128xf32> to vector<8x128xf32>
    %600 = vector.shape_cast %596 : vector<8x128xf32> to vector<1x8x128xf32>
    tpu.vector_store %arg12[%597, %c0_181, %c0_182], %600 {strides = array<i32>} : memref<8x8x128xf32, #tpu.memory_space<vmem>>, vector<1x8x128xf32>,
    %c8_i32_183 = arith.constant 8 : i32
    %c1_184 = arith.constant 1 : index
    %c0_185 = arith.constant 0 : index
    %c0_186 = arith.constant 0 : index
    %601 = vector.load %arg10[%c1_184, %c0_185, %c0_186] : memref<2x8x128xf32, #tpu.memory_space<vmem>>, vector<1x8x128xf32>
    %602 = vector.shape_cast %601 : vector<1x8x128xf32> to vector<8x128xf32>
    %603 = vector.shape_cast %596 : vector<8x128xf32> to vector<1x8x128xf32>
    tpu.vector_store %arg10[%c1_184, %c0_185, %c0_186], %603 {strides = array<i32>} : memref<2x8x128xf32, #tpu.memory_space<vmem>>, vector<1x8x128xf32>,
    %c1_187 = arith.constant 1 : index
    %c0_188 = arith.constant 0 : index
    %c0_189 = arith.constant 0 : index
    %604 = vector.load %arg11[%c1_187, %c0_188, %c0_189] : memref<2x8x128xf32, #tpu.memory_space<vmem>>, vector<1x8x128xf32>
    %605 = vector.shape_cast %604 : vector<1x8x128xf32> to vector<8x128xf32>
    %606 = vector.shape_cast %594 : vector<8x128xf32> to vector<1x8x128xf32>
    tpu.vector_store %arg11[%c1_187, %c0_188, %c0_189], %606 {strides = array<i32>} : memref<2x8x128xf32, #tpu.memory_space<vmem>>, vector<1x8x128xf32>,
    %c0_190 = arith.constant 0 : index
    %c0_191 = arith.constant 0 : index
    %c0_192 = arith.constant 0 : index
    %607 = vector.load %arg12[%c0_190, %c0_191, %c0_192] : memref<8x8x128xf32, #tpu.memory_space<vmem>>, vector<8x8x128xf32>
    %608 = vector.shape_cast %607 : vector<8x8x128xf32> to vector<64x128xf32>
    %cst_193 = arith.constant 0.000000e+00 : f32
    %609 = vector.broadcast %cst_193 : f32 to vector<64x128xf32>
    %610 = arith.maximumf %608, %609 : vector<64x128xf32>
    %611 = arith.truncf %610 : vector<64x128xf32> to vector<64x128xbf16>
    %c0_194 = arith.constant 0 : index
    %c0_195 = arith.constant 0 : index
    %612 = vector.load %arg7[%c0_194, %c0_195] : memref<128x128xbf16, #tpu.memory_space<vmem>>, vector<128x128xbf16>
    %cst_196 = arith.constant dense<0.000000e+00> : vector<64x128xf32>
    %613 = tpu.matmul %611, %612, %cst_196 {dimension_numbers = #tpu.dot_dimension_numbers<[1], [0], [0], [1], [0, 0, 1, 1], [], []>} : vector<64x128xbf16>, vector<128x128xbf16>, vector<64x128xf32> -> vector<64x128xf32>
    %c0_197 = arith.constant 0 : index
    %c0_198 = arith.constant 0 : index
    %614 = vector.load %arg8[%c0_197, %c0_198] : memref<1x128xf32, #tpu.memory_space<vmem>>, vector<1x128xf32>
    %615 = vector.broadcast %614 : vector<1x128xf32> to vector<64x128xf32>
    %616 = arith.addf %613, %615 : vector<64x128xf32>
    %617 = vector.shape_cast %616 : vector<64x128xf32> to vector<8x8x128xf32>
    %c0_199 = arith.constant 0 : index
    %c0_200 = arith.constant 0 : index
    %c0_201 = arith.constant 0 : index
    %618 = vector.load %arg9[%c0_199, %c0_200, %c0_201] : memref<8x8x128xf32, #tpu.memory_space<vmem>>, vector<8x8x128xf32>
    tpu.vector_store %arg9[%c0_199, %c0_200, %c0_201], %617 {strides = array<i32>} : memref<8x8x128xf32, #tpu.memory_space<vmem>>, vector<8x8x128xf32>,
    return
  }
  func.func @transform_0(%arg0: i32) -> (i32, i32, i32) {
    %c0_i32 = arith.constant 0 : i32
    %c0_i32_0 = arith.constant 0 : i32
    %c0_i32_1 = arith.constant 0 : i32
    %c0_i32_2 = arith.constant 0 : i32
    return %c0_i32, %c0_i32_0, %c0_i32_1 : i32, i32, i32
  }
  func.func @transform_1(%arg0: i32) -> (i32, i32, i32) {
    %c0_i32 = arith.constant 0 : i32
    %c0_i32_0 = arith.constant 0 : i32
    %c0_i32_1 = arith.constant 0 : i32
    %c0_i32_2 = arith.constant 0 : i32
    return %c0_i32, %c0_i32_0, %c0_i32_1 : i32, i32, i32
  }
  func.func @transform_2(%arg0: i32) -> (i32, i32, i32) {
    %c0_i32 = arith.constant 0 : i32
    %c0_i32_0 = arith.constant 0 : i32
    %c0_i32_1 = arith.constant 0 : i32
    %c0_i32_2 = arith.constant 0 : i32
    return %c0_i32, %c0_i32_0, %c0_i32_1 : i32, i32, i32
  }
  func.func @transform_3(%arg0: i32) -> (i32, i32, i32) {
    %c0_i32 = arith.constant 0 : i32
    %c0_i32_0 = arith.constant 0 : i32
    %c0_i32_1 = arith.constant 0 : i32
    %c0_i32_2 = arith.constant 0 : i32
    return %c0_i32, %c0_i32_0, %c0_i32_1 : i32, i32, i32
  }
  func.func @transform_4(%arg0: i32) -> (i32, i32, i32) {
    %c0_i32 = arith.constant 0 : i32
    %c0_i32_0 = arith.constant 0 : i32
    %c0_i32_1 = arith.constant 0 : i32
    %c0_i32_2 = arith.constant 0 : i32
    return %c0_i32, %c0_i32_0, %c0_i32_1 : i32, i32, i32
  }
  func.func @transform_5(%arg0: i32) -> (i32, i32, i32) {
    %c0_i32 = arith.constant 0 : i32
    %c0_i32_0 = arith.constant 0 : i32
    %c0_i32_1 = arith.constant 0 : i32
    %c0_i32_2 = arith.constant 0 : i32
    return %c0_i32, %c0_i32_0, %c0_i32_1 : i32, i32, i32
  }
  func.func @transform_6(%arg0: i32) -> (i32, i32) {
    %c0_i32 = arith.constant 0 : i32
    %c0_i32_0 = arith.constant 0 : i32
    %c0_i32_1 = arith.constant 0 : i32
    return %c0_i32, %c0_i32_0 : i32, i32
  }
  func.func @transform_7(%arg0: i32) -> (i32, i32) {
    %c0_i32 = arith.constant 0 : i32
    %c0_i32_0 = arith.constant 0 : i32
    %c0_i32_1 = arith.constant 0 : i32
    return %c0_i32, %c0_i32_0 : i32, i32
  }
  func.func @transform_8(%arg0: i32) -> (i32, i32, i32) {
    %c0_i32 = arith.constant 0 : i32
    %c0_i32_0 = arith.constant 0 : i32
    %c0_i32_1 = arith.constant 0 : i32
    %c0_i32_2 = arith.constant 0 : i32
    return %c0_i32, %c0_i32_0, %c0_i32_1 : i32, i32, i32
  }
  func.func @transform_9(%arg0: i32) -> (i32, i32, i32) {
    %c0_i32 = arith.constant 0 : i32
    %c0_i32_0 = arith.constant 0 : i32
    %c0_i32_1 = arith.constant 0 : i32
    %c0_i32_2 = arith.constant 0 : i32
    return %c0_i32, %c0_i32_0, %c0_i32_1 : i32, i32, i32
  }
  func.func @transform_10(%arg0: i32) -> (i32, i32, i32) {
    %c0_i32 = arith.constant 0 : i32
    %c0_i32_0 = arith.constant 0 : i32
    %c0_i32_1 = arith.constant 0 : i32
    %c0_i32_2 = arith.constant 0 : i32
    return %c0_i32, %c0_i32_0, %c0_i32_1 : i32, i32, i32
  }
}

</mosaic_0001>

<llo_original>
// kernel: lstm_net_forward.1
$region0: #{lstm_net_forward.1}
  #allocation0 [shape = 'u32[]', space=smem, size = 0x4, offset = 0x4, fixed_abs, tag = 'smem constant byte address 0x4 - core index']
  #allocation1 [shape = 'u32[72,128]{1,0:T(1,128)}', space=vmem, size = 0x9000, scoped, tag = 'internal scratch']
  #allocation2 [shape = 'f32[8,8,128]{2,1,0:T(8,128)}', space=vmem, size = 0x8000, scoped, tag = 'scratch operand']
  #allocation3 [shape = 'f32[8,8,512]{2,1,0:T(8,128)}', space=vmem, size = 0x20000, scoped, tag = 'scratch operand']
  %s0 = inlined_call_operand.vmem [shape: bf16[8,8,128], index: 0, kind: input, shape index: {}]
  %s1 = inlined_call_operand.hbm [shape: bf16[2,128,512], index: 1, kind: input, shape index: {}]
  %s2 = inlined_call_operand.hbm [shape: bf16[2,128,512], index: 2, kind: input, shape index: {}]
  %s3 = inlined_call_operand.vmem [shape: f32[2,1,512], index: 3, kind: input, shape index: {}]
  %s4 = inlined_call_operand.vmem [shape: f32[2,8,128], index: 4, kind: input, shape index: {}]
  %s5 = inlined_call_operand.vmem [shape: f32[2,8,128], index: 5, kind: input, shape index: {}]
  %s6 = inlined_call_operand.vmem [shape: bf16[128,128], index: 6, kind: input, shape index: {}]
  %s7 = inlined_call_operand.vmem [shape: f32[1,128], index: 7, kind: input, shape index: {}]
  %s8 = inlined_call_operand.vmem [shape: f32[8,8,128], index: 8, kind: output, shape index: {0}]
  %s9 = inlined_call_operand.vmem [shape: f32[2,8,128], index: 9, kind: output, shape index: {1}]
  %s10 = inlined_call_operand.vmem [shape: f32[2,8,128], index: 10, kind: output, shape index: {2}]
  %11 = xla_tuple %s8, %s9, %s10
  %s12 = sld [smem:[#allocation0]]
  $region66: #{lstm_net_forward.1} parent=0
    _
  %s14 = ssub.s32 1, %s12
  %s15 = scalar_select 0, %s14, %s12
  $region1: #{lstm_net_forward.1} parent=0
    #allocation4 [shape = 'u8[262144]{0}', space=vmem, size = 0x40000, scoped, tag = 'input window, operand 1, single buffered']
    #allocation5 [shape = 's32[1]{0}', space=sflag, size = 0x4, scoped, tag = 'scoped memory for lstm_net_forward.1']
    #allocation6 [shape = 'u8[262144]{0}', space=vmem, size = 0x40000, scoped, tag = 'input window, operand 2, single buffered']
    #allocation7 [shape = 's32[1]{0}', space=sflag, size = 0x4, scoped, tag = 'scoped memory for lstm_net_forward.1']
    %16 = vsyncpa [#allocation5], 0
    %17 = vsyncpa [#allocation7], 0
    // Predicated region
    $region2: #{lstm_net_forward.1} parent=1 // pred_check
      _
    $region3: #{lstm_net_forward.1} parent=1 // pred_check_branch
      %19 = sbr.rel (0) target = $region5
    $region4: #{lstm_net_forward.1} parent=1 // pred_region
      _
    $region5: #{lstm_net_forward.1} parent=1 // pred_fallthru
      _
    // Predicated region
    $region6: #{lstm_net_forward.1} parent=1 // pred_check
      _
    $region7: #{lstm_net_forward.1} parent=1 // pred_check_branch
      %21 = sbr.rel (0) target = $region9
    $region8: #{lstm_net_forward.1} parent=1 // pred_region
      %23 = vsyncadd [#allocation5], 0
      %s24 = sshll.u32 %s1, 4
      %s25 = int_to_ptr.hbm [resolvable:$true] %s24
      %s26 = sshll.u32 [#allocation4], 4
      %s27 = int_to_ptr.vmem [resolvable:$true] %s26
      %32 = dma.hbm_to_vmem [thread:$0]  %s25, 8192, %s27, [#allocation5], 256, 256, 16
    $region9: #{lstm_net_forward.1} parent=1 // pred_fallthru
      _
    // Predicated region
    $region10: #{lstm_net_forward.1} parent=1 // pred_check
      _
    $region11: #{lstm_net_forward.1} parent=1 // pred_check_branch
      %34 = sbr.rel (0) target = $region13
    $region12: #{lstm_net_forward.1} parent=1 // pred_region
      %36 = vsyncadd [#allocation7], 0
      %s37 = sshll.u32 %s2, 4
      %s38 = int_to_ptr.hbm [resolvable:$true] %s37
      %s39 = sshll.u32 [#allocation6], 4
      %s40 = int_to_ptr.vmem [resolvable:$true] %s39
      %45 = dma.hbm_to_vmem [thread:$0]  %s38, 8192, %s40, [#allocation7], 256, 256, 16
    $region13: #{lstm_net_forward.1} parent=1 // pred_fallthru
      _
    // Predicated region
    $region14: #{lstm_net_forward.1} parent=1 // pred_check
      _
    $region15: #{lstm_net_forward.1} parent=1 // pred_check_branch
      %47 = sbr.rel (0) target = $region17
    $region16: #{lstm_net_forward.1} parent=1 // pred_region
      _
    $region17: #{lstm_net_forward.1} parent=1 // pred_fallthru
      _
    // Predicated region
    $region18: #{lstm_net_forward.1} parent=1 // pred_check
      _
    $region19: #{lstm_net_forward.1} parent=1 // pred_check_branch
      %49 = sbr.rel (0) target = $region21
    $region20: #{lstm_net_forward.1} parent=1 // pred_region
      _
    $region21: #{lstm_net_forward.1} parent=1 // pred_fallthru
      _
    // Predicated region
    $region22: #{lstm_net_forward.1} parent=1 // pred_check
      _
    $region23: #{lstm_net_forward.1} parent=1 // pred_check_branch
      %51 = sbr.rel (0) target = $region25
    $region24: #{lstm_net_forward.1} parent=1 // pred_region
      _
    $region25: #{lstm_net_forward.1} parent=1 // pred_fallthru
      _
    // Predicated region
    $region26: #{lstm_net_forward.1} parent=1 // pred_check
      _
    $region27: #{lstm_net_forward.1} parent=1 // pred_check_branch
      %53 = sbr.rel (0) target = $region29
    $region28: #{lstm_net_forward.1} parent=1 // pred_region
      _
    $region29: #{lstm_net_forward.1} parent=1 // pred_fallthru
      _
    // Predicated region
    $region30: #{lstm_net_forward.1} parent=1 // pred_check
      _
    $region31: #{lstm_net_forward.1} parent=1 // pred_check_branch
      %55 = sbr.rel (0) target = $region33
    $region32: #{lstm_net_forward.1} parent=1 // pred_region
      _
    $region33: #{lstm_net_forward.1} parent=1 // pred_fallthru
      _
    // Predicated region
    $region34: #{lstm_net_forward.1} parent=1 // pred_check
      _
    $region35: #{lstm_net_forward.1} parent=1 // pred_check_branch
      %57 = sbr.rel (0) target = $region37
    $region36: #{lstm_net_forward.1} parent=1 // pred_region
      %59 = dma.done [#allocation5], 8192
    $region37: #{lstm_net_forward.1} parent=1 // pred_fallthru
      _
    // Predicated region
    $region38: #{lstm_net_forward.1} parent=1 // pred_check
      _
    $region39: #{lstm_net_forward.1} parent=1 // pred_check_branch
      %61 = sbr.rel (0) target = $region41
    $region40: #{lstm_net_forward.1} parent=1 // pred_region
      %63 = dma.done [#allocation7], 8192
    $region41: #{lstm_net_forward.1} parent=1 // pred_fallthru
      _
    %v64 = vld [vmem:[%s0] sm:$0xf]
    %v65 = vld [vmem:[%s0 + $0x4] sm:$0xf]
    %v66 = vld [vmem:[%s0 + $0x8] sm:$0xf]
    %v67 = vld [vmem:[%s0 + $0xc] sm:$0xf]
    %v68 = vld [vmem:[%s0 + $0x10] sm:$0xf]
    %v69 = vld [vmem:[%s0 + $0x14] sm:$0xf]
    %v70 = vld [vmem:[%s0 + $0x18] sm:$0xf]
    %v71 = vld [vmem:[%s0 + $0x1c] sm:$0xf]
    %v72 = vld [vmem:[#allocation4] sm:$0xff]
    %v73 = vld [vmem:[#allocation4 + $0x8] sm:$0xff]
    %v74 = vld [vmem:[#allocation4 + $0x10] sm:$0xff]
    %v75 = vld [vmem:[#allocation4 + $0x18] sm:$0xff]
    %v76 = vld [vmem:[#allocation4 + $0x20] sm:$0xff]
    %v77 = vld [vmem:[#allocation4 + $0x28] sm:$0xff]
    %v78 = vld [vmem:[#allocation4 + $0x30] sm:$0xff]
    %v79 = vld [vmem:[#allocation4 + $0x38] sm:$0xff]
    %v80 = vld [vmem:[#allocation4 + $0x40] sm:$0xff]
    %v81 = vld [vmem:[#allocation4 + $0x48] sm:$0xff]
    %v82 = vld [vmem:[#allocation4 + $0x50] sm:$0xff]
    %v83 = vld [vmem:[#allocation4 + $0x58] sm:$0xff]
    %v84 = vld [vmem:[#allocation4 + $0x60] sm:$0xff]
    %v85 = vld [vmem:[#allocation4 + $0x68] sm:$0xff]
    %v86 = vld [vmem:[#allocation4 + $0x70] sm:$0xff]
    %v87 = vld [vmem:[#allocation4 + $0x78] sm:$0xff]
    %v88 = vld [vmem:[#allocation4 + $0x80] sm:$0xff]
    %v89 = vld [vmem:[#allocation4 + $0x88] sm:$0xff]
    %v90 = vld [vmem:[#allocation4 + $0x90] sm:$0xff]
    %v91 = vld [vmem:[#allocation4 + $0x98] sm:$0xff]
    %v92 = vld [vmem:[#allocation4 + $0xa0] sm:$0xff]
    %v93 = vld [vmem:[#allocation4 + $0xa8] sm:$0xff]
    %v94 = vld [vmem:[#allocation4 + $0xb0] sm:$0xff]
    %v95 = vld [vmem:[#allocation4 + $0xb8] sm:$0xff]
    %v96 = vld [vmem:[#allocation4 + $0xc0] sm:$0xff]
    %v97 = vld [vmem:[#allocation4 + $0xc8] sm:$0xff]
    %v98 = vld [vmem:[#allocation4 + $0xd0] sm:$0xff]
    %v99 = vld [vmem:[#allocation4 + $0xd8] sm:$0xff]
    %v100 = vld [vmem:[#allocation4 + $0xe0] sm:$0xff]
    %v101 = vld [vmem:[#allocation4 + $0xe8] sm:$0xff]
    %v102 = vld [vmem:[#allocation4 + $0xf0] sm:$0xff]
    %v103 = vld [vmem:[#allocation4 + $0xf8] sm:$0xff]
    %v104 = vld [vmem:[%s3] sm:$0xf]
    %v106 = vperm.slane %v104, 0
    %v107 = vperm.slane %v104, 1
    %v108 = vperm.slane %v104, 2
    %v109 = vperm.slane %v104, 3
    %v122 = vunpack.c.l.b16 %v64
    %v123 = vunpack.c.l.b16 %v65
    %v124 = vunpack.c.l.b16 %v66
    %v125 = vunpack.c.l.b16 %v67
    %v126 = vunpack.c.l.b16 %v68
    %v127 = vunpack.c.l.b16 %v69
    %v128 = vunpack.c.l.b16 %v70
    %v129 = vunpack.c.l.b16 %v71
    %v130 = vpack.c.b16 %v123, %v122
    %v131 = vpack.c.b16 %v125, %v124
    %v132 = vpack.c.b16 %v127, %v126
    %v133 = vpack.c.b16 %v129, %v128
    %v170 = vunpack.c.l.b16 %v72
    %v171 = vunpack.c.h.b16 %v72
    %v172 = vunpack.c.l.b16 %v73
    %v173 = vunpack.c.h.b16 %v73
    %v174 = vunpack.c.l.b16 %v74
    %v175 = vunpack.c.h.b16 %v74
    %v176 = vunpack.c.l.b16 %v75
    %v177 = vunpack.c.h.b16 %v75
    %v178 = vunpack.c.l.b16 %v76
    %v179 = vunpack.c.h.b16 %v76
    %v180 = vunpack.c.l.b16 %v77
    %v181 = vunpack.c.h.b16 %v77
    %v182 = vunpack.c.l.b16 %v78
    %v183 = vunpack.c.h.b16 %v78
    %v184 = vunpack.c.l.b16 %v79
    %v185 = vunpack.c.h.b16 %v79
    %v186 = vunpack.c.l.b16 %v80
    %v187 = vunpack.c.h.b16 %v80
    %v188 = vunpack.c.l.b16 %v81
    %v189 = vunpack.c.h.b16 %v81
    %v190 = vunpack.c.l.b16 %v82
    %v191 = vunpack.c.h.b16 %v82
    %v192 = vunpack.c.l.b16 %v83
    %v193 = vunpack.c.h.b16 %v83
    %v194 = vunpack.c.l.b16 %v84
    %v195 = vunpack.c.h.b16 %v84
    %v196 = vunpack.c.l.b16 %v85
    %v197 = vunpack.c.h.b16 %v85
    %v198 = vunpack.c.l.b16 %v86
    %v199 = vunpack.c.h.b16 %v86
    %v200 = vunpack.c.l.b16 %v87
    %v201 = vunpack.c.h.b16 %v87
    %v202 = vunpack.c.l.b16 %v88
    %v203 = vunpack.c.h.b16 %v88
    %v204 = vunpack.c.l.b16 %v89
    %v205 = vunpack.c.h.b16 %v89
    %v206 = vunpack.c.l.b16 %v90
    %v207 = vunpack.c.h.b16 %v90
    %v208 = vunpack.c.l.b16 %v91
    %v209 = vunpack.c.h.b16 %v91
    %v210 = vunpack.c.l.b16 %v92
    %v211 = vunpack.c.h.b16 %v92
    %v212 = vunpack.c.l.b16 %v93
    %v213 = vunpack.c.h.b16 %v93
    %v214 = vunpack.c.l.b16 %v94
    %v215 = vunpack.c.h.b16 %v94
    %v216 = vunpack.c.l.b16 %v95
    %v217 = vunpack.c.h.b16 %v95
    %v218 = vunpack.c.l.b16 %v96
    %v219 = vunpack.c.h.b16 %v96
    %v220 = vunpack.c.l.b16 %v97
    %v221 = vunpack.c.h.b16 %v97
    %v222 = vunpack.c.l.b16 %v98
    %v223 = vunpack.c.h.b16 %v98
    %v224 = vunpack.c.l.b16 %v99
    %v225 = vunpack.c.h.b16 %v99
    %v226 = vunpack.c.l.b16 %v100
    %v227 = vunpack.c.h.b16 %v100
    %v228 = vunpack.c.l.b16 %v101
    %v229 = vunpack.c.h.b16 %v101
    %v230 = vunpack.c.l.b16 %v102
    %v231 = vunpack.c.h.b16 %v102
    %v232 = vunpack.c.l.b16 %v103
    %v233 = vunpack.c.h.b16 %v103
    %v234 = vpack.c.b16 %v174, %v170
    %v235 = vpack.c.b16 %v175, %v171
    %v236 = vpack.c.b16 %v176, %v172
    %v237 = vpack.c.b16 %v177, %v173
    %v238 = vpack.c.b16 %v182, %v178
    %v239 = vpack.c.b16 %v183, %v179
    %v240 = vpack.c.b16 %v184, %v180
    %v241 = vpack.c.b16 %v185, %v181
    %v242 = vpack.c.b16 %v190, %v186
    %v243 = vpack.c.b16 %v191, %v187
    %v244 = vpack.c.b16 %v192, %v188
    %v245 = vpack.c.b16 %v193, %v189
    %v246 = vpack.c.b16 %v198, %v194
    %v247 = vpack.c.b16 %v199, %v195
    %v248 = vpack.c.b16 %v200, %v196
    %v249 = vpack.c.b16 %v201, %v197
    %v250 = vpack.c.b16 %v206, %v202
    %v251 = vpack.c.b16 %v207, %v203
    %v252 = vpack.c.b16 %v208, %v204
    %v253 = vpack.c.b16 %v209, %v205
    %v254 = vpack.c.b16 %v214, %v210
    %v255 = vpack.c.b16 %v215, %v211
    %v256 = vpack.c.b16 %v216, %v212
    %v257 = vpack.c.b16 %v217, %v213
    %v258 = vpack.c.b16 %v222, %v218
    %v259 = vpack.c.b16 %v223, %v219
    %v260 = vpack.c.b16 %v224, %v220
    %v261 = vpack.c.b16 %v225, %v221
    %v262 = vpack.c.b16 %v230, %v226
    %v263 = vpack.c.b16 %v231, %v227
    %v264 = vpack.c.b16 %v232, %v228
    %v265 = vpack.c.b16 %v233, %v229
    %298 = vmatpush.bf16.msra.mxu0 %v262
    %299 = vmatpush.bf16.msra.mxu0 %v258
    %300 = vmatpush.bf16.msra.mxu0 %v254
    %301 = vmatpush.bf16.msra.mxu0 %v250
    %302 = vmatpush.bf16.msra.mxu0 %v246
    %303 = vmatpush.bf16.msra.mxu0 %v242
    %304 = vmatpush.bf16.msra.mxu0 %v238
    %305 = vmatpush.bf16.msra.mxu0 %v234
    %306 = vmatmul.bf16.gmra.mxu0 %v130
    %v307 = vpop.f32.mrf.mxu0
    %v308 = vadd.f32 %v106, %v307
    %v309 = vpop.f32.mrf.mxu0
    %v310 = vadd.f32 %v106, %v309
    %311 = vmatmul.bf16.gmra.mxu0 %v131
    %v312 = vpop.f32.mrf.mxu0
    %v313 = vadd.f32 %v106, %v312
    %v314 = vpop.f32.mrf.mxu0
    %v315 = vadd.f32 %v106, %v314
    %316 = vmatmul.bf16.gmra.mxu0 %v132
    %v317 = vpop.f32.mrf.mxu0
    %v318 = vadd.f32 %v106, %v317
    %v319 = vpop.f32.mrf.mxu0
    %v320 = vadd.f32 %v106, %v319
    %321 = vmatmul.bf16.gmra.mxu0 %v133
    %v322 = vpop.f32.mrf.mxu0
    %v323 = vadd.f32 %v106, %v322
    %v324 = vpop.f32.mrf.mxu0
    %v325 = vadd.f32 %v106, %v324
    %326 = vdwg.mxu0
    %327 = vmatpush.bf16.msra.mxu0 %v263
    %328 = vmatpush.bf16.msra.mxu0 %v259
    %329 = vmatpush.bf16.msra.mxu0 %v255
    %330 = vmatpush.bf16.msra.mxu0 %v251
    %331 = vmatpush.bf16.msra.mxu0 %v247
    %332 = vmatpush.bf16.msra.mxu0 %v243
    %333 = vmatpush.bf16.msra.mxu0 %v239
    %334 = vmatpush.bf16.msra.mxu0 %v235
    %335 = vmatmul.bf16.gmra.mxu0 %v130
    %v336 = vpop.f32.mrf.mxu0
    %v337 = vadd.f32 %v107, %v336
    %v338 = vpop.f32.mrf.mxu0
    %v339 = vadd.f32 %v107, %v338
    %340 = vmatmul.bf16.gmra.mxu0 %v131
    %v341 = vpop.f32.mrf.mxu0
    %v342 = vadd.f32 %v107, %v341
    %v343 = vpop.f32.mrf.mxu0
    %v344 = vadd.f32 %v107, %v343
    %345 = vmatmul.bf16.gmra.mxu0 %v132
    %v346 = vpop.f32.mrf.mxu0
    %v347 = vadd.f32 %v107, %v346
    %v348 = vpop.f32.mrf.mxu0
    %v349 = vadd.f32 %v107, %v348
    %350 = vmatmul.bf16.gmra.mxu0 %v133
    %v351 = vpop.f32.mrf.mxu0
    %v352 = vadd.f32 %v107, %v351
    %v353 = vpop.f32.mrf.mxu0
    %v354 = vadd.f32 %v107, %v353
    %355 = vdwg.mxu0
    %356 = vmatpush.bf16.msra.mxu0 %v264
    %357 = vmatpush.bf16.msra.mxu0 %v260
    %358 = vmatpush.bf16.msra.mxu0 %v256
    %359 = vmatpush.bf16.msra.mxu0 %v252
    %360 = vmatpush.bf16.msra.mxu0 %v248
    %361 = vmatpush.bf16.msra.mxu0 %v244
    %362 = vmatpush.bf16.msra.mxu0 %v240
    %363 = vmatpush.bf16.msra.mxu0 %v236
    %364 = vmatmul.bf16.gmra.mxu0 %v130
    %v365 = vpop.f32.mrf.mxu0
    %v366 = vadd.f32 %v108, %v365
    %v367 = vpop.f32.mrf.mxu0
    %v368 = vadd.f32 %v108, %v367
    %369 = vmatmul.bf16.gmra.mxu0 %v131
    %v370 = vpop.f32.mrf.mxu0
    %v371 = vadd.f32 %v108, %v370
    %v372 = vpop.f32.mrf.mxu0
    %v373 = vadd.f32 %v108, %v372
    %374 = vmatmul.bf16.gmra.mxu0 %v132
    %v375 = vpop.f32.mrf.mxu0
    %v376 = vadd.f32 %v108, %v375
    %v377 = vpop.f32.mrf.mxu0
    %v378 = vadd.f32 %v108, %v377
    %379 = vmatmul.bf16.gmra.mxu0 %v133
    %v380 = vpop.f32.mrf.mxu0
    %v381 = vadd.f32 %v108, %v380
    %v382 = vpop.f32.mrf.mxu0
    %v383 = vadd.f32 %v108, %v382
    %384 = vdwg.mxu0
    %385 = vmatpush.bf16.msra.mxu0 %v265
    %386 = vmatpush.bf16.msra.mxu0 %v261
    %387 = vmatpush.bf16.msra.mxu0 %v257
    %388 = vmatpush.bf16.msra.mxu0 %v253
    %389 = vmatpush.bf16.msra.mxu0 %v249
    %390 = vmatpush.bf16.msra.mxu0 %v245
    %391 = vmatpush.bf16.msra.mxu0 %v241
    %392 = vmatpush.bf16.msra.mxu0 %v237
    %393 = vmatmul.bf16.gmra.mxu0 %v130
    %v394 = vpop.f32.mrf.mxu0
    %v395 = vadd.f32 %v109, %v394
    %v396 = vpop.f32.mrf.mxu0
    %v397 = vadd.f32 %v109, %v396
    %398 = vmatmul.bf16.gmra.mxu0 %v131
    %v399 = vpop.f32.mrf.mxu0
    %v400 = vadd.f32 %v109, %v399
    %v401 = vpop.f32.mrf.mxu0
    %v402 = vadd.f32 %v109, %v401
    %403 = vmatmul.bf16.gmra.mxu0 %v132
    %v404 = vpop.f32.mrf.mxu0
    %v405 = vadd.f32 %v109, %v404
    %v406 = vpop.f32.mrf.mxu0
    %v407 = vadd.f32 %v109, %v406
    %408 = vmatmul.bf16.gmra.mxu0 %v133
    %v409 = vpop.f32.mrf.mxu0
    %v410 = vadd.f32 %v109, %v409
    %v411 = vpop.f32.mrf.mxu0
    %v412 = vadd.f32 %v109, %v411
    %413 = vdwg.mxu0
    %414 = vst [vmem:[#allocation3] sm:$0xff] %v308
    %415 = vst [vmem:[#allocation3 + $0x8] sm:$0xff] %v337
    %416 = vst [vmem:[#allocation3 + $0x10] sm:$0xff] %v366
    %417 = vst [vmem:[#allocation3 + $0x18] sm:$0xff] %v395
    %418 = vst [vmem:[#allocation3 + $0x20] sm:$0xff] %v310
    %419 = vst [vmem:[#allocation3 + $0x28] sm:$0xff] %v339
    %420 = vst [vmem:[#allocation3 + $0x30] sm:$0xff] %v368
    %421 = vst [vmem:[#allocation3 + $0x38] sm:$0xff] %v397
    %422 = vst [vmem:[#allocation3 + $0x40] sm:$0xff] %v313
    %423 = vst [vmem:[#allocation3 + $0x48] sm:$0xff] %v342
    %424 = vst [vmem:[#allocation3 + $0x50] sm:$0xff] %v371
    %425 = vst [vmem:[#allocation3 + $0x58] sm:$0xff] %v400
    %426 = vst [vmem:[#allocation3 + $0x60] sm:$0xff] %v315
    %427 = vst [vmem:[#allocation3 + $0x68] sm:$0xff] %v344
    %428 = vst [vmem:[#allocation3 + $0x70] sm:$0xff] %v373
    %429 = vst [vmem:[#allocation3 + $0x78] sm:$0xff] %v402
    %430 = vst [vmem:[#allocation3 + $0x80] sm:$0xff] %v318
    %431 = vst [vmem:[#allocation3 + $0x88] sm:$0xff] %v347
    %432 = vst [vmem:[#allocation3 + $0x90] sm:$0xff] %v376
    %433 = vst [vmem:[#allocation3 + $0x98] sm:$0xff] %v405
    %434 = vst [vmem:[#allocation3 + $0xa0] sm:$0xff] %v320
    %435 = vst [vmem:[#allocation3 + $0xa8] sm:$0xff] %v349
    %436 = vst [vmem:[#allocation3 + $0xb0] sm:$0xff] %v378
    %437 = vst [vmem:[#allocation3 + $0xb8] sm:$0xff] %v407
    %438 = vst [vmem:[#allocation3 + $0xc0] sm:$0xff] %v323
    %439 = vst [vmem:[#allocation3 + $0xc8] sm:$0xff] %v352
    %440 = vst [vmem:[#allocation3 + $0xd0] sm:$0xff] %v381
    %441 = vst [vmem:[#allocation3 + $0xd8] sm:$0xff] %v410
    %442 = vst [vmem:[#allocation3 + $0xe0] sm:$0xff] %v325
    %443 = vst [vmem:[#allocation3 + $0xe8] sm:$0xff] %v354
    %444 = vst [vmem:[#allocation3 + $0xf0] sm:$0xff] %v383
    %445 = vst [vmem:[#allocation3 + $0xf8] sm:$0xff] %v412
    %v446 = vld [vmem:[#allocation6] sm:$0xff]
    %v447 = vld [vmem:[#allocation6 + $0x8] sm:$0xff]
    %v448 = vld [vmem:[#allocation6 + $0x10] sm:$0xff]
    %v449 = vld [vmem:[#allocation6 + $0x18] sm:$0xff]
    %v450 = vld [vmem:[#allocation6 + $0x20] sm:$0xff]
    %v451 = vld [vmem:[#allocation6 + $0x28] sm:$0xff]
    %v452 = vld [vmem:[#allocation6 + $0x30] sm:$0xff]
    %v453 = vld [vmem:[#allocation6 + $0x38] sm:$0xff]
    %v454 = vld [vmem:[#allocation6 + $0x40] sm:$0xff]
    %v455 = vld [vmem:[#allocation6 + $0x48] sm:$0xff]
    %v456 = vld [vmem:[#allocation6 + $0x50] sm:$0xff]
    %v457 = vld [vmem:[#allocation6 + $0x58] sm:$0xff]
    %v458 = vld [vmem:[#allocation6 + $0x60] sm:$0xff]
    %v459 = vld [vmem:[#allocation6 + $0x68] sm:$0xff]
    %v460 = vld [vmem:[#allocation6 + $0x70] sm:$0xff]
    %v461 = vld [vmem:[#allocation6 + $0x78] sm:$0xff]
    %v462 = vld [vmem:[#allocation6 + $0x80] sm:$0xff]
    %v463 = vld [vmem:[#allocation6 + $0x88] sm:$0xff]
    %v464 = vld [vmem:[#allocation6 + $0x90] sm:$0xff]
    %v465 = vld [vmem:[#allocation6 + $0x98] sm:$0xff]
    %v466 = vld [vmem:[#allocation6 + $0xa0] sm:$0xff]
    %v467 = vld [vmem:[#allocation6 + $0xa8] sm:$0xff]
    %v468 = vld [vmem:[#allocation6 + $0xb0] sm:$0xff]
    %v469 = vld [vmem:[#allocation6 + $0xb8] sm:$0xff]
    %v470 = vld [vmem:[#allocation6 + $0xc0] sm:$0xff]
    %v471 = vld [vmem:[#allocation6 + $0xc8] sm:$0xff]
    %v472 = vld [vmem:[#allocation6 + $0xd0] sm:$0xff]
    %v473 = vld [vmem:[#allocation6 + $0xd8] sm:$0xff]
    %v474 = vld [vmem:[#allocation6 + $0xe0] sm:$0xff]
    %v475 = vld [vmem:[#allocation6 + $0xe8] sm:$0xff]
    %v476 = vld [vmem:[#allocation6 + $0xf0] sm:$0xff]
    %v477 = vld [vmem:[#allocation6 + $0xf8] sm:$0xff]
    %v478 = vld [vmem:[%s4] sm:$0xff]
    %v479 = vld [vmem:[%s5] sm:$0xff]
    %v480 = vld [vmem:[#allocation3] sm:$0xff]
    %v481 = vld [vmem:[#allocation3 + $0x8] sm:$0xff]
    %v482 = vld [vmem:[#allocation3 + $0x10] sm:$0xff]
    %v483 = vld [vmem:[#allocation3 + $0x18] sm:$0xff]
    %v484 = vpack.c.bf16 %v478, %v478
    %v517 = vunpack.c.l.b16 %v446
    %v518 = vunpack.c.h.b16 %v446
    %v519 = vunpack.c.l.b16 %v447
    %v520 = vunpack.c.h.b16 %v447
    %v521 = vunpack.c.l.b16 %v448
    %v522 = vunpack.c.h.b16 %v448
    %v523 = vunpack.c.l.b16 %v449
    %v524 = vunpack.c.h.b16 %v449
    %v525 = vunpack.c.l.b16 %v450
    %v526 = vunpack.c.h.b16 %v450
    %v527 = vunpack.c.l.b16 %v451
    %v528 = vunpack.c.h.b16 %v451
    %v529 = vunpack.c.l.b16 %v452
    %v530 = vunpack.c.h.b16 %v452
    %v531 = vunpack.c.l.b16 %v453
    %v532 = vunpack.c.h.b16 %v453
    %v533 = vunpack.c.l.b16 %v454
    %v534 = vunpack.c.h.b16 %v454
    %v535 = vunpack.c.l.b16 %v455
    %v536 = vunpack.c.h.b16 %v455
    %v537 = vunpack.c.l.b16 %v456
    %v538 = vunpack.c.h.b16 %v456
    %v539 = vunpack.c.l.b16 %v457
    %v540 = vunpack.c.h.b16 %v457
    %v541 = vunpack.c.l.b16 %v458
    %v542 = vunpack.c.h.b16 %v458
    %v543 = vunpack.c.l.b16 %v459
    %v544 = vunpack.c.h.b16 %v459
    %v545 = vunpack.c.l.b16 %v460
    %v546 = vunpack.c.h.b16 %v460
    %v547 = vunpack.c.l.b16 %v461
    %v548 = vunpack.c.h.b16 %v461
    %v549 = vunpack.c.l.b16 %v462
    %v550 = vunpack.c.h.b16 %v462
    %v551 = vunpack.c.l.b16 %v463
    %v552 = vunpack.c.h.b16 %v463
    %v553 = vunpack.c.l.b16 %v464
    %v554 = vunpack.c.h.b16 %v464
    %v555 = vunpack.c.l.b16 %v465
    %v556 = vunpack.c.h.b16 %v465
    %v557 = vunpack.c.l.b16 %v466
    %v558 = vunpack.c.h.b16 %v466
    %v559 = vunpack.c.l.b16 %v467
    %v560 = vunpack.c.h.b16 %v467
    %v561 = vunpack.c.l.b16 %v468
    %v562 = vunpack.c.h.b16 %v468
    %v563 = vunpack.c.l.b16 %v469
    %v564 = vunpack.c.h.b16 %v469
    %v565 = vunpack.c.l.b16 %v470
    %v566 = vunpack.c.h.b16 %v470
    %v567 = vunpack.c.l.b16 %v471
    %v568 = vunpack.c.h.b16 %v471
    %v569 = vunpack.c.l.b16 %v472
    %v570 = vunpack.c.h.b16 %v472
    %v571 = vunpack.c.l.b16 %v473
    %v572 = vunpack.c.h.b16 %v473
    %v573 = vunpack.c.l.b16 %v474
    %v574 = vunpack.c.h.b16 %v474
    %v575 = vunpack.c.l.b16 %v475
    %v576 = vunpack.c.h.b16 %v475
    %v577 = vunpack.c.l.b16 %v476
    %v578 = vunpack.c.h.b16 %v476
    %v579 = vunpack.c.l.b16 %v477
    %v580 = vunpack.c.h.b16 %v477
    %v581 = vpack.c.b16 %v521, %v517
    %v582 = vpack.c.b16 %v522, %v518
    %v583 = vpack.c.b16 %v523, %v519
    %v584 = vpack.c.b16 %v524, %v520
    %v585 = vpack.c.b16 %v529, %v525
    %v586 = vpack.c.b16 %v530, %v526
    %v587 = vpack.c.b16 %v531, %v527
    %v588 = vpack.c.b16 %v532, %v528
    %v589 = vpack.c.b16 %v537, %v533
    %v590 = vpack.c.b16 %v538, %v534
    %v591 = vpack.c.b16 %v539, %v535
    %v592 = vpack.c.b16 %v540, %v536
    %v593 = vpack.c.b16 %v545, %v541
    %v594 = vpack.c.b16 %v546, %v542
    %v595 = vpack.c.b16 %v547, %v543
    %v596 = vpack.c.b16 %v548, %v544
    %v597 = vpack.c.b16 %v553, %v549
    %v598 = vpack.c.b16 %v554, %v550
    %v599 = vpack.c.b16 %v555, %v551
    %v600 = vpack.c.b16 %v556, %v552
    %v601 = vpack.c.b16 %v561, %v557
    %v602 = vpack.c.b16 %v562, %v558
    %v603 = vpack.c.b16 %v563, %v559
    %v604 = vpack.c.b16 %v564, %v560
    %v605 = vpack.c.b16 %v569, %v565
    %v606 = vpack.c.b16 %v570, %v566
    %v607 = vpack.c.b16 %v571, %v567
    %v608 = vpack.c.b16 %v572, %v568
    %v609 = vpack.c.b16 %v577, %v573
    %v610 = vpack.c.b16 %v578, %v574
    %v611 = vpack.c.b16 %v579, %v575
    %v612 = vpack.c.b16 %v580, %v576
    %645 = vmatpush.bf16.msra.mxu0 %v609
    %646 = vmatpush.bf16.msra.mxu0 %v605
    %647 = vmatpush.bf16.msra.mxu0 %v601
    %648 = vmatpush.bf16.msra.mxu0 %v597
    %649 = vmatpush.bf16.msra.mxu0 %v593
    %650 = vmatpush.bf16.msra.mxu0 %v589
    %651 = vmatpush.bf16.msra.mxu0 %v585
    %652 = vmatpush.bf16.msra.mxu0 %v581
    %653 = vmatmul.bf16.gmra.mxu0 %v484
    %v654 = vpop.f32.mrf.mxu0
    %v655 = vadd.f32 0.0, %v654
    %v656 = vpop.f32.mrf.mxu0
    %657 = vdwg.mxu0
    %658 = vmatpush.bf16.msra.mxu0 %v610
    %659 = vmatpush.bf16.msra.mxu0 %v606
    %660 = vmatpush.bf16.msra.mxu0 %v602
    %661 = vmatpush.bf16.msra.mxu0 %v598
    %662 = vmatpush.bf16.msra.mxu0 %v594
    %663 = vmatpush.bf16.msra.mxu0 %v590
    %664 = vmatpush.bf16.msra.mxu0 %v586
    %665 = vmatpush.bf16.msra.mxu0 %v582
    %666 = vmatmul.bf16.gmra.mxu0 %v484
    %v667 = vpop.f32.mrf.mxu0
    %v668 = vadd.f32 0.0, %v667
    %v669 = vpop.f32.mrf.mxu0
    %670 = vdwg.mxu0
    %671 = vmatpush.bf16.msra.mxu0 %v611
    %672 = vmatpush.bf16.msra.mxu0 %v607
    %673 = vmatpush.bf16.msra.mxu0 %v603
    %674 = vmatpush.bf16.msra.mxu0 %v599
    %675 = vmatpush.bf16.msra.mxu0 %v595
    %676 = vmatpush.bf16.msra.mxu0 %v591
    %677 = vmatpush.bf16.msra.mxu0 %v587
    %678 = vmatpush.bf16.msra.mxu0 %v583
    %679 = vmatmul.bf16.gmra.mxu0 %v484
    %v680 = vpop.f32.mrf.mxu0
    %v681 = vadd.f32 0.0, %v680
    %v682 = vpop.f32.mrf.mxu0
    %683 = vdwg.mxu0
    %684 = vmatpush.bf16.msra.mxu0 %v612
    %685 = vmatpush.bf16.msra.mxu0 %v608
    %686 = vmatpush.bf16.msra.mxu0 %v604
    %687 = vmatpush.bf16.msra.mxu0 %v600
    %688 = vmatpush.bf16.msra.mxu0 %v596
    %689 = vmatpush.bf16.msra.mxu0 %v592
    %690 = vmatpush.bf16.msra.mxu0 %v588
    %691 = vmatpush.bf16.msra.mxu0 %v584
    %692 = vmatmul.bf16.gmra.mxu0 %v484
    %v693 = vpop.f32.mrf.mxu0
    %v694 = vadd.f32 0.0, %v693
    %v695 = vpop.f32.mrf.mxu0
    %696 = vdwg.mxu0
    %v697 = vadd.f32 %v480, %v655
    %v698 = vadd.f32 %v481, %v668
    %v699 = vadd.f32 %v482, %v681
    %v700 = vadd.f32 %v483, %v694
    %v701 = vxor.u32 %v697, 2147483648
    %v702 = vmul.f32 %v701, 1.442695
    %v703 = vpow.pop %v702
    %v704 = vadd.f32 %v703, 1.0
    %v705 = vrcp.pop %v704
    %v706 = vmul.f32 %v704, %v705
    %v707 = vsub.f32 1.0, %v706
    %v708 = vmul.f32 %v705, %v707
    %v709 = vadd.f32 %v705, %v708
    %vm710 = vweird.f32 %v704
    %vm711 = vweird.f32 %v705
    %vm712 = vmor %vm710, %vm711
    %v713 = vsel %vm712, %v705, %v709
    %v714 = vand.u32 2147483647, %v704
    %vm715 = vcmp.eq.f32.partialorder %v714, 8.507059e+37
    %v716 = vand.u32 %v704, 2147483648
    %v717 = vor.u32 1.1754944e-38, %v716
    %v718 = vsel %vm715, %v717, %v713
    %v719 = vmul.f32 1.0, %v718
    %v720 = vxor.u32 %v698, 2147483648
    %v721 = vmul.f32 %v720, 1.442695
    %v722 = vpow.pop %v721
    %v723 = vadd.f32 %v722, 1.0
    %v724 = vrcp.pop %v723
    %v725 = vmul.f32 %v723, %v724
    %v726 = vsub.f32 1.0, %v725
    %v727 = vmul.f32 %v724, %v726
    %v728 = vadd.f32 %v724, %v727
    %vm729 = vweird.f32 %v723
    %vm730 = vweird.f32 %v724
    %vm731 = vmor %vm729, %vm730
    %v732 = vsel %vm731, %v724, %v728
    %v733 = vand.u32 2147483647, %v723
    %vm734 = vcmp.eq.f32.partialorder %v733, 8.507059e+37
    %v735 = vand.u32 %v723, 2147483648
    %v736 = vor.u32 1.1754944e-38, %v735
    %v737 = vsel %vm734, %v736, %v732
    %v738 = vmul.f32 1.0, %v737
    %v739 = vtanh.pop %v699
    %v740 = vxor.u32 %v700, 2147483648
    %v741 = vmul.f32 %v740, 1.442695
    %v742 = vpow.pop %v741
    %v743 = vadd.f32 %v742, 1.0
    %v744 = vrcp.pop %v743
    %v745 = vmul.f32 %v743, %v744
    %v746 = vsub.f32 1.0, %v745
    %v747 = vmul.f32 %v744, %v746
    %v748 = vadd.f32 %v744, %v747
    %vm749 = vweird.f32 %v743
    %vm750 = vweird.f32 %v744
    %vm751 = vmor %vm749, %vm750
    %v752 = vsel %vm751, %v744, %v748
    %v753 = vand.u32 2147483647, %v743
    %vm754 = vcmp.eq.f32.partialorder %v753, 8.507059e+37
    %v755 = vand.u32 %v743, 2147483648
    %v756 = vor.u32 1.1754944e-38, %v755
    %v757 = vsel %vm754, %v756, %v752
    %v758 = vmul.f32 1.0, %v757
    %v759 = vmul.f32 %v738, %v479
    %v760 = vmul.f32 %v719, %v739
    %v761 = vadd.f32 %v759, %v760
    %v762 = vtanh.pop %v761
    %v763 = vmul.f32 %v758, %v762
    %764 = vst [vmem:[#allocation2] sm:$0xff] %v763
    %s765 = scalar_lea.vmem [#allocation3], 32
    %v766 = vld [vmem:[%s765] sm:$0xff]
    %v767 = vld [vmem:[%s765 + $0x8] sm:$0xff]
    %v768 = vld [vmem:[%s765 + $0x10] sm:$0xff]
    %v769 = vld [vmem:[%s765 + $0x18] sm:$0xff]
    %v770 = vpack.c.bf16 %v763, %v763
    %771 = vmatpush.bf16.msra.mxu0 %v609
    %772 = vmatpush.bf16.msra.mxu0 %v605
    %773 = vmatpush.bf16.msra.mxu0 %v601
    %774 = vmatpush.bf16.msra.mxu0 %v597
    %775 = vmatpush.bf16.msra.mxu0 %v593
    %776 = vmatpush.bf16.msra.mxu0 %v589
    %777 = vmatpush.bf16.msra.mxu0 %v585
    %778 = vmatpush.bf16.msra.mxu0 %v581
    %779 = vmatmul.bf16.gmra.mxu0 %v770
    %v780 = vpop.f32.mrf.mxu0
    %v781 = vadd.f32 0.0, %v780
    %v782 = vpop.f32.mrf.mxu0
    %783 = vdwg.mxu0
    %784 = vmatpush.bf16.msra.mxu0 %v610
    %785 = vmatpush.bf16.msra.mxu0 %v606
    %786 = vmatpush.bf16.msra.mxu0 %v602
    %787 = vmatpush.bf16.msra.mxu0 %v598
    %788 = vmatpush.bf16.msra.mxu0 %v594
    %789 = vmatpush.bf16.msra.mxu0 %v590
    %790 = vmatpush.bf16.msra.mxu0 %v586
    %791 = vmatpush.bf16.msra.mxu0 %v582
    %792 = vmatmul.bf16.gmra.mxu0 %v770
    %v793 = vpop.f32.mrf.mxu0
    %v794 = vadd.f32 0.0, %v793
    %v795 = vpop.f32.mrf.mxu0
    %796 = vdwg.mxu0
    %797 = vmatpush.bf16.msra.mxu0 %v611
    %798 = vmatpush.bf16.msra.mxu0 %v607
    %799 = vmatpush.bf16.msra.mxu0 %v603
    %800 = vmatpush.bf16.msra.mxu0 %v599
    %801 = vmatpush.bf16.msra.mxu0 %v595
    %802 = vmatpush.bf16.msra.mxu0 %v591
    %803 = vmatpush.bf16.msra.mxu0 %v587
    %804 = vmatpush.bf16.msra.mxu0 %v583
    %805 = vmatmul.bf16.gmra.mxu0 %v770
    %v806 = vpop.f32.mrf.mxu0
    %v807 = vadd.f32 0.0, %v806
    %v808 = vpop.f32.mrf.mxu0
    %809 = vdwg.mxu0
    %810 = vmatpush.bf16.msra.mxu0 %v612
    %811 = vmatpush.bf16.msra.mxu0 %v608
    %812 = vmatpush.bf16.msra.mxu0 %v604
    %813 = vmatpush.bf16.msra.mxu0 %v600
    %814 = vmatpush.bf16.msra.mxu0 %v596
    %815 = vmatpush.bf16.msra.mxu0 %v592
    %816 = vmatpush.bf16.msra.mxu0 %v588
    %817 = vmatpush.bf16.msra.mxu0 %v584
    %818 = vmatmul.bf16.gmra.mxu0 %v770
    %v819 = vpop.f32.mrf.mxu0
    %v820 = vadd.f32 0.0, %v819
    %v821 = vpop.f32.mrf.mxu0
    %822 = vdwg.mxu0
    %v823 = vadd.f32 %v766, %v781
    %v824 = vadd.f32 %v767, %v794
    %v825 = vadd.f32 %v768, %v807
    %v826 = vadd.f32 %v769, %v820
    %v827 = vxor.u32 %v823, 2147483648
    %v828 = vmul.f32 %v827, 1.442695
    %v829 = vpow.pop %v828
    %v830 = vadd.f32 %v829, 1.0
    %v831 = vrcp.pop %v830
    %v832 = vmul.f32 %v830, %v831
    %v833 = vsub.f32 1.0, %v832
    %v834 = vmul.f32 %v831, %v833
    %v835 = vadd.f32 %v831, %v834
    %vm836 = vweird.f32 %v830
    %vm837 = vweird.f32 %v831
    %vm838 = vmor %vm836, %vm837
    %v839 = vsel %vm838, %v831, %v835
    %v840 = vand.u32 2147483647, %v830
    %vm841 = vcmp.eq.f32.partialorder %v840, 8.507059e+37
    %v842 = vand.u32 %v830, 2147483648
    %v843 = vor.u32 1.1754944e-38, %v842
    %v844 = vsel %vm841, %v843, %v839
    %v845 = vmul.f32 1.0, %v844
    %v846 = vxor.u32 %v824, 2147483648
    %v847 = vmul.f32 %v846, 1.442695
    %v848 = vpow.pop %v847
    %v849 = vadd.f32 %v848, 1.0
    %v850 = vrcp.pop %v849
    %v851 = vmul.f32 %v849, %v850
    %v852 = vsub.f32 1.0, %v851
    %v853 = vmul.f32 %v850, %v852
    %v854 = vadd.f32 %v850, %v853
    %vm855 = vweird.f32 %v849
    %vm856 = vweird.f32 %v850
    %vm857 = vmor %vm855, %vm856
    %v858 = vsel %vm857, %v850, %v854
    %v859 = vand.u32 2147483647, %v849
    %vm860 = vcmp.eq.f32.partialorder %v859, 8.507059e+37
    %v861 = vand.u32 %v849, 2147483648
    %v862 = vor.u32 1.1754944e-38, %v861
    %v863 = vsel %vm860, %v862, %v858
    %v864 = vmul.f32 1.0, %v863
    %v865 = vtanh.pop %v825
    %v866 = vxor.u32 %v826, 2147483648
    %v867 = vmul.f32 %v866, 1.442695
    %v868 = vpow.pop %v867
    %v869 = vadd.f32 %v868, 1.0
    %v870 = vrcp.pop %v869
    %v871 = vmul.f32 %v869, %v870
    %v872 = vsub.f32 1.0, %v871
    %v873 = vmul.f32 %v870, %v872
    %v874 = vadd.f32 %v870, %v873
    %vm875 = vweird.f32 %v869
    %vm876 = vweird.f32 %v870
    %vm877 = vmor %vm875, %vm876
    %v878 = vsel %vm877, %v870, %v874
    %v879 = vand.u32 2147483647, %v869
    %vm880 = vcmp.eq.f32.partialorder %v879, 8.507059e+37
    %v881 = vand.u32 %v869, 2147483648
    %v882 = vor.u32 1.1754944e-38, %v881
    %v883 = vsel %vm880, %v882, %v878
    %v884 = vmul.f32 1.0, %v883
    %v885 = vmul.f32 %v864, %v761
    %v886 = vmul.f32 %v845, %v865
    %v887 = vadd.f32 %v885, %v886
    %v888 = vtanh.pop %v887
    %v889 = vmul.f32 %v884, %v888
    %s890 = scalar_lea.vmem [#allocation2], 8
    %891 = vst [vmem:[%s890] sm:$0xff] %v889
    %s892 = scalar_lea.vmem [#allocation3], 64
    %v893 = vld [vmem:[%s892] sm:$0xff]
    %v894 = vld [vmem:[%s892 + $0x8] sm:$0xff]
    %v895 = vld [vmem:[%s892 + $0x10] sm:$0xff]
    %v896 = vld [vmem:[%s892 + $0x18] sm:$0xff]
    %v897 = vpack.c.bf16 %v889, %v889
    %898 = vmatpush.bf16.msra.mxu0 %v609
    %899 = vmatpush.bf16.msra.mxu0 %v605
    %900 = vmatpush.bf16.msra.mxu0 %v601
    %901 = vmatpush.bf16.msra.mxu0 %v597
    %902 = vmatpush.bf16.msra.mxu0 %v593
    %903 = vmatpush.bf16.msra.mxu0 %v589
    %904 = vmatpush.bf16.msra.mxu0 %v585
    %905 = vmatpush.bf16.msra.mxu0 %v581
    %906 = vmatmul.bf16.gmra.mxu0 %v897
    %v907 = vpop.f32.mrf.mxu0
    %v908 = vadd.f32 0.0, %v907
    %v909 = vpop.f32.mrf.mxu0
    %910 = vdwg.mxu0
    %911 = vmatpush.bf16.msra.mxu0 %v610
    %912 = vmatpush.bf16.msra.mxu0 %v606
    %913 = vmatpush.bf16.msra.mxu0 %v602
    %914 = vmatpush.bf16.msra.mxu0 %v598
    %915 = vmatpush.bf16.msra.mxu0 %v594
    %916 = vmatpush.bf16.msra.mxu0 %v590
    %917 = vmatpush.bf16.msra.mxu0 %v586
    %918 = vmatpush.bf16.msra.mxu0 %v582
    %919 = vmatmul.bf16.gmra.mxu0 %v897
    %v920 = vpop.f32.mrf.mxu0
    %v921 = vadd.f32 0.0, %v920
    %v922 = vpop.f32.mrf.mxu0
    %923 = vdwg.mxu0
    %924 = vmatpush.bf16.msra.mxu0 %v611
    %925 = vmatpush.bf16.msra.mxu0 %v607
    %926 = vmatpush.bf16.msra.mxu0 %v603
    %927 = vmatpush.bf16.msra.mxu0 %v599
    %928 = vmatpush.bf16.msra.mxu0 %v595
    %929 = vmatpush.bf16.msra.mxu0 %v591
    %930 = vmatpush.bf16.msra.mxu0 %v587
    %931 = vmatpush.bf16.msra.mxu0 %v583
    %932 = vmatmul.bf16.gmra.mxu0 %v897
    %v933 = vpop.f32.mrf.mxu0
    %v934 = vadd.f32 0.0, %v933
    %v935 = vpop.f32.mrf.mxu0
    %936 = vdwg.mxu0
    %937 = vmatpush.bf16.msra.mxu0 %v612
    %938 = vmatpush.bf16.msra.mxu0 %v608
    %939 = vmatpush.bf16.msra.mxu0 %v604
    %940 = vmatpush.bf16.msra.mxu0 %v600
    %941 = vmatpush.bf16.msra.mxu0 %v596
    %942 = vmatpush.bf16.msra.mxu0 %v592
    %943 = vmatpush.bf16.msra.mxu0 %v588
    %944 = vmatpush.bf16.msra.mxu0 %v584
    %945 = vmatmul.bf16.gmra.mxu0 %v897
    %v946 = vpop.f32.mrf.mxu0
    %v947 = vadd.f32 0.0, %v946
    %v948 = vpop.f32.mrf.mxu0
    %949 = vdwg.mxu0
    %v950 = vadd.f32 %v893, %v908
    %v951 = vadd.f32 %v894, %v921
    %v952 = vadd.f32 %v895, %v934
    %v953 = vadd.f32 %v896, %v947
    %v954 = vxor.u32 %v950, 2147483648
    %v955 = vmul.f32 %v954, 1.442695
    %v956 = vpow.pop %v955
    %v957 = vadd.f32 %v956, 1.0
    %v958 = vrcp.pop %v957
    %v959 = vmul.f32 %v957, %v958
    %v960 = vsub.f32 1.0, %v959
    %v961 = vmul.f32 %v958, %v960
    %v962 = vadd.f32 %v958, %v961
    %vm963 = vweird.f32 %v957
    %vm964 = vweird.f32 %v958
    %vm965 = vmor %vm963, %vm964
    %v966 = vsel %vm965, %v958, %v962
    %v967 = vand.u32 2147483647, %v957
    %vm968 = vcmp.eq.f32.partialorder %v967, 8.507059e+37
    %v969 = vand.u32 %v957, 2147483648
    %v970 = vor.u32 1.1754944e-38, %v969
    %v971 = vsel %vm968, %v970, %v966
    %v972 = vmul.f32 1.0, %v971
    %v973 = vxor.u32 %v951, 2147483648
    %v974 = vmul.f32 %v973, 1.442695
    %v975 = vpow.pop %v974
    %v976 = vadd.f32 %v975, 1.0
    %v977 = vrcp.pop %v976
    %v978 = vmul.f32 %v976, %v977
    %v979 = vsub.f32 1.0, %v978
    %v980 = vmul.f32 %v977, %v979
    %v981 = vadd.f32 %v977, %v980
    %vm982 = vweird.f32 %v976
    %vm983 = vweird.f32 %v977
    %vm984 = vmor %vm982, %vm983
    %v985 = vsel %vm984, %v977, %v981
    %v986 = vand.u32 2147483647, %v976
    %vm987 = vcmp.eq.f32.partialorder %v986, 8.507059e+37
    %v988 = vand.u32 %v976, 2147483648
    %v989 = vor.u32 1.1754944e-38, %v988
    %v990 = vsel %vm987, %v989, %v985
    %v991 = vmul.f32 1.0, %v990
    %v992 = vtanh.pop %v952
    %v993 = vxor.u32 %v953, 2147483648
    %v994 = vmul.f32 %v993, 1.442695
    %v995 = vpow.pop %v994
    %v996 = vadd.f32 %v995, 1.0
    %v997 = vrcp.pop %v996
    %v998 = vmul.f32 %v996, %v997
    %v999 = vsub.f32 1.0, %v998
    %v1000 = vmul.f32 %v997, %v999
    %v1001 = vadd.f32 %v997, %v1000
    %vm1002 = vweird.f32 %v996
    %vm1003 = vweird.f32 %v997
    %vm1004 = vmor %vm1002, %vm1003
    %v1005 = vsel %vm1004, %v997, %v1001
    %v1006 = vand.u32 2147483647, %v996
    %vm1007 = vcmp.eq.f32.partialorder %v1006, 8.507059e+37
    %v1008 = vand.u32 %v996, 2147483648
    %v1009 = vor.u32 1.1754944e-38, %v1008
    %v1010 = vsel %vm1007, %v1009, %v1005
    %v1011 = vmul.f32 1.0, %v1010
    %v1012 = vmul.f32 %v991, %v887
    %v1013 = vmul.f32 %v972, %v992
    %v1014 = vadd.f32 %v1012, %v1013
    %v1015 = vtanh.pop %v1014
    %v1016 = vmul.f32 %v1011, %v1015
    %s1017 = scalar_lea.vmem [#allocation2], 16
    %1018 = vst [vmem:[%s1017] sm:$0xff] %v1016
    %s1019 = scalar_lea.vmem [#allocation3], 96
    %v1020 = vld [vmem:[%s1019] sm:$0xff]
    %v1021 = vld [vmem:[%s1019 + $0x8] sm:$0xff]
    %v1022 = vld [vmem:[%s1019 + $0x10] sm:$0xff]
    %v1023 = vld [vmem:[%s1019 + $0x18] sm:$0xff]
    %v1024 = vpack.c.bf16 %v1016, %v1016
    %1025 = vmatpush.bf16.msra.mxu0 %v609
    %1026 = vmatpush.bf16.msra.mxu0 %v605
    %1027 = vmatpush.bf16.msra.mxu0 %v601
    %1028 = vmatpush.bf16.msra.mxu0 %v597
    %1029 = vmatpush.bf16.msra.mxu0 %v593
    %1030 = vmatpush.bf16.msra.mxu0 %v589
    %1031 = vmatpush.bf16.msra.mxu0 %v585
    %1032 = vmatpush.bf16.msra.mxu0 %v581
    %1033 = vmatmul.bf16.gmra.mxu0 %v1024
    %v1034 = vpop.f32.mrf.mxu0
    %v1035 = vadd.f32 0.0, %v1034
    %v1036 = vpop.f32.mrf.mxu0
    %1037 = vdwg.mxu0
    %1038 = vmatpush.bf16.msra.mxu0 %v610
    %1039 = vmatpush.bf16.msra.mxu0 %v606
    %1040 = vmatpush.bf16.msra.mxu0 %v602
    %1041 = vmatpush.bf16.msra.mxu0 %v598
    %1042 = vmatpush.bf16.msra.mxu0 %v594
    %1043 = vmatpush.bf16.msra.mxu0 %v590
    %1044 = vmatpush.bf16.msra.mxu0 %v586
    %1045 = vmatpush.bf16.msra.mxu0 %v582
    %1046 = vmatmul.bf16.gmra.mxu0 %v1024
    %v1047 = vpop.f32.mrf.mxu0
    %v1048 = vadd.f32 0.0, %v1047
    %v1049 = vpop.f32.mrf.mxu0
    %1050 = vdwg.mxu0
    %1051 = vmatpush.bf16.msra.mxu0 %v611
    %1052 = vmatpush.bf16.msra.mxu0 %v607
    %1053 = vmatpush.bf16.msra.mxu0 %v603
    %1054 = vmatpush.bf16.msra.mxu0 %v599
    %1055 = vmatpush.bf16.msra.mxu0 %v595
    %1056 = vmatpush.bf16.msra.mxu0 %v591
    %1057 = vmatpush.bf16.msra.mxu0 %v587
    %1058 = vmatpush.bf16.msra.mxu0 %v583
    %1059 = vmatmul.bf16.gmra.mxu0 %v1024
    %v1060 = vpop.f32.mrf.mxu0
    %v1061 = vadd.f32 0.0, %v1060
    %v1062 = vpop.f32.mrf.mxu0
    %1063 = vdwg.mxu0
    %1064 = vmatpush.bf16.msra.mxu0 %v612
    %1065 = vmatpush.bf16.msra.mxu0 %v608
    %1066 = vmatpush.bf16.msra.mxu0 %v604
    %1067 = vmatpush.bf16.msra.mxu0 %v600
    %1068 = vmatpush.bf16.msra.mxu0 %v596
    %1069 = vmatpush.bf16.msra.mxu0 %v592
    %1070 = vmatpush.bf16.msra.mxu0 %v588
    %1071 = vmatpush.bf16.msra.mxu0 %v584
    %1072 = vmatmul.bf16.gmra.mxu0 %v1024
    %v1073 = vpop.f32.mrf.mxu0
    %v1074 = vadd.f32 0.0, %v1073
    %v1075 = vpop.f32.mrf.mxu0
    %1076 = vdwg.mxu0
    %v1077 = vadd.f32 %v1020, %v1035
    %v1078 = vadd.f32 %v1021, %v1048
    %v1079 = vadd.f32 %v1022, %v1061
    %v1080 = vadd.f32 %v1023, %v1074
    %v1081 = vxor.u32 %v1077, 2147483648
    %v1082 = vmul.f32 %v1081, 1.442695
    %v1083 = vpow.pop %v1082
    %v1084 = vadd.f32 %v1083, 1.0
    %v1085 = vrcp.pop %v1084
    %v1086 = vmul.f32 %v1084, %v1085
    %v1087 = vsub.f32 1.0, %v1086
    %v1088 = vmul.f32 %v1085, %v1087
    %v1089 = vadd.f32 %v1085, %v1088
    %vm1090 = vweird.f32 %v1084
    %vm1091 = vweird.f32 %v1085
    %vm1092 = vmor %vm1090, %vm1091
    %v1093 = vsel %vm1092, %v1085, %v1089
    %v1094 = vand.u32 2147483647, %v1084
    %vm1095 = vcmp.eq.f32.partialorder %v1094, 8.507059e+37
    %v1096 = vand.u32 %v1084, 2147483648
    %v1097 = vor.u32 1.1754944e-38, %v1096
    %v1098 = vsel %vm1095, %v1097, %v1093
    %v1099 = vmul.f32 1.0, %v1098
    %v1100 = vxor.u32 %v1078, 2147483648
    %v1101 = vmul.f32 %v1100, 1.442695
    %v1102 = vpow.pop %v1101
    %v1103 = vadd.f32 %v1102, 1.0
    %v1104 = vrcp.pop %v1103
    %v1105 = vmul.f32 %v1103, %v1104
    %v1106 = vsub.f32 1.0, %v1105
    %v1107 = vmul.f32 %v1104, %v1106
    %v1108 = vadd.f32 %v1104, %v1107
    %vm1109 = vweird.f32 %v1103
    %vm1110 = vweird.f32 %v1104
    %vm1111 = vmor %vm1109, %vm1110
    %v1112 = vsel %vm1111, %v1104, %v1108
    %v1113 = vand.u32 2147483647, %v1103
    %vm1114 = vcmp.eq.f32.partialorder %v1113, 8.507059e+37
    %v1115 = vand.u32 %v1103, 2147483648
    %v1116 = vor.u32 1.1754944e-38, %v1115
    %v1117 = vsel %vm1114, %v1116, %v1112
    %v1118 = vmul.f32 1.0, %v1117
    %v1119 = vtanh.pop %v1079
    %v1120 = vxor.u32 %v1080, 2147483648
    %v1121 = vmul.f32 %v1120, 1.442695
    %v1122 = vpow.pop %v1121
    %v1123 = vadd.f32 %v1122, 1.0
    %v1124 = vrcp.pop %v1123
    %v1125 = vmul.f32 %v1123, %v1124
    %v1126 = vsub.f32 1.0, %v1125
    %v1127 = vmul.f32 %v1124, %v1126
    %v1128 = vadd.f32 %v1124, %v1127
    %vm1129 = vweird.f32 %v1123
    %vm1130 = vweird.f32 %v1124
    %vm1131 = vmor %vm1129, %vm1130
    %v1132 = vsel %vm1131, %v1124, %v1128
    %v1133 = vand.u32 2147483647, %v1123
    %vm1134 = vcmp.eq.f32.partialorder %v1133, 8.507059e+37
    %v1135 = vand.u32 %v1123, 2147483648
    %v1136 = vor.u32 1.1754944e-38, %v1135
    %v1137 = vsel %vm1134, %v1136, %v1132
    %v1138 = vmul.f32 1.0, %v1137
    %v1139 = vmul.f32 %v1118, %v1014
    %v1140 = vmul.f32 %v1099, %v1119
    %v1141 = vadd.f32 %v1139, %v1140
    %v1142 = vtanh.pop %v1141
    %v1143 = vmul.f32 %v1138, %v1142
    %s1144 = scalar_lea.vmem [#allocation2], 24
    %1145 = vst [vmem:[%s1144] sm:$0xff] %v1143
    %s1146 = scalar_lea.vmem [#allocation3], 128
    %v1147 = vld [vmem:[%s1146] sm:$0xff]
    %v1148 = vld [vmem:[%s1146 + $0x8] sm:$0xff]
    %v1149 = vld [vmem:[%s1146 + $0x10] sm:$0xff]
    %v1150 = vld [vmem:[%s1146 + $0x18] sm:$0xff]
    %v1151 = vpack.c.bf16 %v1143, %v1143
    %1152 = vmatpush.bf16.msra.mxu0 %v609
    %1153 = vmatpush.bf16.msra.mxu0 %v605
    %1154 = vmatpush.bf16.msra.mxu0 %v601
    %1155 = vmatpush.bf16.msra.mxu0 %v597
    %1156 = vmatpush.bf16.msra.mxu0 %v593
    %1157 = vmatpush.bf16.msra.mxu0 %v589
    %1158 = vmatpush.bf16.msra.mxu0 %v585
    %1159 = vmatpush.bf16.msra.mxu0 %v581
    %1160 = vmatmul.bf16.gmra.mxu0 %v1151
    %v1161 = vpop.f32.mrf.mxu0
    %v1162 = vadd.f32 0.0, %v1161
    %v1163 = vpop.f32.mrf.mxu0
    %1164 = vdwg.mxu0
    %1165 = vmatpush.bf16.msra.mxu0 %v610
    %1166 = vmatpush.bf16.msra.mxu0 %v606
    %1167 = vmatpush.bf16.msra.mxu0 %v602
    %1168 = vmatpush.bf16.msra.mxu0 %v598
    %1169 = vmatpush.bf16.msra.mxu0 %v594
    %1170 = vmatpush.bf16.msra.mxu0 %v590
    %1171 = vmatpush.bf16.msra.mxu0 %v586
    %1172 = vmatpush.bf16.msra.mxu0 %v582
    %1173 = vmatmul.bf16.gmra.mxu0 %v1151
    %v1174 = vpop.f32.mrf.mxu0
    %v1175 = vadd.f32 0.0, %v1174
    %v1176 = vpop.f32.mrf.mxu0
    %1177 = vdwg.mxu0
    %1178 = vmatpush.bf16.msra.mxu0 %v611
    %1179 = vmatpush.bf16.msra.mxu0 %v607
    %1180 = vmatpush.bf16.msra.mxu0 %v603
    %1181 = vmatpush.bf16.msra.mxu0 %v599
    %1182 = vmatpush.bf16.msra.mxu0 %v595
    %1183 = vmatpush.bf16.msra.mxu0 %v591
    %1184 = vmatpush.bf16.msra.mxu0 %v587
    %1185 = vmatpush.bf16.msra.mxu0 %v583
    %1186 = vmatmul.bf16.gmra.mxu0 %v1151
    %v1187 = vpop.f32.mrf.mxu0
    %v1188 = vadd.f32 0.0, %v1187
    %v1189 = vpop.f32.mrf.mxu0
    %1190 = vdwg.mxu0
    %1191 = vmatpush.bf16.msra.mxu0 %v612
    %1192 = vmatpush.bf16.msra.mxu0 %v608
    %1193 = vmatpush.bf16.msra.mxu0 %v604
    %1194 = vmatpush.bf16.msra.mxu0 %v600
    %1195 = vmatpush.bf16.msra.mxu0 %v596
    %1196 = vmatpush.bf16.msra.mxu0 %v592
    %1197 = vmatpush.bf16.msra.mxu0 %v588
    %1198 = vmatpush.bf16.msra.mxu0 %v584
    %1199 = vmatmul.bf16.gmra.mxu0 %v1151
    %v1200 = vpop.f32.mrf.mxu0
    %v1201 = vadd.f32 0.0, %v1200
    %v1202 = vpop.f32.mrf.mxu0
    %1203 = vdwg.mxu0
    %v1204 = vadd.f32 %v1147, %v1162
    %v1205 = vadd.f32 %v1148, %v1175
    %v1206 = vadd.f32 %v1149, %v1188
    %v1207 = vadd.f32 %v1150, %v1201
    %v1208 = vxor.u32 %v1204, 2147483648
    %v1209 = vmul.f32 %v1208, 1.442695
    %v1210 = vpow.pop %v1209
    %v1211 = vadd.f32 %v1210, 1.0
    %v1212 = vrcp.pop %v1211
    %v1213 = vmul.f32 %v1211, %v1212
    %v1214 = vsub.f32 1.0, %v1213
    %v1215 = vmul.f32 %v1212, %v1214
    %v1216 = vadd.f32 %v1212, %v1215
    %vm1217 = vweird.f32 %v1211
    %vm1218 = vweird.f32 %v1212
    %vm1219 = vmor %vm1217, %vm1218
    %v1220 = vsel %vm1219, %v1212, %v1216
    %v1221 = vand.u32 2147483647, %v1211
    %vm1222 = vcmp.eq.f32.partialorder %v1221, 8.507059e+37
    %v1223 = vand.u32 %v1211, 2147483648
    %v1224 = vor.u32 1.1754944e-38, %v1223
    %v1225 = vsel %vm1222, %v1224, %v1220
    %v1226 = vmul.f32 1.0, %v1225
    %v1227 = vxor.u32 %v1205, 2147483648
    %v1228 = vmul.f32 %v1227, 1.442695
    %v1229 = vpow.pop %v1228
    %v1230 = vadd.f32 %v1229, 1.0
    %v1231 = vrcp.pop %v1230
    %v1232 = vmul.f32 %v1230, %v1231
    %v1233 = vsub.f32 1.0, %v1232
    %v1234 = vmul.f32 %v1231, %v1233
    %v1235 = vadd.f32 %v1231, %v1234
    %vm1236 = vweird.f32 %v1230
    %vm1237 = vweird.f32 %v1231
    %vm1238 = vmor %vm1236, %vm1237
    %v1239 = vsel %vm1238, %v1231, %v1235
    %v1240 = vand.u32 2147483647, %v1230
    %vm1241 = vcmp.eq.f32.partialorder %v1240, 8.507059e+37
    %v1242 = vand.u32 %v1230, 2147483648
    %v1243 = vor.u32 1.1754944e-38, %v1242
    %v1244 = vsel %vm1241, %v1243, %v1239
    %v1245 = vmul.f32 1.0, %v1244
    %v1246 = vtanh.pop %v1206
    %v1247 = vxor.u32 %v1207, 2147483648
    %v1248 = vmul.f32 %v1247, 1.442695
    %v1249 = vpow.pop %v1248
    %v1250 = vadd.f32 %v1249, 1.0
    %v1251 = vrcp.pop %v1250
    %v1252 = vmul.f32 %v1250, %v1251
    %v1253 = vsub.f32 1.0, %v1252
    %v1254 = vmul.f32 %v1251, %v1253
    %v1255 = vadd.f32 %v1251, %v1254
    %vm1256 = vweird.f32 %v1250
    %vm1257 = vweird.f32 %v1251
    %vm1258 = vmor %vm1256, %vm1257
    %v1259 = vsel %vm1258, %v1251, %v1255
    %v1260 = vand.u32 2147483647, %v1250
    %vm1261 = vcmp.eq.f32.partialorder %v1260, 8.507059e+37
    %v1262 = vand.u32 %v1250, 2147483648
    %v1263 = vor.u32 1.1754944e-38, %v1262
    %v1264 = vsel %vm1261, %v1263, %v1259
    %v1265 = vmul.f32 1.0, %v1264
    %v1266 = vmul.f32 %v1245, %v1141
    %v1267 = vmul.f32 %v1226, %v1246
    %v1268 = vadd.f32 %v1266, %v1267
    %v1269 = vtanh.pop %v1268
    %v1270 = vmul.f32 %v1265, %v1269
    %s1271 = scalar_lea.vmem [#allocation2], 32
    %1272 = vst [vmem:[%s1271] sm:$0xff] %v1270
    %s1273 = scalar_lea.vmem [#allocation3], 160
    %v1274 = vld [vmem:[%s1273] sm:$0xff]
    %v1275 = vld [vmem:[%s1273 + $0x8] sm:$0xff]
    %v1276 = vld [vmem:[%s1273 + $0x10] sm:$0xff]
    %v1277 = vld [vmem:[%s1273 + $0x18] sm:$0xff]
    %v1278 = vpack.c.bf16 %v1270, %v1270
    %1279 = vmatpush.bf16.msra.mxu0 %v609
    %1280 = vmatpush.bf16.msra.mxu0 %v605
    %1281 = vmatpush.bf16.msra.mxu0 %v601
    %1282 = vmatpush.bf16.msra.mxu0 %v597
    %1283 = vmatpush.bf16.msra.mxu0 %v593
    %1284 = vmatpush.bf16.msra.mxu0 %v589
    %1285 = vmatpush.bf16.msra.mxu0 %v585
    %1286 = vmatpush.bf16.msra.mxu0 %v581
    %1287 = vmatmul.bf16.gmra.mxu0 %v1278
    %v1288 = vpop.f32.mrf.mxu0
    %v1289 = vadd.f32 0.0, %v1288
    %v1290 = vpop.f32.mrf.mxu0
    %1291 = vdwg.mxu0
    %1292 = vmatpush.bf16.msra.mxu0 %v610
    %1293 = vmatpush.bf16.msra.mxu0 %v606
    %1294 = vmatpush.bf16.msra.mxu0 %v602
    %1295 = vmatpush.bf16.msra.mxu0 %v598
    %1296 = vmatpush.bf16.msra.mxu0 %v594
    %1297 = vmatpush.bf16.msra.mxu0 %v590
    %1298 = vmatpush.bf16.msra.mxu0 %v586
    %1299 = vmatpush.bf16.msra.mxu0 %v582
    %1300 = vmatmul.bf16.gmra.mxu0 %v1278
    %v1301 = vpop.f32.mrf.mxu0
    %v1302 = vadd.f32 0.0, %v1301
    %v1303 = vpop.f32.mrf.mxu0
    %1304 = vdwg.mxu0
    %1305 = vmatpush.bf16.msra.mxu0 %v611
    %1306 = vmatpush.bf16.msra.mxu0 %v607
    %1307 = vmatpush.bf16.msra.mxu0 %v603
    %1308 = vmatpush.bf16.msra.mxu0 %v599
    %1309 = vmatpush.bf16.msra.mxu0 %v595
    %1310 = vmatpush.bf16.msra.mxu0 %v591
    %1311 = vmatpush.bf16.msra.mxu0 %v587
    %1312 = vmatpush.bf16.msra.mxu0 %v583
    %1313 = vmatmul.bf16.gmra.mxu0 %v1278
    %v1314 = vpop.f32.mrf.mxu0
    %v1315 = vadd.f32 0.0, %v1314
    %v1316 = vpop.f32.mrf.mxu0
    %1317 = vdwg.mxu0
    %1318 = vmatpush.bf16.msra.mxu0 %v612
    %1319 = vmatpush.bf16.msra.mxu0 %v608
    %1320 = vmatpush.bf16.msra.mxu0 %v604
    %1321 = vmatpush.bf16.msra.mxu0 %v600
    %1322 = vmatpush.bf16.msra.mxu0 %v596
    %1323 = vmatpush.bf16.msra.mxu0 %v592
    %1324 = vmatpush.bf16.msra.mxu0 %v588
    %1325 = vmatpush.bf16.msra.mxu0 %v584
    %1326 = vmatmul.bf16.gmra.mxu0 %v1278
    %v1327 = vpop.f32.mrf.mxu0
    %v1328 = vadd.f32 0.0, %v1327
    %v1329 = vpop.f32.mrf.mxu0
    %1330 = vdwg.mxu0
    %v1331 = vadd.f32 %v1274, %v1289
    %v1332 = vadd.f32 %v1275, %v1302
    %v1333 = vadd.f32 %v1276, %v1315
    %v1334 = vadd.f32 %v1277, %v1328
    %v1335 = vxor.u32 %v1331, 2147483648
    %v1336 = vmul.f32 %v1335, 1.442695
    %v1337 = vpow.pop %v1336
    %v1338 = vadd.f32 %v1337, 1.0
    %v1339 = vrcp.pop %v1338
    %v1340 = vmul.f32 %v1338, %v1339
    %v1341 = vsub.f32 1.0, %v1340
    %v1342 = vmul.f32 %v1339, %v1341
    %v1343 = vadd.f32 %v1339, %v1342
    %vm1344 = vweird.f32 %v1338
    %vm1345 = vweird.f32 %v1339
    %vm1346 = vmor %vm1344, %vm1345
    %v1347 = vsel %vm1346, %v1339, %v1343
    %v1348 = vand.u32 2147483647, %v1338
    %vm1349 = vcmp.eq.f32.partialorder %v1348, 8.507059e+37
    %v1350 = vand.u32 %v1338, 2147483648
    %v1351 = vor.u32 1.1754944e-38, %v1350
    %v1352 = vsel %vm1349, %v1351, %v1347
    %v1353 = vmul.f32 1.0, %v1352
    %v1354 = vxor.u32 %v1332, 2147483648
    %v1355 = vmul.f32 %v1354, 1.442695
    %v1356 = vpow.pop %v1355
    %v1357 = vadd.f32 %v1356, 1.0
    %v1358 = vrcp.pop %v1357
    %v1359 = vmul.f32 %v1357, %v1358
    %v1360 = vsub.f32 1.0, %v1359
    %v1361 = vmul.f32 %v1358, %v1360
    %v1362 = vadd.f32 %v1358, %v1361
    %vm1363 = vweird.f32 %v1357
    %vm1364 = vweird.f32 %v1358
    %vm1365 = vmor %vm1363, %vm1364
    %v1366 = vsel %vm1365, %v1358, %v1362
    %v1367 = vand.u32 2147483647, %v1357
    %vm1368 = vcmp.eq.f32.partialorder %v1367, 8.507059e+37
    %v1369 = vand.u32 %v1357, 2147483648
    %v1370 = vor.u32 1.1754944e-38, %v1369
    %v1371 = vsel %vm1368, %v1370, %v1366
    %v1372 = vmul.f32 1.0, %v1371
    %v1373 = vtanh.pop %v1333
    %v1374 = vxor.u32 %v1334, 2147483648
    %v1375 = vmul.f32 %v1374, 1.442695
    %v1376 = vpow.pop %v1375
    %v1377 = vadd.f32 %v1376, 1.0
    %v1378 = vrcp.pop %v1377
    %v1379 = vmul.f32 %v1377, %v1378
    %v1380 = vsub.f32 1.0, %v1379
    %v1381 = vmul.f32 %v1378, %v1380
    %v1382 = vadd.f32 %v1378, %v1381
    %vm1383 = vweird.f32 %v1377
    %vm1384 = vweird.f32 %v1378
    %vm1385 = vmor %vm1383, %vm1384
    %v1386 = vsel %vm1385, %v1378, %v1382
    %v1387 = vand.u32 2147483647, %v1377
    %vm1388 = vcmp.eq.f32.partialorder %v1387, 8.507059e+37
    %v1389 = vand.u32 %v1377, 2147483648
    %v1390 = vor.u32 1.1754944e-38, %v1389
    %v1391 = vsel %vm1388, %v1390, %v1386
    %v1392 = vmul.f32 1.0, %v1391
    %v1393 = vmul.f32 %v1372, %v1268
    %v1394 = vmul.f32 %v1353, %v1373
    %v1395 = vadd.f32 %v1393, %v1394
    %v1396 = vtanh.pop %v1395
    %v1397 = vmul.f32 %v1392, %v1396
    %s1398 = scalar_lea.vmem [#allocation2], 40
    %1399 = vst [vmem:[%s1398] sm:$0xff] %v1397
    %s1400 = scalar_lea.vmem [#allocation3], 192
    %v1401 = vld [vmem:[%s1400] sm:$0xff]
    %v1402 = vld [vmem:[%s1400 + $0x8] sm:$0xff]
    %v1403 = vld [vmem:[%s1400 + $0x10] sm:$0xff]
    %v1404 = vld [vmem:[%s1400 + $0x18] sm:$0xff]
    %v1405 = vpack.c.bf16 %v1397, %v1397
    %1406 = vmatpush.bf16.msra.mxu0 %v609
    %1407 = vmatpush.bf16.msra.mxu0 %v605
    %1408 = vmatpush.bf16.msra.mxu0 %v601
    %1409 = vmatpush.bf16.msra.mxu0 %v597
    %1410 = vmatpush.bf16.msra.mxu0 %v593
    %1411 = vmatpush.bf16.msra.mxu0 %v589
    %1412 = vmatpush.bf16.msra.mxu0 %v585
    %1413 = vmatpush.bf16.msra.mxu0 %v581
    %1414 = vmatmul.bf16.gmra.mxu0 %v1405
    %v1415 = vpop.f32.mrf.mxu0
    %v1416 = vadd.f32 0.0, %v1415
    %v1417 = vpop.f32.mrf.mxu0
    %1418 = vdwg.mxu0
    %1419 = vmatpush.bf16.msra.mxu0 %v610
    %1420 = vmatpush.bf16.msra.mxu0 %v606
    %1421 = vmatpush.bf16.msra.mxu0 %v602
    %1422 = vmatpush.bf16.msra.mxu0 %v598
    %1423 = vmatpush.bf16.msra.mxu0 %v594
    %1424 = vmatpush.bf16.msra.mxu0 %v590
    %1425 = vmatpush.bf16.msra.mxu0 %v586
    %1426 = vmatpush.bf16.msra.mxu0 %v582
    %1427 = vmatmul.bf16.gmra.mxu0 %v1405
    %v1428 = vpop.f32.mrf.mxu0
    %v1429 = vadd.f32 0.0, %v1428
    %v1430 = vpop.f32.mrf.mxu0
    %1431 = vdwg.mxu0
    %1432 = vmatpush.bf16.msra.mxu0 %v611
    %1433 = vmatpush.bf16.msra.mxu0 %v607
    %1434 = vmatpush.bf16.msra.mxu0 %v603
    %1435 = vmatpush.bf16.msra.mxu0 %v599
    %1436 = vmatpush.bf16.msra.mxu0 %v595
    %1437 = vmatpush.bf16.msra.mxu0 %v591
    %1438 = vmatpush.bf16.msra.mxu0 %v587
    %1439 = vmatpush.bf16.msra.mxu0 %v583
    %1440 = vmatmul.bf16.gmra.mxu0 %v1405
    %v1441 = vpop.f32.mrf.mxu0
    %v1442 = vadd.f32 0.0, %v1441
    %v1443 = vpop.f32.mrf.mxu0
    %1444 = vdwg.mxu0
    %1445 = vmatpush.bf16.msra.mxu0 %v612
    %1446 = vmatpush.bf16.msra.mxu0 %v608
    %1447 = vmatpush.bf16.msra.mxu0 %v604
    %1448 = vmatpush.bf16.msra.mxu0 %v600
    %1449 = vmatpush.bf16.msra.mxu0 %v596
    %1450 = vmatpush.bf16.msra.mxu0 %v592
    %1451 = vmatpush.bf16.msra.mxu0 %v588
    %1452 = vmatpush.bf16.msra.mxu0 %v584
    %1453 = vmatmul.bf16.gmra.mxu0 %v1405
    %v1454 = vpop.f32.mrf.mxu0
    %v1455 = vadd.f32 0.0, %v1454
    %v1456 = vpop.f32.mrf.mxu0
    %1457 = vdwg.mxu0
    %v1458 = vadd.f32 %v1401, %v1416
    %v1459 = vadd.f32 %v1402, %v1429
    %v1460 = vadd.f32 %v1403, %v1442
    %v1461 = vadd.f32 %v1404, %v1455
    %v1462 = vxor.u32 %v1458, 2147483648
    %v1463 = vmul.f32 %v1462, 1.442695
    %v1464 = vpow.pop %v1463
    %v1465 = vadd.f32 %v1464, 1.0
    %v1466 = vrcp.pop %v1465
    %v1467 = vmul.f32 %v1465, %v1466
    %v1468 = vsub.f32 1.0, %v1467
    %v1469 = vmul.f32 %v1466, %v1468
    %v1470 = vadd.f32 %v1466, %v1469
    %vm1471 = vweird.f32 %v1465
    %vm1472 = vweird.f32 %v1466
    %vm1473 = vmor %vm1471, %vm1472
    %v1474 = vsel %vm1473, %v1466, %v1470
    %v1475 = vand.u32 2147483647, %v1465
    %vm1476 = vcmp.eq.f32.partialorder %v1475, 8.507059e+37
    %v1477 = vand.u32 %v1465, 2147483648
    %v1478 = vor.u32 1.1754944e-38, %v1477
    %v1479 = vsel %vm1476, %v1478, %v1474
    %v1480 = vmul.f32 1.0, %v1479
    %v1481 = vxor.u32 %v1459, 2147483648
    %v1482 = vmul.f32 %v1481, 1.442695
    %v1483 = vpow.pop %v1482
    %v1484 = vadd.f32 %v1483, 1.0
    %v1485 = vrcp.pop %v1484
    %v1486 = vmul.f32 %v1484, %v1485
    %v1487 = vsub.f32 1.0, %v1486
    %v1488 = vmul.f32 %v1485, %v1487
    %v1489 = vadd.f32 %v1485, %v1488
    %vm1490 = vweird.f32 %v1484
    %vm1491 = vweird.f32 %v1485
    %vm1492 = vmor %vm1490, %vm1491
    %v1493 = vsel %vm1492, %v1485, %v1489
    %v1494 = vand.u32 2147483647, %v1484
    %vm1495 = vcmp.eq.f32.partialorder %v1494, 8.507059e+37
    %v1496 = vand.u32 %v1484, 2147483648
    %v1497 = vor.u32 1.1754944e-38, %v1496
    %v1498 = vsel %vm1495, %v1497, %v1493
    %v1499 = vmul.f32 1.0, %v1498
    %v1500 = vtanh.pop %v1460
    %v1501 = vxor.u32 %v1461, 2147483648
    %v1502 = vmul.f32 %v1501, 1.442695
    %v1503 = vpow.pop %v1502
    %v1504 = vadd.f32 %v1503, 1.0
    %v1505 = vrcp.pop %v1504
    %v1506 = vmul.f32 %v1504, %v1505
    %v1507 = vsub.f32 1.0, %v1506
    %v1508 = vmul.f32 %v1505, %v1507
    %v1509 = vadd.f32 %v1505, %v1508
    %vm1510 = vweird.f32 %v1504
    %vm1511 = vweird.f32 %v1505
    %vm1512 = vmor %vm1510, %vm1511
    %v1513 = vsel %vm1512, %v1505, %v1509
    %v1514 = vand.u32 2147483647, %v1504
    %vm1515 = vcmp.eq.f32.partialorder %v1514, 8.507059e+37
    %v1516 = vand.u32 %v1504, 2147483648
    %v1517 = vor.u32 1.1754944e-38, %v1516
    %v1518 = vsel %vm1515, %v1517, %v1513
    %v1519 = vmul.f32 1.0, %v1518
    %v1520 = vmul.f32 %v1499, %v1395
    %v1521 = vmul.f32 %v1480, %v1500
    %v1522 = vadd.f32 %v1520, %v1521
    %v1523 = vtanh.pop %v1522
    %v1524 = vmul.f32 %v1519, %v1523
    %s1525 = scalar_lea.vmem [#allocation2], 48
    %1526 = vst [vmem:[%s1525] sm:$0xff] %v1524
    %s1527 = scalar_lea.vmem [#allocation3], 224
    %v1528 = vld [vmem:[%s1527] sm:$0xff]
    %v1529 = vld [vmem:[%s1527 + $0x8] sm:$0xff]
    %v1530 = vld [vmem:[%s1527 + $0x10] sm:$0xff]
    %v1531 = vld [vmem:[%s1527 + $0x18] sm:$0xff]
    %v1532 = vpack.c.bf16 %v1524, %v1524
    %1533 = vmatpush.bf16.msra.mxu0 %v609
    %1534 = vmatpush.bf16.msra.mxu0 %v605
    %1535 = vmatpush.bf16.msra.mxu0 %v601
    %1536 = vmatpush.bf16.msra.mxu0 %v597
    %1537 = vmatpush.bf16.msra.mxu0 %v593
    %1538 = vmatpush.bf16.msra.mxu0 %v589
    %1539 = vmatpush.bf16.msra.mxu0 %v585
    %1540 = vmatpush.bf16.msra.mxu0 %v581
    %1541 = vmatmul.bf16.gmra.mxu0 %v1532
    %v1542 = vpop.f32.mrf.mxu0
    %v1543 = vadd.f32 0.0, %v1542
    %v1544 = vpop.f32.mrf.mxu0
    %1545 = vdwg.mxu0
    %1546 = vmatpush.bf16.msra.mxu0 %v610
    %1547 = vmatpush.bf16.msra.mxu0 %v606
    %1548 = vmatpush.bf16.msra.mxu0 %v602
    %1549 = vmatpush.bf16.msra.mxu0 %v598
    %1550 = vmatpush.bf16.msra.mxu0 %v594
    %1551 = vmatpush.bf16.msra.mxu0 %v590
    %1552 = vmatpush.bf16.msra.mxu0 %v586
    %1553 = vmatpush.bf16.msra.mxu0 %v582
    %1554 = vmatmul.bf16.gmra.mxu0 %v1532
    %v1555 = vpop.f32.mrf.mxu0
    %v1556 = vadd.f32 0.0, %v1555
    %v1557 = vpop.f32.mrf.mxu0
    %1558 = vdwg.mxu0
    %1559 = vmatpush.bf16.msra.mxu0 %v611
    %1560 = vmatpush.bf16.msra.mxu0 %v607
    %1561 = vmatpush.bf16.msra.mxu0 %v603
    %1562 = vmatpush.bf16.msra.mxu0 %v599
    %1563 = vmatpush.bf16.msra.mxu0 %v595
    %1564 = vmatpush.bf16.msra.mxu0 %v591
    %1565 = vmatpush.bf16.msra.mxu0 %v587
    %1566 = vmatpush.bf16.msra.mxu0 %v583
    %1567 = vmatmul.bf16.gmra.mxu0 %v1532
    %v1568 = vpop.f32.mrf.mxu0
    %v1569 = vadd.f32 0.0, %v1568
    %v1570 = vpop.f32.mrf.mxu0
    %1571 = vdwg.mxu0
    %1572 = vmatpush.bf16.msra.mxu0 %v612
    %1573 = vmatpush.bf16.msra.mxu0 %v608
    %1574 = vmatpush.bf16.msra.mxu0 %v604
    %1575 = vmatpush.bf16.msra.mxu0 %v600
    %1576 = vmatpush.bf16.msra.mxu0 %v596
    %1577 = vmatpush.bf16.msra.mxu0 %v592
    %1578 = vmatpush.bf16.msra.mxu0 %v588
    %1579 = vmatpush.bf16.msra.mxu0 %v584
    %1580 = vmatmul.bf16.gmra.mxu0 %v1532
    %v1581 = vpop.f32.mrf.mxu0
    %v1582 = vadd.f32 0.0, %v1581
    %v1583 = vpop.f32.mrf.mxu0
    %1584 = vdwg.mxu0
    %v1585 = vadd.f32 %v1528, %v1543
    %v1586 = vadd.f32 %v1529, %v1556
    %v1587 = vadd.f32 %v1530, %v1569
    %v1588 = vadd.f32 %v1531, %v1582
    %v1589 = vxor.u32 %v1585, 2147483648
    %v1590 = vmul.f32 %v1589, 1.442695
    %v1591 = vpow.pop %v1590
    %v1592 = vadd.f32 %v1591, 1.0
    %v1593 = vrcp.pop %v1592
    %v1594 = vmul.f32 %v1592, %v1593
    %v1595 = vsub.f32 1.0, %v1594
    %v1596 = vmul.f32 %v1593, %v1595
    %v1597 = vadd.f32 %v1593, %v1596
    %vm1598 = vweird.f32 %v1592
    %vm1599 = vweird.f32 %v1593
    %vm1600 = vmor %vm1598, %vm1599
    %v1601 = vsel %vm1600, %v1593, %v1597
    %v1602 = vand.u32 2147483647, %v1592
    %vm1603 = vcmp.eq.f32.partialorder %v1602, 8.507059e+37
    %v1604 = vand.u32 %v1592, 2147483648
    %v1605 = vor.u32 1.1754944e-38, %v1604
    %v1606 = vsel %vm1603, %v1605, %v1601
    %v1607 = vmul.f32 1.0, %v1606
    %v1608 = vxor.u32 %v1586, 2147483648
    %v1609 = vmul.f32 %v1608, 1.442695
    %v1610 = vpow.pop %v1609
    %v1611 = vadd.f32 %v1610, 1.0
    %v1612 = vrcp.pop %v1611
    %v1613 = vmul.f32 %v1611, %v1612
    %v1614 = vsub.f32 1.0, %v1613
    %v1615 = vmul.f32 %v1612, %v1614
    %v1616 = vadd.f32 %v1612, %v1615
    %vm1617 = vweird.f32 %v1611
    %vm1618 = vweird.f32 %v1612
    %vm1619 = vmor %vm1617, %vm1618
    %v1620 = vsel %vm1619, %v1612, %v1616
    %v1621 = vand.u32 2147483647, %v1611
    %vm1622 = vcmp.eq.f32.partialorder %v1621, 8.507059e+37
    %v1623 = vand.u32 %v1611, 2147483648
    %v1624 = vor.u32 1.1754944e-38, %v1623
    %v1625 = vsel %vm1622, %v1624, %v1620
    %v1626 = vmul.f32 1.0, %v1625
    %v1627 = vtanh.pop %v1587
    %v1628 = vxor.u32 %v1588, 2147483648
    %v1629 = vmul.f32 %v1628, 1.442695
    %v1630 = vpow.pop %v1629
    %v1631 = vadd.f32 %v1630, 1.0
    %v1632 = vrcp.pop %v1631
    %v1633 = vmul.f32 %v1631, %v1632
    %v1634 = vsub.f32 1.0, %v1633
    %v1635 = vmul.f32 %v1632, %v1634
    %v1636 = vadd.f32 %v1632, %v1635
    %vm1637 = vweird.f32 %v1631
    %vm1638 = vweird.f32 %v1632
    %vm1639 = vmor %vm1637, %vm1638
    %v1640 = vsel %vm1639, %v1632, %v1636
    %v1641 = vand.u32 2147483647, %v1631
    %vm1642 = vcmp.eq.f32.partialorder %v1641, 8.507059e+37
    %v1643 = vand.u32 %v1631, 2147483648
    %v1644 = vor.u32 1.1754944e-38, %v1643
    %v1645 = vsel %vm1642, %v1644, %v1640
    %v1646 = vmul.f32 1.0, %v1645
    %v1647 = vmul.f32 %v1626, %v1522
    %v1648 = vmul.f32 %v1607, %v1627
    %v1649 = vadd.f32 %v1647, %v1648
    %v1650 = vtanh.pop %v1649
    %v1651 = vmul.f32 %v1646, %v1650
    %s1652 = scalar_lea.vmem [#allocation2], 56
    %1653 = vst [vmem:[%s1652] sm:$0xff] %v1651
    %1654 = vst [vmem:[%s9] sm:$0xff] %v1651
    %1655 = vst [vmem:[%s10] sm:$0xff] %v1649
    %v1656 = vld [vmem:[#allocation2] sm:$0xff]
    %v1657 = vld [vmem:[#allocation2 + $0x8] sm:$0xff]
    %v1658 = vld [vmem:[#allocation2 + $0x10] sm:$0xff]
    %v1659 = vld [vmem:[#allocation2 + $0x18] sm:$0xff]
    %v1660 = vld [vmem:[#allocation2 + $0x20] sm:$0xff]
    %v1661 = vld [vmem:[#allocation2 + $0x28] sm:$0xff]
    %v1662 = vld [vmem:[#allocation2 + $0x30] sm:$0xff]
    %v1663 = vld [vmem:[#allocation2 + $0x38] sm:$0xff]
    %v1664 = vpack.c.bf16 %v1657, %v1656
    %v1665 = vpack.c.bf16 %v1659, %v1658
    %v1666 = vpack.c.bf16 %v1661, %v1660
    %v1667 = vpack.c.bf16 %v1663, %v1662
    %s1668 = scalar_lea.vmem [#allocation4], 256
    %v1669 = vld [vmem:[%s1668] sm:$0xff]
    %v1670 = vld [vmem:[%s1668 + $0x8] sm:$0xff]
    %v1671 = vld [vmem:[%s1668 + $0x10] sm:$0xff]
    %v1672 = vld [vmem:[%s1668 + $0x18] sm:$0xff]
    %v1673 = vld [vmem:[%s1668 + $0x20] sm:$0xff]
    %v1674 = vld [vmem:[%s1668 + $0x28] sm:$0xff]
    %v1675 = vld [vmem:[%s1668 + $0x30] sm:$0xff]
    %v1676 = vld [vmem:[%s1668 + $0x38] sm:$0xff]
    %v1677 = vld [vmem:[%s1668 + $0x40] sm:$0xff]
    %v1678 = vld [vmem:[%s1668 + $0x48] sm:$0xff]
    %v1679 = vld [vmem:[%s1668 + $0x50] sm:$0xff]
    %v1680 = vld [vmem:[%s1668 + $0x58] sm:$0xff]
    %v1681 = vld [vmem:[%s1668 + $0x60] sm:$0xff]
    %v1682 = vld [vmem:[%s1668 + $0x68] sm:$0xff]
    %v1683 = vld [vmem:[%s1668 + $0x70] sm:$0xff]
    %v1684 = vld [vmem:[%s1668 + $0x78] sm:$0xff]
    %v1685 = vld [vmem:[%s1668 + $0x80] sm:$0xff]
    %v1686 = vld [vmem:[%s1668 + $0x88] sm:$0xff]
    %v1687 = vld [vmem:[%s1668 + $0x90] sm:$0xff]
    %v1688 = vld [vmem:[%s1668 + $0x98] sm:$0xff]
    %v1689 = vld [vmem:[%s1668 + $0xa0] sm:$0xff]
    %v1690 = vld [vmem:[%s1668 + $0xa8] sm:$0xff]
    %v1691 = vld [vmem:[%s1668 + $0xb0] sm:$0xff]
    %v1692 = vld [vmem:[%s1668 + $0xb8] sm:$0xff]
    %v1693 = vld [vmem:[%s1668 + $0xc0] sm:$0xff]
    %v1694 = vld [vmem:[%s1668 + $0xc8] sm:$0xff]
    %v1695 = vld [vmem:[%s1668 + $0xd0] sm:$0xff]
    %v1696 = vld [vmem:[%s1668 + $0xd8] sm:$0xff]
    %v1697 = vld [vmem:[%s1668 + $0xe0] sm:$0xff]
    %v1698 = vld [vmem:[%s1668 + $0xe8] sm:$0xff]
    %v1699 = vld [vmem:[%s1668 + $0xf0] sm:$0xff]
    %v1700 = vld [vmem:[%s1668 + $0xf8] sm:$0xff]
    %s1701 = scalar_lea.vmem %s3, 4
    %v1702 = vld [vmem:[%s1701] sm:$0xf]
    %v1704 = vperm.slane %v1702, 0
    %v1705 = vperm.slane %v1702, 1
    %v1706 = vperm.slane %v1702, 2
    %v1707 = vperm.slane %v1702, 3
    %v1744 = vunpack.c.l.b16 %v1669
    %v1745 = vunpack.c.h.b16 %v1669
    %v1746 = vunpack.c.l.b16 %v1670
    %v1747 = vunpack.c.h.b16 %v1670
    %v1748 = vunpack.c.l.b16 %v1671
    %v1749 = vunpack.c.h.b16 %v1671
    %v1750 = vunpack.c.l.b16 %v1672
    %v1751 = vunpack.c.h.b16 %v1672
    %v1752 = vunpack.c.l.b16 %v1673
    %v1753 = vunpack.c.h.b16 %v1673
    %v1754 = vunpack.c.l.b16 %v1674
    %v1755 = vunpack.c.h.b16 %v1674
    %v1756 = vunpack.c.l.b16 %v1675
    %v1757 = vunpack.c.h.b16 %v1675
    %v1758 = vunpack.c.l.b16 %v1676
    %v1759 = vunpack.c.h.b16 %v1676
    %v1760 = vunpack.c.l.b16 %v1677
    %v1761 = vunpack.c.h.b16 %v1677
    %v1762 = vunpack.c.l.b16 %v1678
    %v1763 = vunpack.c.h.b16 %v1678
    %v1764 = vunpack.c.l.b16 %v1679
    %v1765 = vunpack.c.h.b16 %v1679
    %v1766 = vunpack.c.l.b16 %v1680
    %v1767 = vunpack.c.h.b16 %v1680
    %v1768 = vunpack.c.l.b16 %v1681
    %v1769 = vunpack.c.h.b16 %v1681
    %v1770 = vunpack.c.l.b16 %v1682
    %v1771 = vunpack.c.h.b16 %v1682
    %v1772 = vunpack.c.l.b16 %v1683
    %v1773 = vunpack.c.h.b16 %v1683
    %v1774 = vunpack.c.l.b16 %v1684
    %v1775 = vunpack.c.h.b16 %v1684
    %v1776 = vunpack.c.l.b16 %v1685
    %v1777 = vunpack.c.h.b16 %v1685
    %v1778 = vunpack.c.l.b16 %v1686
    %v1779 = vunpack.c.h.b16 %v1686
    %v1780 = vunpack.c.l.b16 %v1687
    %v1781 = vunpack.c.h.b16 %v1687
    %v1782 = vunpack.c.l.b16 %v1688
    %v1783 = vunpack.c.h.b16 %v1688
    %v1784 = vunpack.c.l.b16 %v1689
    %v1785 = vunpack.c.h.b16 %v1689
    %v1786 = vunpack.c.l.b16 %v1690
    %v1787 = vunpack.c.h.b16 %v1690
    %v1788 = vunpack.c.l.b16 %v1691
    %v1789 = vunpack.c.h.b16 %v1691
    %v1790 = vunpack.c.l.b16 %v1692
    %v1791 = vunpack.c.h.b16 %v1692
    %v1792 = vunpack.c.l.b16 %v1693
    %v1793 = vunpack.c.h.b16 %v1693
    %v1794 = vunpack.c.l.b16 %v1694
    %v1795 = vunpack.c.h.b16 %v1694
    %v1796 = vunpack.c.l.b16 %v1695
    %v1797 = vunpack.c.h.b16 %v1695
    %v1798 = vunpack.c.l.b16 %v1696
    %v1799 = vunpack.c.h.b16 %v1696
    %v1800 = vunpack.c.l.b16 %v1697
    %v1801 = vunpack.c.h.b16 %v1697
    %v1802 = vunpack.c.l.b16 %v1698
    %v1803 = vunpack.c.h.b16 %v1698
    %v1804 = vunpack.c.l.b16 %v1699
    %v1805 = vunpack.c.h.b16 %v1699
    %v1806 = vunpack.c.l.b16 %v1700
    %v1807 = vunpack.c.h.b16 %v1700
    %v1808 = vpack.c.b16 %v1748, %v1744
    %v1809 = vpack.c.b16 %v1749, %v1745
    %v1810 = vpack.c.b16 %v1750, %v1746
    %v1811 = vpack.c.b16 %v1751, %v1747
    %v1812 = vpack.c.b16 %v1756, %v1752
    %v1813 = vpack.c.b16 %v1757, %v1753
    %v1814 = vpack.c.b16 %v1758, %v1754
    %v1815 = vpack.c.b16 %v1759, %v1755
    %v1816 = vpack.c.b16 %v1764, %v1760
    %v1817 = vpack.c.b16 %v1765, %v1761
    %v1818 = vpack.c.b16 %v1766, %v1762
    %v1819 = vpack.c.b16 %v1767, %v1763
    %v1820 = vpack.c.b16 %v1772, %v1768
    %v1821 = vpack.c.b16 %v1773, %v1769
    %v1822 = vpack.c.b16 %v1774, %v1770
    %v1823 = vpack.c.b16 %v1775, %v1771
    %v1824 = vpack.c.b16 %v1780, %v1776
    %v1825 = vpack.c.b16 %v1781, %v1777
    %v1826 = vpack.c.b16 %v1782, %v1778
    %v1827 = vpack.c.b16 %v1783, %v1779
    %v1828 = vpack.c.b16 %v1788, %v1784
    %v1829 = vpack.c.b16 %v1789, %v1785
    %v1830 = vpack.c.b16 %v1790, %v1786
    %v1831 = vpack.c.b16 %v1791, %v1787
    %v1832 = vpack.c.b16 %v1796, %v1792
    %v1833 = vpack.c.b16 %v1797, %v1793
    %v1834 = vpack.c.b16 %v1798, %v1794
    %v1835 = vpack.c.b16 %v1799, %v1795
    %v1836 = vpack.c.b16 %v1804, %v1800
    %v1837 = vpack.c.b16 %v1805, %v1801
    %v1838 = vpack.c.b16 %v1806, %v1802
    %v1839 = vpack.c.b16 %v1807, %v1803
    %1872 = vmatpush.bf16.msra.mxu0 %v1836
    %1873 = vmatpush.bf16.msra.mxu0 %v1832
    %1874 = vmatpush.bf16.msra.mxu0 %v1828
    %1875 = vmatpush.bf16.msra.mxu0 %v1824
    %1876 = vmatpush.bf16.msra.mxu0 %v1820
    %1877 = vmatpush.bf16.msra.mxu0 %v1816
    %1878 = vmatpush.bf16.msra.mxu0 %v1812
    %1879 = vmatpush.bf16.msra.mxu0 %v1808
    %1880 = vmatmul.bf16.gmra.mxu0 %v1664
    %v1881 = vpop.f32.mrf.mxu0
    %v1882 = vadd.f32 %v1704, %v1881
    %v1883 = vpop.f32.mrf.mxu0
    %v1884 = vadd.f32 %v1704, %v1883
    %1885 = vmatmul.bf16.gmra.mxu0 %v1665
    %v1886 = vpop.f32.mrf.mxu0
    %v1887 = vadd.f32 %v1704, %v1886
    %v1888 = vpop.f32.mrf.mxu0
    %v1889 = vadd.f32 %v1704, %v1888
    %1890 = vmatmul.bf16.gmra.mxu0 %v1666
    %v1891 = vpop.f32.mrf.mxu0
    %v1892 = vadd.f32 %v1704, %v1891
    %v1893 = vpop.f32.mrf.mxu0
    %v1894 = vadd.f32 %v1704, %v1893
    %1895 = vmatmul.bf16.gmra.mxu0 %v1667
    %v1896 = vpop.f32.mrf.mxu0
    %v1897 = vadd.f32 %v1704, %v1896
    %v1898 = vpop.f32.mrf.mxu0
    %v1899 = vadd.f32 %v1704, %v1898
    %1900 = vdwg.mxu0
    %1901 = vmatpush.bf16.msra.mxu0 %v1837
    %1902 = vmatpush.bf16.msra.mxu0 %v1833
    %1903 = vmatpush.bf16.msra.mxu0 %v1829
    %1904 = vmatpush.bf16.msra.mxu0 %v1825
    %1905 = vmatpush.bf16.msra.mxu0 %v1821
    %1906 = vmatpush.bf16.msra.mxu0 %v1817
    %1907 = vmatpush.bf16.msra.mxu0 %v1813
    %1908 = vmatpush.bf16.msra.mxu0 %v1809
    %1909 = vmatmul.bf16.gmra.mxu0 %v1664
    %v1910 = vpop.f32.mrf.mxu0
    %v1911 = vadd.f32 %v1705, %v1910
    %v1912 = vpop.f32.mrf.mxu0
    %v1913 = vadd.f32 %v1705, %v1912
    %1914 = vmatmul.bf16.gmra.mxu0 %v1665
    %v1915 = vpop.f32.mrf.mxu0
    %v1916 = vadd.f32 %v1705, %v1915
    %v1917 = vpop.f32.mrf.mxu0
    %v1918 = vadd.f32 %v1705, %v1917
    %1919 = vmatmul.bf16.gmra.mxu0 %v1666
    %v1920 = vpop.f32.mrf.mxu0
    %v1921 = vadd.f32 %v1705, %v1920
    %v1922 = vpop.f32.mrf.mxu0
    %v1923 = vadd.f32 %v1705, %v1922
    %1924 = vmatmul.bf16.gmra.mxu0 %v1667
    %v1925 = vpop.f32.mrf.mxu0
    %v1926 = vadd.f32 %v1705, %v1925
    %v1927 = vpop.f32.mrf.mxu0
    %v1928 = vadd.f32 %v1705, %v1927
    %1929 = vdwg.mxu0
    %1930 = vmatpush.bf16.msra.mxu0 %v1838
    %1931 = vmatpush.bf16.msra.mxu0 %v1834
    %1932 = vmatpush.bf16.msra.mxu0 %v1830
    %1933 = vmatpush.bf16.msra.mxu0 %v1826
    %1934 = vmatpush.bf16.msra.mxu0 %v1822
    %1935 = vmatpush.bf16.msra.mxu0 %v1818
    %1936 = vmatpush.bf16.msra.mxu0 %v1814
    %1937 = vmatpush.bf16.msra.mxu0 %v1810
    %1938 = vmatmul.bf16.gmra.mxu0 %v1664
    %v1939 = vpop.f32.mrf.mxu0
    %v1940 = vadd.f32 %v1706, %v1939
    %v1941 = vpop.f32.mrf.mxu0
    %v1942 = vadd.f32 %v1706, %v1941
    %1943 = vmatmul.bf16.gmra.mxu0 %v1665
    %v1944 = vpop.f32.mrf.mxu0
    %v1945 = vadd.f32 %v1706, %v1944
    %v1946 = vpop.f32.mrf.mxu0
    %v1947 = vadd.f32 %v1706, %v1946
    %1948 = vmatmul.bf16.gmra.mxu0 %v1666
    %v1949 = vpop.f32.mrf.mxu0
    %v1950 = vadd.f32 %v1706, %v1949
    %v1951 = vpop.f32.mrf.mxu0
    %v1952 = vadd.f32 %v1706, %v1951
    %1953 = vmatmul.bf16.gmra.mxu0 %v1667
    %v1954 = vpop.f32.mrf.mxu0
    %v1955 = vadd.f32 %v1706, %v1954
    %v1956 = vpop.f32.mrf.mxu0
    %v1957 = vadd.f32 %v1706, %v1956
    %1958 = vdwg.mxu0
    %1959 = vmatpush.bf16.msra.mxu0 %v1839
    %1960 = vmatpush.bf16.msra.mxu0 %v1835
    %1961 = vmatpush.bf16.msra.mxu0 %v1831
    %1962 = vmatpush.bf16.msra.mxu0 %v1827
    %1963 = vmatpush.bf16.msra.mxu0 %v1823
    %1964 = vmatpush.bf16.msra.mxu0 %v1819
    %1965 = vmatpush.bf16.msra.mxu0 %v1815
    %1966 = vmatpush.bf16.msra.mxu0 %v1811
    %1967 = vmatmul.bf16.gmra.mxu0 %v1664
    %v1968 = vpop.f32.mrf.mxu0
    %v1969 = vadd.f32 %v1707, %v1968
    %v1970 = vpop.f32.mrf.mxu0
    %v1971 = vadd.f32 %v1707, %v1970
    %1972 = vmatmul.bf16.gmra.mxu0 %v1665
    %v1973 = vpop.f32.mrf.mxu0
    %v1974 = vadd.f32 %v1707, %v1973
    %v1975 = vpop.f32.mrf.mxu0
    %v1976 = vadd.f32 %v1707, %v1975
    %1977 = vmatmul.bf16.gmra.mxu0 %v1666
    %v1978 = vpop.f32.mrf.mxu0
    %v1979 = vadd.f32 %v1707, %v1978
    %v1980 = vpop.f32.mrf.mxu0
    %v1981 = vadd.f32 %v1707, %v1980
    %1982 = vmatmul.bf16.gmra.mxu0 %v1667
    %v1983 = vpop.f32.mrf.mxu0
    %v1984 = vadd.f32 %v1707, %v1983
    %v1985 = vpop.f32.mrf.mxu0
    %v1986 = vadd.f32 %v1707, %v1985
    %1987 = vdwg.mxu0
    %1988 = vst [vmem:[#allocation3] sm:$0xff] %v1882
    %1989 = vst [vmem:[#allocation3 + $0x8] sm:$0xff] %v1911
    %1990 = vst [vmem:[#allocation3 + $0x10] sm:$0xff] %v1940
    %1991 = vst [vmem:[#allocation3 + $0x18] sm:$0xff] %v1969
    %1992 = vst [vmem:[#allocation3 + $0x20] sm:$0xff] %v1884
    %1993 = vst [vmem:[#allocation3 + $0x28] sm:$0xff] %v1913
    %1994 = vst [vmem:[#allocation3 + $0x30] sm:$0xff] %v1942
    %1995 = vst [vmem:[#allocation3 + $0x38] sm:$0xff] %v1971
    %1996 = vst [vmem:[#allocation3 + $0x40] sm:$0xff] %v1887
    %1997 = vst [vmem:[#allocation3 + $0x48] sm:$0xff] %v1916
    %1998 = vst [vmem:[#allocation3 + $0x50] sm:$0xff] %v1945
    %1999 = vst [vmem:[#allocation3 + $0x58] sm:$0xff] %v1974
    %2000 = vst [vmem:[#allocation3 + $0x60] sm:$0xff] %v1889
    %2001 = vst [vmem:[#allocation3 + $0x68] sm:$0xff] %v1918
    %2002 = vst [vmem:[#allocation3 + $0x70] sm:$0xff] %v1947
    %2003 = vst [vmem:[#allocation3 + $0x78] sm:$0xff] %v1976
    %2004 = vst [vmem:[#allocation3 + $0x80] sm:$0xff] %v1892
    %2005 = vst [vmem:[#allocation3 + $0x88] sm:$0xff] %v1921
    %2006 = vst [vmem:[#allocation3 + $0x90] sm:$0xff] %v1950
    %2007 = vst [vmem:[#allocation3 + $0x98] sm:$0xff] %v1979
    %2008 = vst [vmem:[#allocation3 + $0xa0] sm:$0xff] %v1894
    %2009 = vst [vmem:[#allocation3 + $0xa8] sm:$0xff] %v1923
    %2010 = vst [vmem:[#allocation3 + $0xb0] sm:$0xff] %v1952
    %2011 = vst [vmem:[#allocation3 + $0xb8] sm:$0xff] %v1981
    %2012 = vst [vmem:[#allocation3 + $0xc0] sm:$0xff] %v1897
    %2013 = vst [vmem:[#allocation3 + $0xc8] sm:$0xff] %v1926
    %2014 = vst [vmem:[#allocation3 + $0xd0] sm:$0xff] %v1955
    %2015 = vst [vmem:[#allocation3 + $0xd8] sm:$0xff] %v1984
    %2016 = vst [vmem:[#allocation3 + $0xe0] sm:$0xff] %v1899
    %2017 = vst [vmem:[#allocation3 + $0xe8] sm:$0xff] %v1928
    %2018 = vst [vmem:[#allocation3 + $0xf0] sm:$0xff] %v1957
    %2019 = vst [vmem:[#allocation3 + $0xf8] sm:$0xff] %v1986
    %s2020 = scalar_lea.vmem [#allocation6], 256
    %v2021 = vld [vmem:[%s2020] sm:$0xff]
    %v2022 = vld [vmem:[%s2020 + $0x8] sm:$0xff]
    %v2023 = vld [vmem:[%s2020 + $0x10] sm:$0xff]
    %v2024 = vld [vmem:[%s2020 + $0x18] sm:$0xff]
    %v2025 = vld [vmem:[%s2020 + $0x20] sm:$0xff]
    %v2026 = vld [vmem:[%s2020 + $0x28] sm:$0xff]
    %v2027 = vld [vmem:[%s2020 + $0x30] sm:$0xff]
    %v2028 = vld [vmem:[%s2020 + $0x38] sm:$0xff]
    %v2029 = vld [vmem:[%s2020 + $0x40] sm:$0xff]
    %v2030 = vld [vmem:[%s2020 + $0x48] sm:$0xff]
    %v2031 = vld [vmem:[%s2020 + $0x50] sm:$0xff]
    %v2032 = vld [vmem:[%s2020 + $0x58] sm:$0xff]
    %v2033 = vld [vmem:[%s2020 + $0x60] sm:$0xff]
    %v2034 = vld [vmem:[%s2020 + $0x68] sm:$0xff]
    %v2035 = vld [vmem:[%s2020 + $0x70] sm:$0xff]
    %v2036 = vld [vmem:[%s2020 + $0x78] sm:$0xff]
    %v2037 = vld [vmem:[%s2020 + $0x80] sm:$0xff]
    %v2038 = vld [vmem:[%s2020 + $0x88] sm:$0xff]
    %v2039 = vld [vmem:[%s2020 + $0x90] sm:$0xff]
    %v2040 = vld [vmem:[%s2020 + $0x98] sm:$0xff]
    %v2041 = vld [vmem:[%s2020 + $0xa0] sm:$0xff]
    %v2042 = vld [vmem:[%s2020 + $0xa8] sm:$0xff]
    %v2043 = vld [vmem:[%s2020 + $0xb0] sm:$0xff]
    %v2044 = vld [vmem:[%s2020 + $0xb8] sm:$0xff]
    %v2045 = vld [vmem:[%s2020 + $0xc0] sm:$0xff]
    %v2046 = vld [vmem:[%s2020 + $0xc8] sm:$0xff]
    %v2047 = vld [vmem:[%s2020 + $0xd0] sm:$0xff]
    %v2048 = vld [vmem:[%s2020 + $0xd8] sm:$0xff]
    %v2049 = vld [vmem:[%s2020 + $0xe0] sm:$0xff]
    %v2050 = vld [vmem:[%s2020 + $0xe8] sm:$0xff]
    %v2051 = vld [vmem:[%s2020 + $0xf0] sm:$0xff]
    %v2052 = vld [vmem:[%s2020 + $0xf8] sm:$0xff]
    %s2053 = scalar_lea.vmem %s4, 8
    %v2054 = vld [vmem:[%s2053] sm:$0xff]
    %s2055 = scalar_lea.vmem %s5, 8
    %v2056 = vld [vmem:[%s2055] sm:$0xff]
    %v2057 = vld [vmem:[#allocation3] sm:$0xff]
    %v2058 = vld [vmem:[#allocation3 + $0x8] sm:$0xff]
    %v2059 = vld [vmem:[#allocation3 + $0x10] sm:$0xff]
    %v2060 = vld [vmem:[#allocation3 + $0x18] sm:$0xff]
    %v2061 = vpack.c.bf16 %v2054, %v2054
    %v2094 = vunpack.c.l.b16 %v2021
    %v2095 = vunpack.c.h.b16 %v2021
    %v2096 = vunpack.c.l.b16 %v2022
    %v2097 = vunpack.c.h.b16 %v2022
    %v2098 = vunpack.c.l.b16 %v2023
    %v2099 = vunpack.c.h.b16 %v2023
    %v2100 = vunpack.c.l.b16 %v2024
    %v2101 = vunpack.c.h.b16 %v2024
    %v2102 = vunpack.c.l.b16 %v2025
    %v2103 = vunpack.c.h.b16 %v2025
    %v2104 = vunpack.c.l.b16 %v2026
    %v2105 = vunpack.c.h.b16 %v2026
    %v2106 = vunpack.c.l.b16 %v2027
    %v2107 = vunpack.c.h.b16 %v2027
    %v2108 = vunpack.c.l.b16 %v2028
    %v2109 = vunpack.c.h.b16 %v2028
    %v2110 = vunpack.c.l.b16 %v2029
    %v2111 = vunpack.c.h.b16 %v2029
    %v2112 = vunpack.c.l.b16 %v2030
    %v2113 = vunpack.c.h.b16 %v2030
    %v2114 = vunpack.c.l.b16 %v2031
    %v2115 = vunpack.c.h.b16 %v2031
    %v2116 = vunpack.c.l.b16 %v2032
    %v2117 = vunpack.c.h.b16 %v2032
    %v2118 = vunpack.c.l.b16 %v2033
    %v2119 = vunpack.c.h.b16 %v2033
    %v2120 = vunpack.c.l.b16 %v2034
    %v2121 = vunpack.c.h.b16 %v2034
    %v2122 = vunpack.c.l.b16 %v2035
    %v2123 = vunpack.c.h.b16 %v2035
    %v2124 = vunpack.c.l.b16 %v2036
    %v2125 = vunpack.c.h.b16 %v2036
    %v2126 = vunpack.c.l.b16 %v2037
    %v2127 = vunpack.c.h.b16 %v2037
    %v2128 = vunpack.c.l.b16 %v2038
    %v2129 = vunpack.c.h.b16 %v2038
    %v2130 = vunpack.c.l.b16 %v2039
    %v2131 = vunpack.c.h.b16 %v2039
    %v2132 = vunpack.c.l.b16 %v2040
    %v2133 = vunpack.c.h.b16 %v2040
    %v2134 = vunpack.c.l.b16 %v2041
    %v2135 = vunpack.c.h.b16 %v2041
    %v2136 = vunpack.c.l.b16 %v2042
    %v2137 = vunpack.c.h.b16 %v2042
    %v2138 = vunpack.c.l.b16 %v2043
    %v2139 = vunpack.c.h.b16 %v2043
    %v2140 = vunpack.c.l.b16 %v2044
    %v2141 = vunpack.c.h.b16 %v2044
    %v2142 = vunpack.c.l.b16 %v2045
    %v2143 = vunpack.c.h.b16 %v2045
    %v2144 = vunpack.c.l.b16 %v2046
    %v2145 = vunpack.c.h.b16 %v2046
    %v2146 = vunpack.c.l.b16 %v2047
    %v2147 = vunpack.c.h.b16 %v2047
    %v2148 = vunpack.c.l.b16 %v2048
    %v2149 = vunpack.c.h.b16 %v2048
    %v2150 = vunpack.c.l.b16 %v2049
    %v2151 = vunpack.c.h.b16 %v2049
    %v2152 = vunpack.c.l.b16 %v2050
    %v2153 = vunpack.c.h.b16 %v2050
    %v2154 = vunpack.c.l.b16 %v2051
    %v2155 = vunpack.c.h.b16 %v2051
    %v2156 = vunpack.c.l.b16 %v2052
    %v2157 = vunpack.c.h.b16 %v2052
    %v2158 = vpack.c.b16 %v2098, %v2094
    %v2159 = vpack.c.b16 %v2099, %v2095
    %v2160 = vpack.c.b16 %v2100, %v2096
    %v2161 = vpack.c.b16 %v2101, %v2097
    %v2162 = vpack.c.b16 %v2106, %v2102
    %v2163 = vpack.c.b16 %v2107, %v2103
    %v2164 = vpack.c.b16 %v2108, %v2104
    %v2165 = vpack.c.b16 %v2109, %v2105
    %v2166 = vpack.c.b16 %v2114, %v2110
    %v2167 = vpack.c.b16 %v2115, %v2111
    %v2168 = vpack.c.b16 %v2116, %v2112
    %v2169 = vpack.c.b16 %v2117, %v2113
    %v2170 = vpack.c.b16 %v2122, %v2118
    %v2171 = vpack.c.b16 %v2123, %v2119
    %v2172 = vpack.c.b16 %v2124, %v2120
    %v2173 = vpack.c.b16 %v2125, %v2121
    %v2174 = vpack.c.b16 %v2130, %v2126
    %v2175 = vpack.c.b16 %v2131, %v2127
    %v2176 = vpack.c.b16 %v2132, %v2128
    %v2177 = vpack.c.b16 %v2133, %v2129
    %v2178 = vpack.c.b16 %v2138, %v2134
    %v2179 = vpack.c.b16 %v2139, %v2135
    %v2180 = vpack.c.b16 %v2140, %v2136
    %v2181 = vpack.c.b16 %v2141, %v2137
    %v2182 = vpack.c.b16 %v2146, %v2142
    %v2183 = vpack.c.b16 %v2147, %v2143
    %v2184 = vpack.c.b16 %v2148, %v2144
    %v2185 = vpack.c.b16 %v2149, %v2145
    %v2186 = vpack.c.b16 %v2154, %v2150
    %v2187 = vpack.c.b16 %v2155, %v2151
    %v2188 = vpack.c.b16 %v2156, %v2152
    %v2189 = vpack.c.b16 %v2157, %v2153
    %2222 = vmatpush.bf16.msra.mxu0 %v2186
    %2223 = vmatpush.bf16.msra.mxu0 %v2182
    %2224 = vmatpush.bf16.msra.mxu0 %v2178
    %2225 = vmatpush.bf16.msra.mxu0 %v2174
    %2226 = vmatpush.bf16.msra.mxu0 %v2170
    %2227 = vmatpush.bf16.msra.mxu0 %v2166
    %2228 = vmatpush.bf16.msra.mxu0 %v2162
    %2229 = vmatpush.bf16.msra.mxu0 %v2158
    %2230 = vmatmul.bf16.gmra.mxu0 %v2061
    %v2231 = vpop.f32.mrf.mxu0
    %v2232 = vadd.f32 0.0, %v2231
    %v2233 = vpop.f32.mrf.mxu0
    %2234 = vdwg.mxu0
    %2235 = vmatpush.bf16.msra.mxu0 %v2187
    %2236 = vmatpush.bf16.msra.mxu0 %v2183
    %2237 = vmatpush.bf16.msra.mxu0 %v2179
    %2238 = vmatpush.bf16.msra.mxu0 %v2175
    %2239 = vmatpush.bf16.msra.mxu0 %v2171
    %2240 = vmatpush.bf16.msra.mxu0 %v2167
    %2241 = vmatpush.bf16.msra.mxu0 %v2163
    %2242 = vmatpush.bf16.msra.mxu0 %v2159
    %2243 = vmatmul.bf16.gmra.mxu0 %v2061
    %v2244 = vpop.f32.mrf.mxu0
    %v2245 = vadd.f32 0.0, %v2244
    %v2246 = vpop.f32.mrf.mxu0
    %2247 = vdwg.mxu0
    %2248 = vmatpush.bf16.msra.mxu0 %v2188
    %2249 = vmatpush.bf16.msra.mxu0 %v2184
    %2250 = vmatpush.bf16.msra.mxu0 %v2180
    %2251 = vmatpush.bf16.msra.mxu0 %v2176
    %2252 = vmatpush.bf16.msra.mxu0 %v2172
    %2253 = vmatpush.bf16.msra.mxu0 %v2168
    %2254 = vmatpush.bf16.msra.mxu0 %v2164
    %2255 = vmatpush.bf16.msra.mxu0 %v2160
    %2256 = vmatmul.bf16.gmra.mxu0 %v2061
    %v2257 = vpop.f32.mrf.mxu0
    %v2258 = vadd.f32 0.0, %v2257
    %v2259 = vpop.f32.mrf.mxu0
    %2260 = vdwg.mxu0
    %2261 = vmatpush.bf16.msra.mxu0 %v2189
    %2262 = vmatpush.bf16.msra.mxu0 %v2185
    %2263 = vmatpush.bf16.msra.mxu0 %v2181
    %2264 = vmatpush.bf16.msra.mxu0 %v2177
    %2265 = vmatpush.bf16.msra.mxu0 %v2173
    %2266 = vmatpush.bf16.msra.mxu0 %v2169
    %2267 = vmatpush.bf16.msra.mxu0 %v2165
    %2268 = vmatpush.bf16.msra.mxu0 %v2161
    %2269 = vmatmul.bf16.gmra.mxu0 %v2061
    %v2270 = vpop.f32.mrf.mxu0
    %v2271 = vadd.f32 0.0, %v2270
    %v2272 = vpop.f32.mrf.mxu0
    %2273 = vdwg.mxu0
    %v2274 = vadd.f32 %v2057, %v2232
    %v2275 = vadd.f32 %v2058, %v2245
    %v2276 = vadd.f32 %v2059, %v2258
    %v2277 = vadd.f32 %v2060, %v2271
    %v2278 = vxor.u32 %v2274, 2147483648
    %v2279 = vmul.f32 %v2278, 1.442695
    %v2280 = vpow.pop %v2279
    %v2281 = vadd.f32 %v2280, 1.0
    %v2282 = vrcp.pop %v2281
    %v2283 = vmul.f32 %v2281, %v2282
    %v2284 = vsub.f32 1.0, %v2283
    %v2285 = vmul.f32 %v2282, %v2284
    %v2286 = vadd.f32 %v2282, %v2285
    %vm2287 = vweird.f32 %v2281
    %vm2288 = vweird.f32 %v2282
    %vm2289 = vmor %vm2287, %vm2288
    %v2290 = vsel %vm2289, %v2282, %v2286
    %v2291 = vand.u32 2147483647, %v2281
    %vm2292 = vcmp.eq.f32.partialorder %v2291, 8.507059e+37
    %v2293 = vand.u32 %v2281, 2147483648
    %v2294 = vor.u32 1.1754944e-38, %v2293
    %v2295 = vsel %vm2292, %v2294, %v2290
    %v2296 = vmul.f32 1.0, %v2295
    %v2297 = vxor.u32 %v2275, 2147483648
    %v2298 = vmul.f32 %v2297, 1.442695
    %v2299 = vpow.pop %v2298
    %v2300 = vadd.f32 %v2299, 1.0
    %v2301 = vrcp.pop %v2300
    %v2302 = vmul.f32 %v2300, %v2301
    %v2303 = vsub.f32 1.0, %v2302
    %v2304 = vmul.f32 %v2301, %v2303
    %v2305 = vadd.f32 %v2301, %v2304
    %vm2306 = vweird.f32 %v2300
    %vm2307 = vweird.f32 %v2301
    %vm2308 = vmor %vm2306, %vm2307
    %v2309 = vsel %vm2308, %v2301, %v2305
    %v2310 = vand.u32 2147483647, %v2300
    %vm2311 = vcmp.eq.f32.partialorder %v2310, 8.507059e+37
    %v2312 = vand.u32 %v2300, 2147483648
    %v2313 = vor.u32 1.1754944e-38, %v2312
    %v2314 = vsel %vm2311, %v2313, %v2309
    %v2315 = vmul.f32 1.0, %v2314
    %v2316 = vtanh.pop %v2276
    %v2317 = vxor.u32 %v2277, 2147483648
    %v2318 = vmul.f32 %v2317, 1.442695
    %v2319 = vpow.pop %v2318
    %v2320 = vadd.f32 %v2319, 1.0
    %v2321 = vrcp.pop %v2320
    %v2322 = vmul.f32 %v2320, %v2321
    %v2323 = vsub.f32 1.0, %v2322
    %v2324 = vmul.f32 %v2321, %v2323
    %v2325 = vadd.f32 %v2321, %v2324
    %vm2326 = vweird.f32 %v2320
    %vm2327 = vweird.f32 %v2321
    %vm2328 = vmor %vm2326, %vm2327
    %v2329 = vsel %vm2328, %v2321, %v2325
    %v2330 = vand.u32 2147483647, %v2320
    %vm2331 = vcmp.eq.f32.partialorder %v2330, 8.507059e+37
    %v2332 = vand.u32 %v2320, 2147483648
    %v2333 = vor.u32 1.1754944e-38, %v2332
    %v2334 = vsel %vm2331, %v2333, %v2329
    %v2335 = vmul.f32 1.0, %v2334
    %v2336 = vmul.f32 %v2315, %v2056
    %v2337 = vmul.f32 %v2296, %v2316
    %v2338 = vadd.f32 %v2336, %v2337
    %v2339 = vtanh.pop %v2338
    %v2340 = vmul.f32 %v2335, %v2339
    %2341 = vst [vmem:[#allocation2] sm:$0xff] %v2340
    %v2342 = vld [vmem:[%s765] sm:$0xff]
    %v2343 = vld [vmem:[%s765 + $0x8] sm:$0xff]
    %v2344 = vld [vmem:[%s765 + $0x10] sm:$0xff]
    %v2345 = vld [vmem:[%s765 + $0x18] sm:$0xff]
    %v2346 = vpack.c.bf16 %v2340, %v2340
    %2347 = vmatpush.bf16.msra.mxu0 %v2186
    %2348 = vmatpush.bf16.msra.mxu0 %v2182
    %2349 = vmatpush.bf16.msra.mxu0 %v2178
    %2350 = vmatpush.bf16.msra.mxu0 %v2174
    %2351 = vmatpush.bf16.msra.mxu0 %v2170
    %2352 = vmatpush.bf16.msra.mxu0 %v2166
    %2353 = vmatpush.bf16.msra.mxu0 %v2162
    %2354 = vmatpush.bf16.msra.mxu0 %v2158
    %2355 = vmatmul.bf16.gmra.mxu0 %v2346
    %v2356 = vpop.f32.mrf.mxu0
    %v2357 = vadd.f32 0.0, %v2356
    %v2358 = vpop.f32.mrf.mxu0
    %2359 = vdwg.mxu0
    %2360 = vmatpush.bf16.msra.mxu0 %v2187
    %2361 = vmatpush.bf16.msra.mxu0 %v2183
    %2362 = vmatpush.bf16.msra.mxu0 %v2179
    %2363 = vmatpush.bf16.msra.mxu0 %v2175
    %2364 = vmatpush.bf16.msra.mxu0 %v2171
    %2365 = vmatpush.bf16.msra.mxu0 %v2167
    %2366 = vmatpush.bf16.msra.mxu0 %v2163
    %2367 = vmatpush.bf16.msra.mxu0 %v2159
    %2368 = vmatmul.bf16.gmra.mxu0 %v2346
    %v2369 = vpop.f32.mrf.mxu0
    %v2370 = vadd.f32 0.0, %v2369
    %v2371 = vpop.f32.mrf.mxu0
    %2372 = vdwg.mxu0
    %2373 = vmatpush.bf16.msra.mxu0 %v2188
    %2374 = vmatpush.bf16.msra.mxu0 %v2184
    %2375 = vmatpush.bf16.msra.mxu0 %v2180
    %2376 = vmatpush.bf16.msra.mxu0 %v2176
    %2377 = vmatpush.bf16.msra.mxu0 %v2172
    %2378 = vmatpush.bf16.msra.mxu0 %v2168
    %2379 = vmatpush.bf16.msra.mxu0 %v2164
    %2380 = vmatpush.bf16.msra.mxu0 %v2160
    %2381 = vmatmul.bf16.gmra.mxu0 %v2346
    %v2382 = vpop.f32.mrf.mxu0
    %v2383 = vadd.f32 0.0, %v2382
    %v2384 = vpop.f32.mrf.mxu0
    %2385 = vdwg.mxu0
    %2386 = vmatpush.bf16.msra.mxu0 %v2189
    %2387 = vmatpush.bf16.msra.mxu0 %v2185
    %2388 = vmatpush.bf16.msra.mxu0 %v2181
    %2389 = vmatpush.bf16.msra.mxu0 %v2177
    %2390 = vmatpush.bf16.msra.mxu0 %v2173
    %2391 = vmatpush.bf16.msra.mxu0 %v2169
    %2392 = vmatpush.bf16.msra.mxu0 %v2165
    %2393 = vmatpush.bf16.msra.mxu0 %v2161
    %2394 = vmatmul.bf16.gmra.mxu0 %v2346
    %v2395 = vpop.f32.mrf.mxu0
    %v2396 = vadd.f32 0.0, %v2395
    %v2397 = vpop.f32.mrf.mxu0
    %2398 = vdwg.mxu0
    %v2399 = vadd.f32 %v2342, %v2357
    %v2400 = vadd.f32 %v2343, %v2370
    %v2401 = vadd.f32 %v2344, %v2383
    %v2402 = vadd.f32 %v2345, %v2396
    %v2403 = vxor.u32 %v2399, 2147483648
    %v2404 = vmul.f32 %v2403, 1.442695
    %v2405 = vpow.pop %v2404
    %v2406 = vadd.f32 %v2405, 1.0
    %v2407 = vrcp.pop %v2406
    %v2408 = vmul.f32 %v2406, %v2407
    %v2409 = vsub.f32 1.0, %v2408
    %v2410 = vmul.f32 %v2407, %v2409
    %v2411 = vadd.f32 %v2407, %v2410
    %vm2412 = vweird.f32 %v2406
    %vm2413 = vweird.f32 %v2407
    %vm2414 = vmor %vm2412, %vm2413
    %v2415 = vsel %vm2414, %v2407, %v2411
    %v2416 = vand.u32 2147483647, %v2406
    %vm2417 = vcmp.eq.f32.partialorder %v2416, 8.507059e+37
    %v2418 = vand.u32 %v2406, 2147483648
    %v2419 = vor.u32 1.1754944e-38, %v2418
    %v2420 = vsel %vm2417, %v2419, %v2415
    %v2421 = vmul.f32 1.0, %v2420
    %v2422 = vxor.u32 %v2400, 2147483648
    %v2423 = vmul.f32 %v2422, 1.442695
    %v2424 = vpow.pop %v2423
    %v2425 = vadd.f32 %v2424, 1.0
    %v2426 = vrcp.pop %v2425
    %v2427 = vmul.f32 %v2425, %v2426
    %v2428 = vsub.f32 1.0, %v2427
    %v2429 = vmul.f32 %v2426, %v2428
    %v2430 = vadd.f32 %v2426, %v2429
    %vm2431 = vweird.f32 %v2425
    %vm2432 = vweird.f32 %v2426
    %vm2433 = vmor %vm2431, %vm2432
    %v2434 = vsel %vm2433, %v2426, %v2430
    %v2435 = vand.u32 2147483647, %v2425
    %vm2436 = vcmp.eq.f32.partialorder %v2435, 8.507059e+37
    %v2437 = vand.u32 %v2425, 2147483648
    %v2438 = vor.u32 1.1754944e-38, %v2437
    %v2439 = vsel %vm2436, %v2438, %v2434
    %v2440 = vmul.f32 1.0, %v2439
    %v2441 = vtanh.pop %v2401
    %v2442 = vxor.u32 %v2402, 2147483648
    %v2443 = vmul.f32 %v2442, 1.442695
    %v2444 = vpow.pop %v2443
    %v2445 = vadd.f32 %v2444, 1.0
    %v2446 = vrcp.pop %v2445
    %v2447 = vmul.f32 %v2445, %v2446
    %v2448 = vsub.f32 1.0, %v2447
    %v2449 = vmul.f32 %v2446, %v2448
    %v2450 = vadd.f32 %v2446, %v2449
    %vm2451 = vweird.f32 %v2445
    %vm2452 = vweird.f32 %v2446
    %vm2453 = vmor %vm2451, %vm2452
    %v2454 = vsel %vm2453, %v2446, %v2450
    %v2455 = vand.u32 2147483647, %v2445
    %vm2456 = vcmp.eq.f32.partialorder %v2455, 8.507059e+37
    %v2457 = vand.u32 %v2445, 2147483648
    %v2458 = vor.u32 1.1754944e-38, %v2457
    %v2459 = vsel %vm2456, %v2458, %v2454
    %v2460 = vmul.f32 1.0, %v2459
    %v2461 = vmul.f32 %v2440, %v2338
    %v2462 = vmul.f32 %v2421, %v2441
    %v2463 = vadd.f32 %v2461, %v2462
    %v2464 = vtanh.pop %v2463
    %v2465 = vmul.f32 %v2460, %v2464
    %2466 = vst [vmem:[%s890] sm:$0xff] %v2465
    %v2467 = vld [vmem:[%s892] sm:$0xff]
    %v2468 = vld [vmem:[%s892 + $0x8] sm:$0xff]
    %v2469 = vld [vmem:[%s892 + $0x10] sm:$0xff]
    %v2470 = vld [vmem:[%s892 + $0x18] sm:$0xff]
    %v2471 = vpack.c.bf16 %v2465, %v2465
    %2472 = vmatpush.bf16.msra.mxu0 %v2186
    %2473 = vmatpush.bf16.msra.mxu0 %v2182
    %2474 = vmatpush.bf16.msra.mxu0 %v2178
    %2475 = vmatpush.bf16.msra.mxu0 %v2174
    %2476 = vmatpush.bf16.msra.mxu0 %v2170
    %2477 = vmatpush.bf16.msra.mxu0 %v2166
    %2478 = vmatpush.bf16.msra.mxu0 %v2162
    %2479 = vmatpush.bf16.msra.mxu0 %v2158
    %2480 = vmatmul.bf16.gmra.mxu0 %v2471
    %v2481 = vpop.f32.mrf.mxu0
    %v2482 = vadd.f32 0.0, %v2481
    %v2483 = vpop.f32.mrf.mxu0
    %2484 = vdwg.mxu0
    %2485 = vmatpush.bf16.msra.mxu0 %v2187
    %2486 = vmatpush.bf16.msra.mxu0 %v2183
    %2487 = vmatpush.bf16.msra.mxu0 %v2179
    %2488 = vmatpush.bf16.msra.mxu0 %v2175
    %2489 = vmatpush.bf16.msra.mxu0 %v2171
    %2490 = vmatpush.bf16.msra.mxu0 %v2167
    %2491 = vmatpush.bf16.msra.mxu0 %v2163
    %2492 = vmatpush.bf16.msra.mxu0 %v2159
    %2493 = vmatmul.bf16.gmra.mxu0 %v2471
    %v2494 = vpop.f32.mrf.mxu0
    %v2495 = vadd.f32 0.0, %v2494
    %v2496 = vpop.f32.mrf.mxu0
    %2497 = vdwg.mxu0
    %2498 = vmatpush.bf16.msra.mxu0 %v2188
    %2499 = vmatpush.bf16.msra.mxu0 %v2184
    %2500 = vmatpush.bf16.msra.mxu0 %v2180
    %2501 = vmatpush.bf16.msra.mxu0 %v2176
    %2502 = vmatpush.bf16.msra.mxu0 %v2172
    %2503 = vmatpush.bf16.msra.mxu0 %v2168
    %2504 = vmatpush.bf16.msra.mxu0 %v2164
    %2505 = vmatpush.bf16.msra.mxu0 %v2160
    %2506 = vmatmul.bf16.gmra.mxu0 %v2471
    %v2507 = vpop.f32.mrf.mxu0
    %v2508 = vadd.f32 0.0, %v2507
    %v2509 = vpop.f32.mrf.mxu0
    %2510 = vdwg.mxu0
    %2511 = vmatpush.bf16.msra.mxu0 %v2189
    %2512 = vmatpush.bf16.msra.mxu0 %v2185
    %2513 = vmatpush.bf16.msra.mxu0 %v2181
    %2514 = vmatpush.bf16.msra.mxu0 %v2177
    %2515 = vmatpush.bf16.msra.mxu0 %v2173
    %2516 = vmatpush.bf16.msra.mxu0 %v2169
    %2517 = vmatpush.bf16.msra.mxu0 %v2165
    %2518 = vmatpush.bf16.msra.mxu0 %v2161
    %2519 = vmatmul.bf16.gmra.mxu0 %v2471
    %v2520 = vpop.f32.mrf.mxu0
    %v2521 = vadd.f32 0.0, %v2520
    %v2522 = vpop.f32.mrf.mxu0
    %2523 = vdwg.mxu0
    %v2524 = vadd.f32 %v2467, %v2482
    %v2525 = vadd.f32 %v2468, %v2495
    %v2526 = vadd.f32 %v2469, %v2508
    %v2527 = vadd.f32 %v2470, %v2521
    %v2528 = vxor.u32 %v2524, 2147483648
    %v2529 = vmul.f32 %v2528, 1.442695
    %v2530 = vpow.pop %v2529
    %v2531 = vadd.f32 %v2530, 1.0
    %v2532 = vrcp.pop %v2531
    %v2533 = vmul.f32 %v2531, %v2532
    %v2534 = vsub.f32 1.0, %v2533
    %v2535 = vmul.f32 %v2532, %v2534
    %v2536 = vadd.f32 %v2532, %v2535
    %vm2537 = vweird.f32 %v2531
    %vm2538 = vweird.f32 %v2532
    %vm2539 = vmor %vm2537, %vm2538
    %v2540 = vsel %vm2539, %v2532, %v2536
    %v2541 = vand.u32 2147483647, %v2531
    %vm2542 = vcmp.eq.f32.partialorder %v2541, 8.507059e+37
    %v2543 = vand.u32 %v2531, 2147483648
    %v2544 = vor.u32 1.1754944e-38, %v2543
    %v2545 = vsel %vm2542, %v2544, %v2540
    %v2546 = vmul.f32 1.0, %v2545
    %v2547 = vxor.u32 %v2525, 2147483648
    %v2548 = vmul.f32 %v2547, 1.442695
    %v2549 = vpow.pop %v2548
    %v2550 = vadd.f32 %v2549, 1.0
    %v2551 = vrcp.pop %v2550
    %v2552 = vmul.f32 %v2550, %v2551
    %v2553 = vsub.f32 1.0, %v2552
    %v2554 = vmul.f32 %v2551, %v2553
    %v2555 = vadd.f32 %v2551, %v2554
    %vm2556 = vweird.f32 %v2550
    %vm2557 = vweird.f32 %v2551
    %vm2558 = vmor %vm2556, %vm2557
    %v2559 = vsel %vm2558, %v2551, %v2555
    %v2560 = vand.u32 2147483647, %v2550
    %vm2561 = vcmp.eq.f32.partialorder %v2560, 8.507059e+37
    %v2562 = vand.u32 %v2550, 2147483648
    %v2563 = vor.u32 1.1754944e-38, %v2562
    %v2564 = vsel %vm2561, %v2563, %v2559
    %v2565 = vmul.f32 1.0, %v2564
    %v2566 = vtanh.pop %v2526
    %v2567 = vxor.u32 %v2527, 2147483648
    %v2568 = vmul.f32 %v2567, 1.442695
    %v2569 = vpow.pop %v2568
    %v2570 = vadd.f32 %v2569, 1.0
    %v2571 = vrcp.pop %v2570
    %v2572 = vmul.f32 %v2570, %v2571
    %v2573 = vsub.f32 1.0, %v2572
    %v2574 = vmul.f32 %v2571, %v2573
    %v2575 = vadd.f32 %v2571, %v2574
    %vm2576 = vweird.f32 %v2570
    %vm2577 = vweird.f32 %v2571
    %vm2578 = vmor %vm2576, %vm2577
    %v2579 = vsel %vm2578, %v2571, %v2575
    %v2580 = vand.u32 2147483647, %v2570
    %vm2581 = vcmp.eq.f32.partialorder %v2580, 8.507059e+37
    %v2582 = vand.u32 %v2570, 2147483648
    %v2583 = vor.u32 1.1754944e-38, %v2582
    %v2584 = vsel %vm2581, %v2583, %v2579
    %v2585 = vmul.f32 1.0, %v2584
    %v2586 = vmul.f32 %v2565, %v2463
    %v2587 = vmul.f32 %v2546, %v2566
    %v2588 = vadd.f32 %v2586, %v2587
    %v2589 = vtanh.pop %v2588
    %v2590 = vmul.f32 %v2585, %v2589
    %2591 = vst [vmem:[%s1017] sm:$0xff] %v2590
    %v2592 = vld [vmem:[%s1019] sm:$0xff]
    %v2593 = vld [vmem:[%s1019 + $0x8] sm:$0xff]
    %v2594 = vld [vmem:[%s1019 + $0x10] sm:$0xff]
    %v2595 = vld [vmem:[%s1019 + $0x18] sm:$0xff]
    %v2596 = vpack.c.bf16 %v2590, %v2590
    %2597 = vmatpush.bf16.msra.mxu0 %v2186
    %2598 = vmatpush.bf16.msra.mxu0 %v2182
    %2599 = vmatpush.bf16.msra.mxu0 %v2178
    %2600 = vmatpush.bf16.msra.mxu0 %v2174
    %2601 = vmatpush.bf16.msra.mxu0 %v2170
    %2602 = vmatpush.bf16.msra.mxu0 %v2166
    %2603 = vmatpush.bf16.msra.mxu0 %v2162
    %2604 = vmatpush.bf16.msra.mxu0 %v2158
    %2605 = vmatmul.bf16.gmra.mxu0 %v2596
    %v2606 = vpop.f32.mrf.mxu0
    %v2607 = vadd.f32 0.0, %v2606
    %v2608 = vpop.f32.mrf.mxu0
    %2609 = vdwg.mxu0
    %2610 = vmatpush.bf16.msra.mxu0 %v2187
    %2611 = vmatpush.bf16.msra.mxu0 %v2183
    %2612 = vmatpush.bf16.msra.mxu0 %v2179
    %2613 = vmatpush.bf16.msra.mxu0 %v2175
    %2614 = vmatpush.bf16.msra.mxu0 %v2171
    %2615 = vmatpush.bf16.msra.mxu0 %v2167
    %2616 = vmatpush.bf16.msra.mxu0 %v2163
    %2617 = vmatpush.bf16.msra.mxu0 %v2159
    %2618 = vmatmul.bf16.gmra.mxu0 %v2596
    %v2619 = vpop.f32.mrf.mxu0
    %v2620 = vadd.f32 0.0, %v2619
    %v2621 = vpop.f32.mrf.mxu0
    %2622 = vdwg.mxu0
    %2623 = vmatpush.bf16.msra.mxu0 %v2188
    %2624 = vmatpush.bf16.msra.mxu0 %v2184
    %2625 = vmatpush.bf16.msra.mxu0 %v2180
    %2626 = vmatpush.bf16.msra.mxu0 %v2176
    %2627 = vmatpush.bf16.msra.mxu0 %v2172
    %2628 = vmatpush.bf16.msra.mxu0 %v2168
    %2629 = vmatpush.bf16.msra.mxu0 %v2164
    %2630 = vmatpush.bf16.msra.mxu0 %v2160
    %2631 = vmatmul.bf16.gmra.mxu0 %v2596
    %v2632 = vpop.f32.mrf.mxu0
    %v2633 = vadd.f32 0.0, %v2632
    %v2634 = vpop.f32.mrf.mxu0
    %2635 = vdwg.mxu0
    %2636 = vmatpush.bf16.msra.mxu0 %v2189
    %2637 = vmatpush.bf16.msra.mxu0 %v2185
    %2638 = vmatpush.bf16.msra.mxu0 %v2181
    %2639 = vmatpush.bf16.msra.mxu0 %v2177
    %2640 = vmatpush.bf16.msra.mxu0 %v2173
    %2641 = vmatpush.bf16.msra.mxu0 %v2169
    %2642 = vmatpush.bf16.msra.mxu0 %v2165
    %2643 = vmatpush.bf16.msra.mxu0 %v2161
    %2644 = vmatmul.bf16.gmra.mxu0 %v2596
    %v2645 = vpop.f32.mrf.mxu0
    %v2646 = vadd.f32 0.0, %v2645
    %v2647 = vpop.f32.mrf.mxu0
    %2648 = vdwg.mxu0
    %v2649 = vadd.f32 %v2592, %v2607
    %v2650 = vadd.f32 %v2593, %v2620
    %v2651 = vadd.f32 %v2594, %v2633
    %v2652 = vadd.f32 %v2595, %v2646
    %v2653 = vxor.u32 %v2649, 2147483648
    %v2654 = vmul.f32 %v2653, 1.442695
    %v2655 = vpow.pop %v2654
    %v2656 = vadd.f32 %v2655, 1.0
    %v2657 = vrcp.pop %v2656
    %v2658 = vmul.f32 %v2656, %v2657
    %v2659 = vsub.f32 1.0, %v2658
    %v2660 = vmul.f32 %v2657, %v2659
    %v2661 = vadd.f32 %v2657, %v2660
    %vm2662 = vweird.f32 %v2656
    %vm2663 = vweird.f32 %v2657
    %vm2664 = vmor %vm2662, %vm2663
    %v2665 = vsel %vm2664, %v2657, %v2661
    %v2666 = vand.u32 2147483647, %v2656
    %vm2667 = vcmp.eq.f32.partialorder %v2666, 8.507059e+37
    %v2668 = vand.u32 %v2656, 2147483648
    %v2669 = vor.u32 1.1754944e-38, %v2668
    %v2670 = vsel %vm2667, %v2669, %v2665
    %v2671 = vmul.f32 1.0, %v2670
    %v2672 = vxor.u32 %v2650, 2147483648
    %v2673 = vmul.f32 %v2672, 1.442695
    %v2674 = vpow.pop %v2673
    %v2675 = vadd.f32 %v2674, 1.0
    %v2676 = vrcp.pop %v2675
    %v2677 = vmul.f32 %v2675, %v2676
    %v2678 = vsub.f32 1.0, %v2677
    %v2679 = vmul.f32 %v2676, %v2678
    %v2680 = vadd.f32 %v2676, %v2679
    %vm2681 = vweird.f32 %v2675
    %vm2682 = vweird.f32 %v2676
    %vm2683 = vmor %vm2681, %vm2682
    %v2684 = vsel %vm2683, %v2676, %v2680
    %v2685 = vand.u32 2147483647, %v2675
    %vm2686 = vcmp.eq.f32.partialorder %v2685, 8.507059e+37
    %v2687 = vand.u32 %v2675, 2147483648
    %v2688 = vor.u32 1.1754944e-38, %v2687
    %v2689 = vsel %vm2686, %v2688, %v2684
    %v2690 = vmul.f32 1.0, %v2689
    %v2691 = vtanh.pop %v2651
    %v2692 = vxor.u32 %v2652, 2147483648
    %v2693 = vmul.f32 %v2692, 1.442695
    %v2694 = vpow.pop %v2693
    %v2695 = vadd.f32 %v2694, 1.0
    %v2696 = vrcp.pop %v2695
    %v2697 = vmul.f32 %v2695, %v2696
    %v2698 = vsub.f32 1.0, %v2697
    %v2699 = vmul.f32 %v2696, %v2698
    %v2700 = vadd.f32 %v2696, %v2699
    %vm2701 = vweird.f32 %v2695
    %vm2702 = vweird.f32 %v2696
    %vm2703 = vmor %vm2701, %vm2702
    %v2704 = vsel %vm2703, %v2696, %v2700
    %v2705 = vand.u32 2147483647, %v2695
    %vm2706 = vcmp.eq.f32.partialorder %v2705, 8.507059e+37
    %v2707 = vand.u32 %v2695, 2147483648
    %v2708 = vor.u32 1.1754944e-38, %v2707
    %v2709 = vsel %vm2706, %v2708, %v2704
    %v2710 = vmul.f32 1.0, %v2709
    %v2711 = vmul.f32 %v2690, %v2588
    %v2712 = vmul.f32 %v2671, %v2691
    %v2713 = vadd.f32 %v2711, %v2712
    %v2714 = vtanh.pop %v2713
    %v2715 = vmul.f32 %v2710, %v2714
    %2716 = vst [vmem:[%s1144] sm:$0xff] %v2715
    %v2717 = vld [vmem:[%s1146] sm:$0xff]
    %v2718 = vld [vmem:[%s1146 + $0x8] sm:$0xff]
    %v2719 = vld [vmem:[%s1146 + $0x10] sm:$0xff]
    %v2720 = vld [vmem:[%s1146 + $0x18] sm:$0xff]
    %v2721 = vpack.c.bf16 %v2715, %v2715
    %2722 = vmatpush.bf16.msra.mxu0 %v2186
    %2723 = vmatpush.bf16.msra.mxu0 %v2182
    %2724 = vmatpush.bf16.msra.mxu0 %v2178
    %2725 = vmatpush.bf16.msra.mxu0 %v2174
    %2726 = vmatpush.bf16.msra.mxu0 %v2170
    %2727 = vmatpush.bf16.msra.mxu0 %v2166
    %2728 = vmatpush.bf16.msra.mxu0 %v2162
    %2729 = vmatpush.bf16.msra.mxu0 %v2158
    %2730 = vmatmul.bf16.gmra.mxu0 %v2721
    %v2731 = vpop.f32.mrf.mxu0
    %v2732 = vadd.f32 0.0, %v2731
    %v2733 = vpop.f32.mrf.mxu0
    %2734 = vdwg.mxu0
    %2735 = vmatpush.bf16.msra.mxu0 %v2187
    %2736 = vmatpush.bf16.msra.mxu0 %v2183
    %2737 = vmatpush.bf16.msra.mxu0 %v2179
    %2738 = vmatpush.bf16.msra.mxu0 %v2175
    %2739 = vmatpush.bf16.msra.mxu0 %v2171
    %2740 = vmatpush.bf16.msra.mxu0 %v2167
    %2741 = vmatpush.bf16.msra.mxu0 %v2163
    %2742 = vmatpush.bf16.msra.mxu0 %v2159
    %2743 = vmatmul.bf16.gmra.mxu0 %v2721
    %v2744 = vpop.f32.mrf.mxu0
    %v2745 = vadd.f32 0.0, %v2744
    %v2746 = vpop.f32.mrf.mxu0
    %2747 = vdwg.mxu0
    %2748 = vmatpush.bf16.msra.mxu0 %v2188
    %2749 = vmatpush.bf16.msra.mxu0 %v2184
    %2750 = vmatpush.bf16.msra.mxu0 %v2180
    %2751 = vmatpush.bf16.msra.mxu0 %v2176
    %2752 = vmatpush.bf16.msra.mxu0 %v2172
    %2753 = vmatpush.bf16.msra.mxu0 %v2168
    %2754 = vmatpush.bf16.msra.mxu0 %v2164
    %2755 = vmatpush.bf16.msra.mxu0 %v2160
    %2756 = vmatmul.bf16.gmra.mxu0 %v2721
    %v2757 = vpop.f32.mrf.mxu0
    %v2758 = vadd.f32 0.0, %v2757
    %v2759 = vpop.f32.mrf.mxu0
    %2760 = vdwg.mxu0
    %2761 = vmatpush.bf16.msra.mxu0 %v2189
    %2762 = vmatpush.bf16.msra.mxu0 %v2185
    %2763 = vmatpush.bf16.msra.mxu0 %v2181
    %2764 = vmatpush.bf16.msra.mxu0 %v2177
    %2765 = vmatpush.bf16.msra.mxu0 %v2173
    %2766 = vmatpush.bf16.msra.mxu0 %v2169
    %2767 = vmatpush.bf16.msra.mxu0 %v2165
    %2768 = vmatpush.bf16.msra.mxu0 %v2161
    %2769 = vmatmul.bf16.gmra.mxu0 %v2721
    %v2770 = vpop.f32.mrf.mxu0
    %v2771 = vadd.f32 0.0, %v2770
    %v2772 = vpop.f32.mrf.mxu0
    %2773 = vdwg.mxu0
    %v2774 = vadd.f32 %v2717, %v2732
    %v2775 = vadd.f32 %v2718, %v2745
    %v2776 = vadd.f32 %v2719, %v2758
    %v2777 = vadd.f32 %v2720, %v2771
    %v2778 = vxor.u32 %v2774, 2147483648
    %v2779 = vmul.f32 %v2778, 1.442695
    %v2780 = vpow.pop %v2779
    %v2781 = vadd.f32 %v2780, 1.0
    %v2782 = vrcp.pop %v2781
    %v2783 = vmul.f32 %v2781, %v2782
    %v2784 = vsub.f32 1.0, %v2783
    %v2785 = vmul.f32 %v2782, %v2784
    %v2786 = vadd.f32 %v2782, %v2785
    %vm2787 = vweird.f32 %v2781
    %vm2788 = vweird.f32 %v2782
    %vm2789 = vmor %vm2787, %vm2788
    %v2790 = vsel %vm2789, %v2782, %v2786
    %v2791 = vand.u32 2147483647, %v2781
    %vm2792 = vcmp.eq.f32.partialorder %v2791, 8.507059e+37
    %v2793 = vand.u32 %v2781, 2147483648
    %v2794 = vor.u32 1.1754944e-38, %v2793
    %v2795 = vsel %vm2792, %v2794, %v2790
    %v2796 = vmul.f32 1.0, %v2795
    %v2797 = vxor.u32 %v2775, 2147483648
    %v2798 = vmul.f32 %v2797, 1.442695
    %v2799 = vpow.pop %v2798
    %v2800 = vadd.f32 %v2799, 1.0
    %v2801 = vrcp.pop %v2800
    %v2802 = vmul.f32 %v2800, %v2801
    %v2803 = vsub.f32 1.0, %v2802
    %v2804 = vmul.f32 %v2801, %v2803
    %v2805 = vadd.f32 %v2801, %v2804
    %vm2806 = vweird.f32 %v2800
    %vm2807 = vweird.f32 %v2801
    %vm2808 = vmor %vm2806, %vm2807
    %v2809 = vsel %vm2808, %v2801, %v2805
    %v2810 = vand.u32 2147483647, %v2800
    %vm2811 = vcmp.eq.f32.partialorder %v2810, 8.507059e+37
    %v2812 = vand.u32 %v2800, 2147483648
    %v2813 = vor.u32 1.1754944e-38, %v2812
    %v2814 = vsel %vm2811, %v2813, %v2809
    %v2815 = vmul.f32 1.0, %v2814
    %v2816 = vtanh.pop %v2776
    %v2817 = vxor.u32 %v2777, 2147483648
    %v2818 = vmul.f32 %v2817, 1.442695
    %v2819 = vpow.pop %v2818
    %v2820 = vadd.f32 %v2819, 1.0
    %v2821 = vrcp.pop %v2820
    %v2822 = vmul.f32 %v2820, %v2821
    %v2823 = vsub.f32 1.0, %v2822
    %v2824 = vmul.f32 %v2821, %v2823
    %v2825 = vadd.f32 %v2821, %v2824
    %vm2826 = vweird.f32 %v2820
    %vm2827 = vweird.f32 %v2821
    %vm2828 = vmor %vm2826, %vm2827
    %v2829 = vsel %vm2828, %v2821, %v2825
    %v2830 = vand.u32 2147483647, %v2820
    %vm2831 = vcmp.eq.f32.partialorder %v2830, 8.507059e+37
    %v2832 = vand.u32 %v2820, 2147483648
    %v2833 = vor.u32 1.1754944e-38, %v2832
    %v2834 = vsel %vm2831, %v2833, %v2829
    %v2835 = vmul.f32 1.0, %v2834
    %v2836 = vmul.f32 %v2815, %v2713
    %v2837 = vmul.f32 %v2796, %v2816
    %v2838 = vadd.f32 %v2836, %v2837
    %v2839 = vtanh.pop %v2838
    %v2840 = vmul.f32 %v2835, %v2839
    %2841 = vst [vmem:[%s1271] sm:$0xff] %v2840
    %v2842 = vld [vmem:[%s1273] sm:$0xff]
    %v2843 = vld [vmem:[%s1273 + $0x8] sm:$0xff]
    %v2844 = vld [vmem:[%s1273 + $0x10] sm:$0xff]
    %v2845 = vld [vmem:[%s1273 + $0x18] sm:$0xff]
    %v2846 = vpack.c.bf16 %v2840, %v2840
    %2847 = vmatpush.bf16.msra.mxu0 %v2186
    %2848 = vmatpush.bf16.msra.mxu0 %v2182
    %2849 = vmatpush.bf16.msra.mxu0 %v2178
    %2850 = vmatpush.bf16.msra.mxu0 %v2174
    %2851 = vmatpush.bf16.msra.mxu0 %v2170
    %2852 = vmatpush.bf16.msra.mxu0 %v2166
    %2853 = vmatpush.bf16.msra.mxu0 %v2162
    %2854 = vmatpush.bf16.msra.mxu0 %v2158
    %2855 = vmatmul.bf16.gmra.mxu0 %v2846
    %v2856 = vpop.f32.mrf.mxu0
    %v2857 = vadd.f32 0.0, %v2856
    %v2858 = vpop.f32.mrf.mxu0
    %2859 = vdwg.mxu0
    %2860 = vmatpush.bf16.msra.mxu0 %v2187
    %2861 = vmatpush.bf16.msra.mxu0 %v2183
    %2862 = vmatpush.bf16.msra.mxu0 %v2179
    %2863 = vmatpush.bf16.msra.mxu0 %v2175
    %2864 = vmatpush.bf16.msra.mxu0 %v2171
    %2865 = vmatpush.bf16.msra.mxu0 %v2167
    %2866 = vmatpush.bf16.msra.mxu0 %v2163
    %2867 = vmatpush.bf16.msra.mxu0 %v2159
    %2868 = vmatmul.bf16.gmra.mxu0 %v2846
    %v2869 = vpop.f32.mrf.mxu0
    %v2870 = vadd.f32 0.0, %v2869
    %v2871 = vpop.f32.mrf.mxu0
    %2872 = vdwg.mxu0
    %2873 = vmatpush.bf16.msra.mxu0 %v2188
    %2874 = vmatpush.bf16.msra.mxu0 %v2184
    %2875 = vmatpush.bf16.msra.mxu0 %v2180
    %2876 = vmatpush.bf16.msra.mxu0 %v2176
    %2877 = vmatpush.bf16.msra.mxu0 %v2172
    %2878 = vmatpush.bf16.msra.mxu0 %v2168
    %2879 = vmatpush.bf16.msra.mxu0 %v2164
    %2880 = vmatpush.bf16.msra.mxu0 %v2160
    %2881 = vmatmul.bf16.gmra.mxu0 %v2846
    %v2882 = vpop.f32.mrf.mxu0
    %v2883 = vadd.f32 0.0, %v2882
    %v2884 = vpop.f32.mrf.mxu0
    %2885 = vdwg.mxu0
    %2886 = vmatpush.bf16.msra.mxu0 %v2189
    %2887 = vmatpush.bf16.msra.mxu0 %v2185
    %2888 = vmatpush.bf16.msra.mxu0 %v2181
    %2889 = vmatpush.bf16.msra.mxu0 %v2177
    %2890 = vmatpush.bf16.msra.mxu0 %v2173
    %2891 = vmatpush.bf16.msra.mxu0 %v2169
    %2892 = vmatpush.bf16.msra.mxu0 %v2165
    %2893 = vmatpush.bf16.msra.mxu0 %v2161
    %2894 = vmatmul.bf16.gmra.mxu0 %v2846
    %v2895 = vpop.f32.mrf.mxu0
    %v2896 = vadd.f32 0.0, %v2895
    %v2897 = vpop.f32.mrf.mxu0
    %2898 = vdwg.mxu0
    %v2899 = vadd.f32 %v2842, %v2857
    %v2900 = vadd.f32 %v2843, %v2870
    %v2901 = vadd.f32 %v2844, %v2883
    %v2902 = vadd.f32 %v2845, %v2896
    %v2903 = vxor.u32 %v2899, 2147483648
    %v2904 = vmul.f32 %v2903, 1.442695
    %v2905 = vpow.pop %v2904
    %v2906 = vadd.f32 %v2905, 1.0
    %v2907 = vrcp.pop %v2906
    %v2908 = vmul.f32 %v2906, %v2907
    %v2909 = vsub.f32 1.0, %v2908
    %v2910 = vmul.f32 %v2907, %v2909
    %v2911 = vadd.f32 %v2907, %v2910
    %vm2912 = vweird.f32 %v2906
    %vm2913 = vweird.f32 %v2907
    %vm2914 = vmor %vm2912, %vm2913
    %v2915 = vsel %vm2914, %v2907, %v2911
    %v2916 = vand.u32 2147483647, %v2906
    %vm2917 = vcmp.eq.f32.partialorder %v2916, 8.507059e+37
    %v2918 = vand.u32 %v2906, 2147483648
    %v2919 = vor.u32 1.1754944e-38, %v2918
    %v2920 = vsel %vm2917, %v2919, %v2915
    %v2921 = vmul.f32 1.0, %v2920
    %v2922 = vxor.u32 %v2900, 2147483648
    %v2923 = vmul.f32 %v2922, 1.442695
    %v2924 = vpow.pop %v2923
    %v2925 = vadd.f32 %v2924, 1.0
    %v2926 = vrcp.pop %v2925
    %v2927 = vmul.f32 %v2925, %v2926
    %v2928 = vsub.f32 1.0, %v2927
    %v2929 = vmul.f32 %v2926, %v2928
    %v2930 = vadd.f32 %v2926, %v2929
    %vm2931 = vweird.f32 %v2925
    %vm2932 = vweird.f32 %v2926
    %vm2933 = vmor %vm2931, %vm2932
    %v2934 = vsel %vm2933, %v2926, %v2930
    %v2935 = vand.u32 2147483647, %v2925
    %vm2936 = vcmp.eq.f32.partialorder %v2935, 8.507059e+37
    %v2937 = vand.u32 %v2925, 2147483648
    %v2938 = vor.u32 1.1754944e-38, %v2937
    %v2939 = vsel %vm2936, %v2938, %v2934
    %v2940 = vmul.f32 1.0, %v2939
    %v2941 = vtanh.pop %v2901
    %v2942 = vxor.u32 %v2902, 2147483648
    %v2943 = vmul.f32 %v2942, 1.442695
    %v2944 = vpow.pop %v2943
    %v2945 = vadd.f32 %v2944, 1.0
    %v2946 = vrcp.pop %v2945
    %v2947 = vmul.f32 %v2945, %v2946
    %v2948 = vsub.f32 1.0, %v2947
    %v2949 = vmul.f32 %v2946, %v2948
    %v2950 = vadd.f32 %v2946, %v2949
    %vm2951 = vweird.f32 %v2945
    %vm2952 = vweird.f32 %v2946
    %vm2953 = vmor %vm2951, %vm2952
    %v2954 = vsel %vm2953, %v2946, %v2950
    %v2955 = vand.u32 2147483647, %v2945
    %vm2956 = vcmp.eq.f32.partialorder %v2955, 8.507059e+37
    %v2957 = vand.u32 %v2945, 2147483648
    %v2958 = vor.u32 1.1754944e-38, %v2957
    %v2959 = vsel %vm2956, %v2958, %v2954
    %v2960 = vmul.f32 1.0, %v2959
    %v2961 = vmul.f32 %v2940, %v2838
    %v2962 = vmul.f32 %v2921, %v2941
    %v2963 = vadd.f32 %v2961, %v2962
    %v2964 = vtanh.pop %v2963
    %v2965 = vmul.f32 %v2960, %v2964
    %2966 = vst [vmem:[%s1398] sm:$0xff] %v2965
    %v2967 = vld [vmem:[%s1400] sm:$0xff]
    %v2968 = vld [vmem:[%s1400 + $0x8] sm:$0xff]
    %v2969 = vld [vmem:[%s1400 + $0x10] sm:$0xff]
    %v2970 = vld [vmem:[%s1400 + $0x18] sm:$0xff]
    %v2971 = vpack.c.bf16 %v2965, %v2965
    %2972 = vmatpush.bf16.msra.mxu0 %v2186
    %2973 = vmatpush.bf16.msra.mxu0 %v2182
    %2974 = vmatpush.bf16.msra.mxu0 %v2178
    %2975 = vmatpush.bf16.msra.mxu0 %v2174
    %2976 = vmatpush.bf16.msra.mxu0 %v2170
    %2977 = vmatpush.bf16.msra.mxu0 %v2166
    %2978 = vmatpush.bf16.msra.mxu0 %v2162
    %2979 = vmatpush.bf16.msra.mxu0 %v2158
    %2980 = vmatmul.bf16.gmra.mxu0 %v2971
    %v2981 = vpop.f32.mrf.mxu0
    %v2982 = vadd.f32 0.0, %v2981
    %v2983 = vpop.f32.mrf.mxu0
    %2984 = vdwg.mxu0
    %2985 = vmatpush.bf16.msra.mxu0 %v2187
    %2986 = vmatpush.bf16.msra.mxu0 %v2183
    %2987 = vmatpush.bf16.msra.mxu0 %v2179
    %2988 = vmatpush.bf16.msra.mxu0 %v2175
    %2989 = vmatpush.bf16.msra.mxu0 %v2171
    %2990 = vmatpush.bf16.msra.mxu0 %v2167
    %2991 = vmatpush.bf16.msra.mxu0 %v2163
    %2992 = vmatpush.bf16.msra.mxu0 %v2159
    %2993 = vmatmul.bf16.gmra.mxu0 %v2971
    %v2994 = vpop.f32.mrf.mxu0
    %v2995 = vadd.f32 0.0, %v2994
    %v2996 = vpop.f32.mrf.mxu0
    %2997 = vdwg.mxu0
    %2998 = vmatpush.bf16.msra.mxu0 %v2188
    %2999 = vmatpush.bf16.msra.mxu0 %v2184
    %3000 = vmatpush.bf16.msra.mxu0 %v2180
    %3001 = vmatpush.bf16.msra.mxu0 %v2176
    %3002 = vmatpush.bf16.msra.mxu0 %v2172
    %3003 = vmatpush.bf16.msra.mxu0 %v2168
    %3004 = vmatpush.bf16.msra.mxu0 %v2164
    %3005 = vmatpush.bf16.msra.mxu0 %v2160
    %3006 = vmatmul.bf16.gmra.mxu0 %v2971
    %v3007 = vpop.f32.mrf.mxu0
    %v3008 = vadd.f32 0.0, %v3007
    %v3009 = vpop.f32.mrf.mxu0
    %3010 = vdwg.mxu0
    %3011 = vmatpush.bf16.msra.mxu0 %v2189
    %3012 = vmatpush.bf16.msra.mxu0 %v2185
    %3013 = vmatpush.bf16.msra.mxu0 %v2181
    %3014 = vmatpush.bf16.msra.mxu0 %v2177
    %3015 = vmatpush.bf16.msra.mxu0 %v2173
    %3016 = vmatpush.bf16.msra.mxu0 %v2169
    %3017 = vmatpush.bf16.msra.mxu0 %v2165
    %3018 = vmatpush.bf16.msra.mxu0 %v2161
    %3019 = vmatmul.bf16.gmra.mxu0 %v2971
    %v3020 = vpop.f32.mrf.mxu0
    %v3021 = vadd.f32 0.0, %v3020
    %v3022 = vpop.f32.mrf.mxu0
    %3023 = vdwg.mxu0
    %v3024 = vadd.f32 %v2967, %v2982
    %v3025 = vadd.f32 %v2968, %v2995
    %v3026 = vadd.f32 %v2969, %v3008
    %v3027 = vadd.f32 %v2970, %v3021
    %v3028 = vxor.u32 %v3024, 2147483648
    %v3029 = vmul.f32 %v3028, 1.442695
    %v3030 = vpow.pop %v3029
    %v3031 = vadd.f32 %v3030, 1.0
    %v3032 = vrcp.pop %v3031
    %v3033 = vmul.f32 %v3031, %v3032
    %v3034 = vsub.f32 1.0, %v3033
    %v3035 = vmul.f32 %v3032, %v3034
    %v3036 = vadd.f32 %v3032, %v3035
    %vm3037 = vweird.f32 %v3031
    %vm3038 = vweird.f32 %v3032
    %vm3039 = vmor %vm3037, %vm3038
    %v3040 = vsel %vm3039, %v3032, %v3036
    %v3041 = vand.u32 2147483647, %v3031
    %vm3042 = vcmp.eq.f32.partialorder %v3041, 8.507059e+37
    %v3043 = vand.u32 %v3031, 2147483648
    %v3044 = vor.u32 1.1754944e-38, %v3043
    %v3045 = vsel %vm3042, %v3044, %v3040
    %v3046 = vmul.f32 1.0, %v3045
    %v3047 = vxor.u32 %v3025, 2147483648
    %v3048 = vmul.f32 %v3047, 1.442695
    %v3049 = vpow.pop %v3048
    %v3050 = vadd.f32 %v3049, 1.0
    %v3051 = vrcp.pop %v3050
    %v3052 = vmul.f32 %v3050, %v3051
    %v3053 = vsub.f32 1.0, %v3052
    %v3054 = vmul.f32 %v3051, %v3053
    %v3055 = vadd.f32 %v3051, %v3054
    %vm3056 = vweird.f32 %v3050
    %vm3057 = vweird.f32 %v3051
    %vm3058 = vmor %vm3056, %vm3057
    %v3059 = vsel %vm3058, %v3051, %v3055
    %v3060 = vand.u32 2147483647, %v3050
    %vm3061 = vcmp.eq.f32.partialorder %v3060, 8.507059e+37
    %v3062 = vand.u32 %v3050, 2147483648
    %v3063 = vor.u32 1.1754944e-38, %v3062
    %v3064 = vsel %vm3061, %v3063, %v3059
    %v3065 = vmul.f32 1.0, %v3064
    %v3066 = vtanh.pop %v3026
    %v3067 = vxor.u32 %v3027, 2147483648
    %v3068 = vmul.f32 %v3067, 1.442695
    %v3069 = vpow.pop %v3068
    %v3070 = vadd.f32 %v3069, 1.0
    %v3071 = vrcp.pop %v3070
    %v3072 = vmul.f32 %v3070, %v3071
    %v3073 = vsub.f32 1.0, %v3072
    %v3074 = vmul.f32 %v3071, %v3073
    %v3075 = vadd.f32 %v3071, %v3074
    %vm3076 = vweird.f32 %v3070
    %vm3077 = vweird.f32 %v3071
    %vm3078 = vmor %vm3076, %vm3077
    %v3079 = vsel %vm3078, %v3071, %v3075
    %v3080 = vand.u32 2147483647, %v3070
    %vm3081 = vcmp.eq.f32.partialorder %v3080, 8.507059e+37
    %v3082 = vand.u32 %v3070, 2147483648
    %v3083 = vor.u32 1.1754944e-38, %v3082
    %v3084 = vsel %vm3081, %v3083, %v3079
    %v3085 = vmul.f32 1.0, %v3084
    %v3086 = vmul.f32 %v3065, %v2963
    %v3087 = vmul.f32 %v3046, %v3066
    %v3088 = vadd.f32 %v3086, %v3087
    %v3089 = vtanh.pop %v3088
    %v3090 = vmul.f32 %v3085, %v3089
    %3091 = vst [vmem:[%s1525] sm:$0xff] %v3090
    %v3092 = vld [vmem:[%s1527] sm:$0xff]
    %v3093 = vld [vmem:[%s1527 + $0x8] sm:$0xff]
    %v3094 = vld [vmem:[%s1527 + $0x10] sm:$0xff]
    %v3095 = vld [vmem:[%s1527 + $0x18] sm:$0xff]
    %v3096 = vpack.c.bf16 %v3090, %v3090
    %3097 = vmatpush.bf16.msra.mxu0 %v2186
    %3098 = vmatpush.bf16.msra.mxu0 %v2182
    %3099 = vmatpush.bf16.msra.mxu0 %v2178
    %3100 = vmatpush.bf16.msra.mxu0 %v2174
    %3101 = vmatpush.bf16.msra.mxu0 %v2170
    %3102 = vmatpush.bf16.msra.mxu0 %v2166
    %3103 = vmatpush.bf16.msra.mxu0 %v2162
    %3104 = vmatpush.bf16.msra.mxu0 %v2158
    %3105 = vmatmul.bf16.gmra.mxu0 %v3096
    %v3106 = vpop.f32.mrf.mxu0
    %v3107 = vadd.f32 0.0, %v3106
    %v3108 = vpop.f32.mrf.mxu0
    %3109 = vdwg.mxu0
    %3110 = vmatpush.bf16.msra.mxu0 %v2187
    %3111 = vmatpush.bf16.msra.mxu0 %v2183
    %3112 = vmatpush.bf16.msra.mxu0 %v2179
    %3113 = vmatpush.bf16.msra.mxu0 %v2175
    %3114 = vmatpush.bf16.msra.mxu0 %v2171
    %3115 = vmatpush.bf16.msra.mxu0 %v2167
    %3116 = vmatpush.bf16.msra.mxu0 %v2163
    %3117 = vmatpush.bf16.msra.mxu0 %v2159
    %3118 = vmatmul.bf16.gmra.mxu0 %v3096
    %v3119 = vpop.f32.mrf.mxu0
    %v3120 = vadd.f32 0.0, %v3119
    %v3121 = vpop.f32.mrf.mxu0
    %3122 = vdwg.mxu0
    %3123 = vmatpush.bf16.msra.mxu0 %v2188
    %3124 = vmatpush.bf16.msra.mxu0 %v2184
    %3125 = vmatpush.bf16.msra.mxu0 %v2180
    %3126 = vmatpush.bf16.msra.mxu0 %v2176
    %3127 = vmatpush.bf16.msra.mxu0 %v2172
    %3128 = vmatpush.bf16.msra.mxu0 %v2168
    %3129 = vmatpush.bf16.msra.mxu0 %v2164
    %3130 = vmatpush.bf16.msra.mxu0 %v2160
    %3131 = vmatmul.bf16.gmra.mxu0 %v3096
    %v3132 = vpop.f32.mrf.mxu0
    %v3133 = vadd.f32 0.0, %v3132
    %v3134 = vpop.f32.mrf.mxu0
    %3135 = vdwg.mxu0
    %3136 = vmatpush.bf16.msra.mxu0 %v2189
    %3137 = vmatpush.bf16.msra.mxu0 %v2185
    %3138 = vmatpush.bf16.msra.mxu0 %v2181
    %3139 = vmatpush.bf16.msra.mxu0 %v2177
    %3140 = vmatpush.bf16.msra.mxu0 %v2173
    %3141 = vmatpush.bf16.msra.mxu0 %v2169
    %3142 = vmatpush.bf16.msra.mxu0 %v2165
    %3143 = vmatpush.bf16.msra.mxu0 %v2161
    %3144 = vmatmul.bf16.gmra.mxu0 %v3096
    %v3145 = vpop.f32.mrf.mxu0
    %v3146 = vadd.f32 0.0, %v3145
    %v3147 = vpop.f32.mrf.mxu0
    %3148 = vdwg.mxu0
    %v3149 = vadd.f32 %v3092, %v3107
    %v3150 = vadd.f32 %v3093, %v3120
    %v3151 = vadd.f32 %v3094, %v3133
    %v3152 = vadd.f32 %v3095, %v3146
    %v3153 = vxor.u32 %v3149, 2147483648
    %v3154 = vmul.f32 %v3153, 1.442695
    %v3155 = vpow.pop %v3154
    %v3156 = vadd.f32 %v3155, 1.0
    %v3157 = vrcp.pop %v3156
    %v3158 = vmul.f32 %v3156, %v3157
    %v3159 = vsub.f32 1.0, %v3158
    %v3160 = vmul.f32 %v3157, %v3159
    %v3161 = vadd.f32 %v3157, %v3160
    %vm3162 = vweird.f32 %v3156
    %vm3163 = vweird.f32 %v3157
    %vm3164 = vmor %vm3162, %vm3163
    %v3165 = vsel %vm3164, %v3157, %v3161
    %v3166 = vand.u32 2147483647, %v3156
    %vm3167 = vcmp.eq.f32.partialorder %v3166, 8.507059e+37
    %v3168 = vand.u32 %v3156, 2147483648
    %v3169 = vor.u32 1.1754944e-38, %v3168
    %v3170 = vsel %vm3167, %v3169, %v3165
    %v3171 = vmul.f32 1.0, %v3170
    %v3172 = vxor.u32 %v3150, 2147483648
    %v3173 = vmul.f32 %v3172, 1.442695
    %v3174 = vpow.pop %v3173
    %v3175 = vadd.f32 %v3174, 1.0
    %v3176 = vrcp.pop %v3175
    %v3177 = vmul.f32 %v3175, %v3176
    %v3178 = vsub.f32 1.0, %v3177
    %v3179 = vmul.f32 %v3176, %v3178
    %v3180 = vadd.f32 %v3176, %v3179
    %vm3181 = vweird.f32 %v3175
    %vm3182 = vweird.f32 %v3176
    %vm3183 = vmor %vm3181, %vm3182
    %v3184 = vsel %vm3183, %v3176, %v3180
    %v3185 = vand.u32 2147483647, %v3175
    %vm3186 = vcmp.eq.f32.partialorder %v3185, 8.507059e+37
    %v3187 = vand.u32 %v3175, 2147483648
    %v3188 = vor.u32 1.1754944e-38, %v3187
    %v3189 = vsel %vm3186, %v3188, %v3184
    %v3190 = vmul.f32 1.0, %v3189
    %v3191 = vtanh.pop %v3151
    %v3192 = vxor.u32 %v3152, 2147483648
    %v3193 = vmul.f32 %v3192, 1.442695
    %v3194 = vpow.pop %v3193
    %v3195 = vadd.f32 %v3194, 1.0
    %v3196 = vrcp.pop %v3195
    %v3197 = vmul.f32 %v3195, %v3196
    %v3198 = vsub.f32 1.0, %v3197
    %v3199 = vmul.f32 %v3196, %v3198
    %v3200 = vadd.f32 %v3196, %v3199
    %vm3201 = vweird.f32 %v3195
    %vm3202 = vweird.f32 %v3196
    %vm3203 = vmor %vm3201, %vm3202
    %v3204 = vsel %vm3203, %v3196, %v3200
    %v3205 = vand.u32 2147483647, %v3195
    %vm3206 = vcmp.eq.f32.partialorder %v3205, 8.507059e+37
    %v3207 = vand.u32 %v3195, 2147483648
    %v3208 = vor.u32 1.1754944e-38, %v3207
    %v3209 = vsel %vm3206, %v3208, %v3204
    %v3210 = vmul.f32 1.0, %v3209
    %v3211 = vmul.f32 %v3190, %v3088
    %v3212 = vmul.f32 %v3171, %v3191
    %v3213 = vadd.f32 %v3211, %v3212
    %v3214 = vtanh.pop %v3213
    %v3215 = vmul.f32 %v3210, %v3214
    %3216 = vst [vmem:[%s1652] sm:$0xff] %v3215
    %s3217 = scalar_lea.vmem %s9, 8
    %3218 = vst [vmem:[%s3217] sm:$0xff] %v3215
    %s3219 = scalar_lea.vmem %s10, 8
    %3220 = vst [vmem:[%s3219] sm:$0xff] %v3213
    %v3221 = vld [vmem:[#allocation2] sm:$0xff]
    %v3222 = vld [vmem:[#allocation2 + $0x8] sm:$0xff]
    %v3223 = vld [vmem:[#allocation2 + $0x10] sm:$0xff]
    %v3224 = vld [vmem:[#allocation2 + $0x18] sm:$0xff]
    %v3225 = vld [vmem:[#allocation2 + $0x20] sm:$0xff]
    %v3226 = vld [vmem:[#allocation2 + $0x28] sm:$0xff]
    %v3227 = vld [vmem:[#allocation2 + $0x30] sm:$0xff]
    %v3228 = vld [vmem:[#allocation2 + $0x38] sm:$0xff]
    %v3229 = vmax.f32 %v3221, 0.0
    %v3230 = vmax.f32 %v3222, 0.0
    %v3231 = vmax.f32 %v3223, 0.0
    %v3232 = vmax.f32 %v3224, 0.0
    %v3233 = vmax.f32 %v3225, 0.0
    %v3234 = vmax.f32 %v3226, 0.0
    %v3235 = vmax.f32 %v3227, 0.0
    %v3236 = vmax.f32 %v3228, 0.0
    %v3237 = vpack.c.bf16 %v3230, %v3229
    %v3238 = vpack.c.bf16 %v3232, %v3231
    %v3239 = vpack.c.bf16 %v3234, %v3233
    %v3240 = vpack.c.bf16 %v3236, %v3235
    %v3241 = vld [vmem:[%s6] sm:$0xf]
    %v3242 = vld [vmem:[%s6 + $0x4] sm:$0xf]
    %v3243 = vld [vmem:[%s6 + $0x8] sm:$0xf]
    %v3244 = vld [vmem:[%s6 + $0xc] sm:$0xf]
    %v3245 = vld [vmem:[%s6 + $0x10] sm:$0xf]
    %v3246 = vld [vmem:[%s6 + $0x14] sm:$0xf]
    %v3247 = vld [vmem:[%s6 + $0x18] sm:$0xf]
    %v3248 = vld [vmem:[%s6 + $0x1c] sm:$0xf]
    %v3249 = vld [vmem:[%s6 + $0x20] sm:$0xf]
    %v3250 = vld [vmem:[%s6 + $0x24] sm:$0xf]
    %v3251 = vld [vmem:[%s6 + $0x28] sm:$0xf]
    %v3252 = vld [vmem:[%s6 + $0x2c] sm:$0xf]
    %v3253 = vld [vmem:[%s6 + $0x30] sm:$0xf]
    %v3254 = vld [vmem:[%s6 + $0x34] sm:$0xf]
    %v3255 = vld [vmem:[%s6 + $0x38] sm:$0xf]
    %v3256 = vld [vmem:[%s6 + $0x3c] sm:$0xf]
    %v3257 = vld [vmem:[%s7] sm:$0x1]
    %v3259 = vperm.slane %v3257, 0
    %v3277 = vunpack.c.l.b16 %v3241
    %v3278 = vunpack.c.l.b16 %v3242
    %v3279 = vunpack.c.l.b16 %v3243
    %v3280 = vunpack.c.l.b16 %v3244
    %v3281 = vunpack.c.l.b16 %v3245
    %v3282 = vunpack.c.l.b16 %v3246
    %v3283 = vunpack.c.l.b16 %v3247
    %v3284 = vunpack.c.l.b16 %v3248
    %v3285 = vunpack.c.l.b16 %v3249
    %v3286 = vunpack.c.l.b16 %v3250
    %v3287 = vunpack.c.l.b16 %v3251
    %v3288 = vunpack.c.l.b16 %v3252
    %v3289 = vunpack.c.l.b16 %v3253
    %v3290 = vunpack.c.l.b16 %v3254
    %v3291 = vunpack.c.l.b16 %v3255
    %v3292 = vunpack.c.l.b16 %v3256
    %v3293 = vpack.c.b16 %v3278, %v3277
    %v3294 = vpack.c.b16 %v3280, %v3279
    %v3295 = vpack.c.b16 %v3282, %v3281
    %v3296 = vpack.c.b16 %v3284, %v3283
    %v3297 = vpack.c.b16 %v3286, %v3285
    %v3298 = vpack.c.b16 %v3288, %v3287
    %v3299 = vpack.c.b16 %v3290, %v3289
    %v3300 = vpack.c.b16 %v3292, %v3291
    %3309 = vmatpush.bf16.msra.mxu0 %v3300
    %3310 = vmatpush.bf16.msra.mxu0 %v3299
    %3311 = vmatpush.bf16.msra.mxu0 %v3298
    %3312 = vmatpush.bf16.msra.mxu0 %v3297
    %3313 = vmatpush.bf16.msra.mxu0 %v3296
    %3314 = vmatpush.bf16.msra.mxu0 %v3295
    %3315 = vmatpush.bf16.msra.mxu0 %v3294
    %3316 = vmatpush.bf16.msra.mxu0 %v3293
    %3317 = vmatmul.bf16.gmra.mxu0 %v3237
    %v3318 = vpop.f32.mrf.mxu0
    %v3319 = vadd.f32 %v3259, %v3318
    %v3320 = vpop.f32.mrf.mxu0
    %v3321 = vadd.f32 %v3259, %v3320
    %3322 = vmatmul.bf16.gmra.mxu0 %v3238
    %v3323 = vpop.f32.mrf.mxu0
    %v3324 = vadd.f32 %v3259, %v3323
    %v3325 = vpop.f32.mrf.mxu0
    %v3326 = vadd.f32 %v3259, %v3325
    %3327 = vmatmul.bf16.gmra.mxu0 %v3239
    %v3328 = vpop.f32.mrf.mxu0
    %v3329 = vadd.f32 %v3259, %v3328
    %v3330 = vpop.f32.mrf.mxu0
    %v3331 = vadd.f32 %v3259, %v3330
    %3332 = vmatmul.bf16.gmra.mxu0 %v3240
    %v3333 = vpop.f32.mrf.mxu0
    %v3334 = vadd.f32 %v3259, %v3333
    %v3335 = vpop.f32.mrf.mxu0
    %v3336 = vadd.f32 %v3259, %v3335
    %3337 = vdwg.mxu0
    %3338 = vst [vmem:[%s8] sm:$0xff] %v3319
    %3339 = vst [vmem:[%s8 + $0x8] sm:$0xff] %v3321
    %3340 = vst [vmem:[%s8 + $0x10] sm:$0xff] %v3324
    %3341 = vst [vmem:[%s8 + $0x18] sm:$0xff] %v3326
    %3342 = vst [vmem:[%s8 + $0x20] sm:$0xff] %v3329
    %3343 = vst [vmem:[%s8 + $0x28] sm:$0xff] %v3331
    %3344 = vst [vmem:[%s8 + $0x30] sm:$0xff] %v3334
    %3345 = vst [vmem:[%s8 + $0x38] sm:$0xff] %v3336
    // Predicated region
    $region42: #{lstm_net_forward.1} parent=1 // pred_check
      _
    $region43: #{lstm_net_forward.1} parent=1 // pred_check_branch
      %3347 = sbr.rel (0) target = $region45
    $region44: #{lstm_net_forward.1} parent=1 // pred_region
      _
    $region45: #{lstm_net_forward.1} parent=1 // pred_fallthru
      _
    // Predicated region
    $region46: #{lstm_net_forward.1} parent=1 // pred_check
      _
    $region47: #{lstm_net_forward.1} parent=1 // pred_check_branch
      %3349 = sbr.rel (0) target = $region49
    $region48: #{lstm_net_forward.1} parent=1 // pred_region
      _
    $region49: #{lstm_net_forward.1} parent=1 // pred_fallthru
      _
    // Predicated region
    $region50: #{lstm_net_forward.1} parent=1 // pred_check
      _
    $region51: #{lstm_net_forward.1} parent=1 // pred_check_branch
      %3351 = sbr.rel (0) target = $region53
    $region52: #{lstm_net_forward.1} parent=1 // pred_region
      _
    $region53: #{lstm_net_forward.1} parent=1 // pred_fallthru
      _
    // Predicated region
    $region54: #{lstm_net_forward.1} parent=1 // pred_check
      _
    $region55: #{lstm_net_forward.1} parent=1 // pred_check_branch
      %3353 = sbr.rel (0) target = $region57
    $region56: #{lstm_net_forward.1} parent=1 // pred_region
      _
    $region57: #{lstm_net_forward.1} parent=1 // pred_fallthru
      _
    // Predicated region
    $region58: #{lstm_net_forward.1} parent=1 // pred_check
      _
    $region59: #{lstm_net_forward.1} parent=1 // pred_check_branch
      %3355 = sbr.rel (0) target = $region61
    $region60: #{lstm_net_forward.1} parent=1 // pred_region
      _
    $region61: #{lstm_net_forward.1} parent=1 // pred_fallthru
      _
    // Predicated region
    $region62: #{lstm_net_forward.1} parent=1 // pred_check
      _
    $region63: #{lstm_net_forward.1} parent=1 // pred_check_branch
      %3357 = sbr.rel (0) target = $region65
    $region64: #{lstm_net_forward.1} parent=1 // pred_region
      _
    $region65: #{lstm_net_forward.1} parent=1 // pred_fallthru
      _
    %3358 = vsyncpa [#allocation5], 1
    %3359 = vsyncpa [#allocation7], 1

</llo_original>
